<compile_context>
chip_gen: v5e
topology: v5e:2x2
jax: 0.10.0
libtpu: 0.0.40
codegen_flags: <defaults>
</compile_context>

<pallas_src>
import functools

import numpy as np
import jax
import jax.numpy as jnp
from jax.experimental import pallas as pl
from jax.experimental.pallas import tpu as pltpu


def _cdiv(a, b):
    return -(-a // b)


def _round_up(a, b):
    return _cdiv(a, b) * b


# ----------------------------------------------------------------------------
# Pallas kernels
# ----------------------------------------------------------------------------
def _stft_loss_kernel(frames_ref, basis_ref, out_ref, *, tile_r, npad):
    """One frame-row tile of the per-resolution STFT-loss partial sums.

    frames_ref: [2, tile_r, n_fft]   rows: 0 = pred frames, 1 = true frames
    basis_ref : [n_fft, 2*npad]      window-folded [cos | sin] real-DFT basis
    out_ref   : [1, 3, 8, npad] f32  per-lane accumulators (resident across the
                reduction axis):
                  [0] sum |log(max(mag_p,1e-5)) - log(max(mag_t,1e-5))|
                  [1] sum (mag_t - mag_p)^2
                  [2] sum mag_t^2
    """
    i = pl.program_id(1)

    @pl.when(i == 0)
    def _init():
        out_ref[...] = jnp.zeros_like(out_ref)

    fr = frames_ref[...]
    n_fft = fr.shape[-1]
    fr2 = fr.reshape(2 * tile_r, n_fft)   # collapse leading dims (layout-free)

    # Single MXU matmul: rows [0:tile_r) = pred, [tile_r:2*tile_r) = true;
    # columns [0:npad) = real part, [npad:2*npad) = imag part.
    s = jnp.dot(fr2, basis_ref[...], preferred_element_type=jnp.float32)

    pw = s * s
    pw = pw[:, :npad] + pw[:, npad:]                 # power = re^2 + im^2
    pw_p = pw[:tile_r]
    pw_t = pw[tile_r:]

    # log(max(mag, 1e-5)) == 0.5 * log(max(power, 1e-10))
    log_p = 0.5 * jnp.log(jnp.maximum(pw_p, 1e-10))
    log_t = 0.5 * jnp.log(jnp.maximum(pw_t, 1e-10))
    t0 = jnp.abs(log_p - log_t)

    d = jnp.sqrt(pw_t) - jnp.sqrt(pw_p)              # sqrt only where mag needed
    t1 = d * d
    t2 = pw_t                                        # mag_t^2 directly from power

    def fold(x):  # [tile_r, npad] -> [8, npad]; pure VPU vreg adds, no XLU
        return x.reshape(tile_r // 8, 8, npad).sum(axis=0)

    out_ref[0, 0] += fold(t0)
    out_ref[0, 1] += fold(t1)
    out_ref[0, 2] += fold(t2)


def _f0_amp_kernel(f0p_ref, f0t_ref, ap_ref, at_ref, out_ref, *, log_scale):
    """F0 masked L1 partials + amplitude L1 partial sum (lane-dense inputs).

    out (SMEM f32[3]) = [sum f0_diff, sum mask, sum |amp_p - amp_t|]
    """
    eps = 1e-8
    f0t = f0t_ref[...]
    mask = (f0t > 0.0).astype(jnp.float32)
    f0p_m = f0p_ref[...] * mask
    f0t_m = f0t * mask
    if log_scale:
        diff = jnp.abs(jnp.log(f0p_m + eps) - jnp.log(f0t_m + eps))
    else:
        diff = jnp.abs(f0p_m - f0t_m)
    out_ref[0] = jnp.sum(diff)
    out_ref[1] = jnp.sum(mask)
    out_ref[2] = jnp.sum(jnp.abs(ap_ref[...] - at_ref[...]))


# ----------------------------------------------------------------------------
# Pallas wrappers
# ----------------------------------------------------------------------------
def _stft_partial_sums(frames, basis, *, tile_r, npad, num_p, num_i):
    n_fft = frames.shape[-1]
    kernel = functools.partial(_stft_loss_kernel, tile_r=tile_r, npad=npad)
    out = pl.pallas_call(
        kernel,
        out_shape=jax.ShapeDtypeStruct((num_p, 3, 8, npad), jnp.float32),
        grid_spec=pltpu.PrefetchScalarGridSpec(
            num_scalar_prefetch=0,
            grid=(num_p, num_i),
            in_specs=[
                # frame-row tiles: double-buffered HBM->VMEM pipeline
                pl.BlockSpec((2, tile_r, n_fft),
                             lambda p, i: (0, p * num_i + i, 0)),
                # window-folded DFT basis: resident in VMEM across the grid
                pl.BlockSpec((n_fft, 2 * npad), lambda p, i: (0, 0)),
            ],
            out_specs=pl.BlockSpec((1, 3, 8, npad),
                                   lambda p, i: (p, 0, 0, 0)),
        ),
        compiler_params=pltpu.CompilerParams(
            dimension_semantics=("parallel", "arbitrary"),
            vmem_limit_bytes=48 * 1024 * 1024),
    )(frames, basis)
    # Deferred cross-lane reduction: tiny, done once outside the kernel.
    return jnp.sum(out, axis=(0, 2, 3))


def _f0_amp_partial_sums(f0p, f0t, ap, at, *, log_scale):
    vmem = pl.BlockSpec(memory_space=pltpu.MemorySpace.VMEM)
    kernel = functools.partial(_f0_amp_kernel, log_scale=log_scale)
    return pl.pallas_call(
        kernel,
        out_shape=jax.ShapeDtypeStruct((3,), jnp.float32),
        in_specs=[vmem, vmem, vmem, vmem],
        out_specs=pl.BlockSpec(memory_space=pltpu.MemorySpace.SMEM),
    )(f0p, f0t, ap, at)


# ----------------------------------------------------------------------------
# Glue: framing / window-folded DFT basis (deterministic, no learned params)
# ----------------------------------------------------------------------------
def _hann_window(n_fft):
    # torch.hann_window default is periodic=True
    n = np.arange(n_fft, dtype=np.float64)
    return 0.5 * (1.0 - np.cos(2.0 * np.pi * n / n_fft))


def _dft_basis(n_fft, npad, dtype):
    """[cos | sin] real-DFT basis with the Hann window folded in.

    Columns are zero-padded from n_freq = n_fft//2+1 up to npad (multiple of
    128); the zero columns contribute exactly 0 to every partial sum.
    """
    n_freq = n_fft // 2 + 1
    n = np.arange(n_fft, dtype=np.float64)[:, None]
    k = np.arange(n_freq, dtype=np.float64)[None, :]
    ang = 2.0 * np.pi * n * k / n_fft
    win = _hann_window(n_fft)[:, None]
    cos_w = np.zeros((n_fft, npad), np.float64)
    sin_w = np.zeros((n_fft, npad), np.float64)
    cos_w[:, :n_freq] = win * np.cos(ang)
    sin_w[:, :n_freq] = win * np.sin(ang)
    return jnp.asarray(np.concatenate([cos_w, sin_w], axis=1), dtype)


def _frame_signal(x, n_fft, hop):
    """torch.stft(center=True, pad_mode='reflect') framing, gather-free.

    hop == n_fft // 4, so every frame is exactly 4 consecutive hop-sized chunks
    of the padded signal -> frames = concat of 4 shifted chunk slices.
    Returns ([B, n_frames, n_fft], n_frames); works for any T (matches
    n_frames = 1 + T // hop of torch.stft).
    """
    B, T = x.shape
    pad = n_fft // 2
    xp = jnp.pad(x, ((0, 0), (pad, pad)), mode="reflect")
    n_frames = 1 + T // hop
    n_chunks = n_frames + 3
    chunks = xp[:, :n_chunks * hop].reshape(B, n_chunks, hop)
    frames = jnp.concatenate([chunks[:, q:q + n_frames, :] for q in range(4)],
                             axis=-1)
    return frames, n_frames


def _pad_lane_dense(x, lanes=128):
    """Flatten + zero-pad to a [rows, 128] lane-dense f32 buffer."""
    flat = jnp.reshape(x, (-1,)).astype(jnp.float32)
    n = flat.shape[0]
    n_pad = _round_up(max(n, 1), 8 * lanes)
    flat = jnp.pad(flat, (0, n_pad - n))
    return flat.reshape(n_pad // lanes, lanes)


# ----------------------------------------------------------------------------
# HybridLoss (Pallas)
# ----------------------------------------------------------------------------
class HybridLossPallas:
    def __init__(self, use_mel_loss=False, use_mss_loss=True, use_f0_loss=True,
                 use_amplitude_loss=True, use_sc_loss=True,
                 n_ffts=(1024, 512, 256, 128), sample_rate=24000, n_mels=80,
                 mel_weight=2.0, mss_weight=1.0, f0_weight=0.1,
                 amplitude_weight=0.5, sc_weight=0.5, f0_log_scale=True,
                 mel_fmin=40.0, mel_fmax=12000.0,
                 matmul_dtype=jnp.bfloat16, num_parallel=2):
        # TODO(synk): use_mel_loss path (torchaudio MelSpectrogram) not implemented;
        # it is disabled by default in the reference module.
        assert not use_mel_loss, "mel loss path not implemented"
        self.use_mss_loss = use_mss_loss
        self.use_f0_loss = use_f0_loss
        self.use_amplitude_loss = use_amplitude_loss
        self.use_sc_loss = use_sc_loss
        self.n_ffts = list(n_ffts)
        self.mss_weight = mss_weight
        self.f0_weight = f0_weight
        self.amplitude_weight = amplitude_weight
        self.sc_weight = sc_weight
        self.f0_log_scale = f0_log_scale
        # bf16 matmul operands: MXU fast path + half the DMA bytes (~1e-3
        # relative error on magnitudes).  Use jnp.float32 for bit-level parity.
        self.matmul_dtype = matmul_dtype
        # Leading 'parallel' grid axis: lets v7x's 2 TensorCores split the
        # frame rows; harmless extra loop level on v5e/v6e.
        self.num_parallel = num_parallel
        # Deterministic "parameters": window-folded, 128-aligned DFT bases.
        self.npads = {n: _round_up(n // 2 + 1, 128) for n in self.n_ffts}
        self.bases = {n: _dft_basis(n, self.npads[n], matmul_dtype)
                      for n in self.n_ffts}

    def _compute_stft_loss(self, y_pred, y_true, n_fft):
        hop = n_fft // 4
        fp, n_frames = _frame_signal(y_pred, n_fft, hop)
        ft, _ = _frame_signal(y_true, n_fft, hop)
        B = y_pred.shape[0]
        R = B * n_frames
        npad = self.npads[n_fft]
        num_p = self.num_parallel

        # Tile sizing: ~1 MiB of bf16 frames per tile (2 signals x tile_r rows),
        # shrunk (multiple of 8) when the input is small.
        target = max(64, min(2048, (256 * 1024) // n_fft))
        tile_r = min(target, _round_up(_cdiv(R, num_p), 8))
        num_i = _cdiv(R, num_p * tile_r)
        r_pad = num_p * num_i * tile_r

        # Stack pred/true along a leading axis; zero-pad rows (zero frames
        # contribute exactly 0 to all three partial sums).
        frames = jnp.stack([fp.reshape(R, n_fft), ft.reshape(R, n_fft)], axis=0)
        frames = jnp.pad(frames, ((0, 0), (0, r_pad - R), (0, 0)))
        frames = frames.astype(self.matmul_dtype)

        sums = _stft_partial_sums(frames, self.bases[n_fft],
                                  tile_r=tile_r, npad=npad,
                                  num_p=num_p, num_i=num_i)

        n_freq = n_fft // 2 + 1
        count = B * n_frames * n_freq
        loss_mag = sums[0] / count
        loss = loss_mag
        if self.use_sc_loss:
            sc = jnp.sqrt(sums[1]) / (jnp.sqrt(sums[2]) + 1e-7)
            loss = loss_mag + self.sc_weight * sc
        return loss

    def __call__(self, signal, audio, f0_pred=None, f0_true=None,
                 mel_input=None, amplitudes_pred=None, amplitudes_true=None):
        loss_dict = {}
        total = jnp.float32(0.0)
        active = []

        if self.use_mss_loss:
            mss = jnp.float32(0.0)
            for n_fft in self.n_ffts:
                mss = mss + self._compute_stft_loss(signal, audio, n_fft)
            mss = mss / len(self.n_ffts)
            loss_dict["mss_loss"] = self.mss_weight * mss
            total = total + self.mss_weight * mss
            active.append(f"MSS(w={self.mss_weight:.2f})")

        need_f0 = self.use_f0_loss and f0_pred is not None and f0_true is not None
        need_amp = (self.use_amplitude_loss and amplitudes_pred is not None
                    and amplitudes_true is not None)
        if need_f0 or need_amp:
            if (need_f0 and f0_pred.ndim == f0_true.ndim + 1
                    and f0_pred.shape[-1] == 1):
                f0_pred = f0_pred[..., 0]        # matches reference squeeze(-1)
            fp0 = f0_pred if need_f0 else jnp.zeros((1, 1), jnp.float32)
            ft0 = f0_true if need_f0 else jnp.zeros((1, 1), jnp.float32)
            ap = amplitudes_pred if need_amp else jnp.zeros((1, 1, 1), jnp.float32)
            at = amplitudes_true if need_amp else jnp.zeros((1, 1, 1), jnp.float32)
            sums = _f0_amp_partial_sums(
                _pad_lane_dense(fp0), _pad_lane_dense(ft0),
                _pad_lane_dense(ap), _pad_lane_dense(at),
                log_scale=self.f0_log_scale)
            if need_f0:
                f0_loss = sums[0] / (sums[1] + 1e-8)
                loss_dict["f0_loss"] = self.f0_weight * f0_loss
                total = total + self.f0_weight * f0_loss
                active.append(f"F0(w={self.f0_weight:.2f})")
            if need_amp:
                amp_loss = sums[2] / float(np.prod(amplitudes_pred.shape))
                loss_dict["amplitude_loss"] = self.amplitude_weight * amp_loss
                total = total + self.amplitude_weight * amp_loss
                active.append(f"Amp(w={self.amplitude_weight:.2f})")

        loss_dict["loss"] = total
        loss_dict["active_losses"] = "+".join(active)
        return loss_dict


# ----------------------------------------------------------------------------
if __name__ == "__main__":
    key = jax.random.PRNGKey(0)
    k1, k2, k3, k4, k5, k6 = jax.random.split(key, 6)

    B, T = 2, 2048          # audio length must cover the largest n_fft (1024)
    Tf, H = 64, 8           # frame-rate length, number of harmonics

    signal = 0.5 * jax.random.normal(k1, (B, T), jnp.float32)
    audio = 0.5 * jax.random.normal(k2, (B, T), jnp.float32)
    f0_pred = 100.0 + 50.0 * jax.random.uniform(k3, (B, Tf), jnp.float32)
    # f0_true has some zeros (unvoiced frames) so the mask is exercised
    f0_true = (100.0 + 50.0 * jax.random.uniform(k4, (B, Tf), jnp.float32)) * \
              (jax.random.uniform(k5, (B, Tf)) > 0.3).astype(jnp.float32)
    amplitudes_pred = jax.random.uniform(k6, (B, H, Tf), jnp.float32)
    amplitudes_true = jax.random.uniform(k1, (B, H, Tf), jnp.float32)

    loss_fn = HybridLossPallas()
    out = loss_fn(signal, audio, f0_pred=f0_pred, f0_true=f0_true,
                  amplitudes_pred=amplitudes_pred, amplitudes_true=amplitudes_true)
    jax.block_until_ready(out["loss"])
    print("KERNEL_OK")
</pallas_src>

<mosaic_0001>
module attributes {stable_mosaic.version = 11 : i64} {
  func.func @_stft_loss_kernel(%arg0: i32, %arg1: i32, %arg2: memref<2x16x1024xbf16, #tpu.memory_space<vmem>>, %arg3: memref<1024x1280xbf16, #tpu.memory_space<vmem>>, %arg4: memref<1x3x8x640xf32, #tpu.memory_space<vmem>>) attributes {dimension_semantics = [#tpu.dimension_semantics<parallel>, #tpu.dimension_semantics<arbitrary>], iteration_bounds = array<i64: 2, 1>, scalar_prefetch = 0 : i64, scratch_operands = 0 : i64, tpu.core_type = #tpu.core_type<tc>, window_params = [{transform_indices = @transform_0, window_bounds = array<i64: 2, 16, 1024>}, {pipeline_mode = #tpu.pipeline_mode<synchronous>, transform_indices = @transform_1, window_bounds = array<i64: 1024, 1280>}, {transform_indices = @transform_2, window_bounds = array<i64: 1, 3, 8, 640>}]} {
    %c0_i32 = arith.constant 0 : i32
    %0 = arith.cmpi eq, %arg1, %c0_i32 : i32
    %1 = arith.extui %0 : i1 to i32
    %c0_i32_0 = arith.constant 0 : i32
    %2 = arith.cmpi ne, %1, %c0_i32_0 : i32
    scf.if %2 {
      %cst_34 = arith.constant 0.000000e+00 : f32
      %53 = vector.broadcast %cst_34 : f32 to vector<1x3x8x640xf32>
      %c0_35 = arith.constant 0 : index
      %c0_36 = arith.constant 0 : index
      %c0_37 = arith.constant 0 : index
      %c0_38 = arith.constant 0 : index
      %54 = vector.load %arg4[%c0_35, %c0_36, %c0_37, %c0_38] : memref<1x3x8x640xf32, #tpu.memory_space<vmem>>, vector<1x3x8x640xf32>
      tpu.vector_store %arg4[%c0_35, %c0_36, %c0_37, %c0_38], %53 {strides = array<i32>} : memref<1x3x8x640xf32, #tpu.memory_space<vmem>>, vector<1x3x8x640xf32>,
    } else {
    }
    %c0 = arith.constant 0 : index
    %c0_1 = arith.constant 0 : index
    %c0_2 = arith.constant 0 : index
    %3 = vector.load %arg2[%c0, %c0_1, %c0_2] : memref<2x16x1024xbf16, #tpu.memory_space<vmem>>, vector<2x16x1024xbf16>
    %4 = vector.shape_cast %3 : vector<2x16x1024xbf16> to vector<32x1024xbf16>
    %c0_3 = arith.constant 0 : index
    %c0_4 = arith.constant 0 : index
    %5 = vector.load %arg3[%c0_3, %c0_4] : memref<1024x1280xbf16, #tpu.memory_space<vmem>>, vector<1024x1280xbf16>
    %cst = arith.constant dense<0.000000e+00> : vector<32x1280xf32>
    %6 = tpu.matmul %4, %5, %cst {dimension_numbers = #tpu.dot_dimension_numbers<[1], [0], [0], [1], [0, 0, 1, 1], [], []>} : vector<32x1024xbf16>, vector<1024x1280xbf16>, vector<32x1280xf32> -> vector<32x1280xf32>
    %7 = arith.mulf %6, %6 : vector<32x1280xf32>
    %8 = vector.extract_strided_slice %7 {offsets = [0, 0], sizes = [32, 640], strides = [1, 1]} : vector<32x1280xf32> to vector<32x640xf32>
    %9 = vector.extract_strided_slice %7 {offsets = [0, 640], sizes = [32, 640], strides = [1, 1]} : vector<32x1280xf32> to vector<32x640xf32>
    %10 = arith.addf %8, %9 : vector<32x640xf32>
    %11 = vector.extract_strided_slice %10 {offsets = [0, 0], sizes = [16, 640], strides = [1, 1]} : vector<32x640xf32> to vector<16x640xf32>
    %12 = vector.extract_strided_slice %10 {offsets = [16, 0], sizes = [16, 640], strides = [1, 1]} : vector<32x640xf32> to vector<16x640xf32>
    %cst_5 = arith.constant 1.000000e-10 : f32
    %13 = vector.broadcast %cst_5 : f32 to vector<16x640xf32>
    %14 = arith.maximumf %11, %13 : vector<16x640xf32>
    %15 = math.log %14 : vector<16x640xf32>
    %cst_6 = arith.constant 5.000000e-01 : f32
    %16 = vector.broadcast %cst_6 : f32 to vector<16x640xf32>
    %17 = arith.mulf %16, %15 : vector<16x640xf32>
    %cst_7 = arith.constant 1.000000e-10 : f32
    %18 = vector.broadcast %cst_7 : f32 to vector<16x640xf32>
    %19 = arith.maximumf %12, %18 : vector<16x640xf32>
    %20 = math.log %19 : vector<16x640xf32>
    %cst_8 = arith.constant 5.000000e-01 : f32
    %21 = vector.broadcast %cst_8 : f32 to vector<16x640xf32>
    %22 = arith.mulf %21, %20 : vector<16x640xf32>
    %23 = arith.subf %17, %22 : vector<16x640xf32>
    %24 = math.absf %23 : vector<16x640xf32>
    %25 = math.sqrt %12 : vector<16x640xf32>
    %26 = math.sqrt %11 : vector<16x640xf32>
    %27 = arith.subf %25, %26 : vector<16x640xf32>
    %28 = arith.mulf %27, %27 : vector<16x640xf32>
    %c0_9 = arith.constant 0 : index
    %c0_10 = arith.constant 0 : index
    %c0_11 = arith.constant 0 : index
    %c0_12 = arith.constant 0 : index
    %29 = vector.load %arg4[%c0_9, %c0_10, %c0_11, %c0_12] : memref<1x3x8x640xf32, #tpu.memory_space<vmem>>, vector<1x1x8x640xf32>
    %30 = vector.shape_cast %29 : vector<1x1x8x640xf32> to vector<8x640xf32>
    %31 = vector.shape_cast %24 : vector<16x640xf32> to vector<2x8x640xf32>
    %cst_13 = arith.constant dense<0.000000e+00> : vector<8x640xf32>
    %32 = vector.multi_reduction <add>, %31, %cst_13 [0] : vector<2x8x640xf32> to vector<8x640xf32>
    %33 = arith.addf %30, %32 : vector<8x640xf32>
    %c0_14 = arith.constant 0 : index
    %c0_15 = arith.constant 0 : index
    %c0_16 = arith.constant 0 : index
    %c0_17 = arith.constant 0 : index
    %34 = vector.load %arg4[%c0_14, %c0_15, %c0_16, %c0_17] : memref<1x3x8x640xf32, #tpu.memory_space<vmem>>, vector<1x1x8x640xf32>
    %35 = vector.shape_cast %34 : vector<1x1x8x640xf32> to vector<8x640xf32>
    %36 = vector.shape_cast %33 : vector<8x640xf32> to vector<1x1x8x640xf32>
    tpu.vector_store %arg4[%c0_14, %c0_15, %c0_16, %c0_17], %36 {strides = array<i32>} : memref<1x3x8x640xf32, #tpu.memory_space<vmem>>, vector<1x1x8x640xf32>,
    %c0_18 = arith.constant 0 : index
    %c1 = arith.constant 1 : index
    %c0_19 = arith.constant 0 : index
    %c0_20 = arith.constant 0 : index
    %37 = vector.load %arg4[%c0_18, %c1, %c0_19, %c0_20] : memref<1x3x8x640xf32, #tpu.memory_space<vmem>>, vector<1x1x8x640xf32>
    %38 = vector.shape_cast %37 : vector<1x1x8x640xf32> to vector<8x640xf32>
    %39 = vector.shape_cast %28 : vector<16x640xf32> to vector<2x8x640xf32>
    %cst_21 = arith.constant dense<0.000000e+00> : vector<8x640xf32>
    %40 = vector.multi_reduction <add>, %39, %cst_21 [0] : vector<2x8x640xf32> to vector<8x640xf32>
    %41 = arith.addf %38, %40 : vector<8x640xf32>
    %c0_22 = arith.constant 0 : index
    %c1_23 = arith.constant 1 : index
    %c0_24 = arith.constant 0 : index
    %c0_25 = arith.constant 0 : index
    %42 = vector.load %arg4[%c0_22, %c1_23, %c0_24, %c0_25] : memref<1x3x8x640xf32, #tpu.memory_space<vmem>>, vector<1x1x8x640xf32>
    %43 = vector.shape_cast %42 : vector<1x1x8x640xf32> to vector<8x640xf32>
    %44 = vector.shape_cast %41 : vector<8x640xf32> to vector<1x1x8x640xf32>
    tpu.vector_store %arg4[%c0_22, %c1_23, %c0_24, %c0_25], %44 {strides = array<i32>} : memref<1x3x8x640xf32, #tpu.memory_space<vmem>>, vector<1x1x8x640xf32>,
    %c0_26 = arith.constant 0 : index
    %c2 = arith.constant 2 : index
    %c0_27 = arith.constant 0 : index
    %c0_28 = arith.constant 0 : index
    %45 = vector.load %arg4[%c0_26, %c2, %c0_27, %c0_28] : memref<1x3x8x640xf32, #tpu.memory_space<vmem>>, vector<1x1x8x640xf32>
    %46 = vector.shape_cast %45 : vector<1x1x8x640xf32> to vector<8x640xf32>
    %47 = vector.shape_cast %12 : vector<16x640xf32> to vector<2x8x640xf32>
    %cst_29 = arith.constant dense<0.000000e+00> : vector<8x640xf32>
    %48 = vector.multi_reduction <add>, %47, %cst_29 [0] : vector<2x8x640xf32> to vector<8x640xf32>
    %49 = arith.addf %46, %48 : vector<8x640xf32>
    %c0_30 = arith.constant 0 : index
    %c2_31 = arith.constant 2 : index
    %c0_32 = arith.constant 0 : index
    %c0_33 = arith.constant 0 : index
    %50 = vector.load %arg4[%c0_30, %c2_31, %c0_32, %c0_33] : memref<1x3x8x640xf32, #tpu.memory_space<vmem>>, vector<1x1x8x640xf32>
    %51 = vector.shape_cast %50 : vector<1x1x8x640xf32> to vector<8x640xf32>
    %52 = vector.shape_cast %49 : vector<8x640xf32> to vector<1x1x8x640xf32>
    tpu.vector_store %arg4[%c0_30, %c2_31, %c0_32, %c0_33], %52 {strides = array<i32>} : memref<1x3x8x640xf32, #tpu.memory_space<vmem>>, vector<1x1x8x640xf32>,
    return
  }
  func.func @transform_0(%arg0: i32, %arg1: i32) -> (i32, i32, i32) {
    %c1_i32 = arith.constant 1 : i32
    %0 = arith.muli %arg0, %c1_i32 : i32
    %1 = arith.addi %0, %arg1 : i32
    %c0_i32 = arith.constant 0 : i32
    %c0_i32_0 = arith.constant 0 : i32
    %c0_i32_1 = arith.constant 0 : i32
    return %c0_i32, %1, %c0_i32_0 : i32, i32, i32
  }
  func.func @transform_1(%arg0: i32, %arg1: i32) -> (i32, i32) {
    %c0_i32 = arith.constant 0 : i32
    %c0_i32_0 = arith.constant 0 : i32
    %c0_i32_1 = arith.constant 0 : i32
    return %c0_i32, %c0_i32_0 : i32, i32
  }
  func.func @transform_2(%arg0: i32, %arg1: i32) -> (i32, i32, i32, i32) {
    %c0_i32 = arith.constant 0 : i32
    %c0_i32_0 = arith.constant 0 : i32
    %c0_i32_1 = arith.constant 0 : i32
    %c0_i32_2 = arith.constant 0 : i32
    return %arg0, %c0_i32, %c0_i32_0, %c0_i32_1 : i32, i32, i32, i32
  }
}

</mosaic_0001>

<llo_original>
// kernel: tpu_custom_call.1
$region0: #{tpu_custom_call.1}
  #allocation0 [shape = 'u32[]', space=smem, size = 0x4, offset = 0x4, fixed_abs, tag = 'smem constant byte address 0x4 - core index']
  #allocation1 [shape = 'u32[72,128]{1,0:T(1,128)}', space=vmem, size = 0x9000, scoped, tag = 'internal scratch']
  #allocation8 [shape = 's32[]', space=sflag, size = 0x4, offset = 0, fixed_abs, tag = 'sflag constant byte address 0x0 - dummy sync flag']
  %s0 = inlined_call_operand.hbm [shape: bf16[2,32,1024], index: 0, kind: input, shape index: {}]
  %s1 = inlined_call_operand.hbm [shape: bf16[1024,1280], index: 1, kind: input, shape index: {}]
  %s2 = inlined_call_operand.hbm [shape: f32[2,3,8,640], index: 2, kind: output, shape index: {}]
  %s3 = sld [smem:[#allocation0]]
  $region53: #{tpu_custom_call.1} parent=0
    _
  %s5 = ssub.s32 1, %s3
  %s6 = scalar_select 0, %s5, %s3
  $region1: #{tpu_custom_call.1} parent=0
    #allocation2 [shape = 'u8[131072]{0}', space=vmem, size = 0x20000, scoped, tag = 'input window, operand 0']
    #allocation3 [shape = 's32[2]{0}', space=sflag, size = 0x8, scoped, tag = 'scoped memory for tpu_custom_call.1']
    #allocation4 [shape = 's32[2]{0}', space=sflag, size = 0x8, scoped, tag = 'scoped memory for tpu_custom_call.1']
    #allocation5 [shape = 'u8[2621440]{0}', space=vmem, size = 0x280000, scoped, tag = 'input window, operand 1, single buffered']
    #allocation6 [shape = 's32[1]{0}', space=sflag, size = 0x4, scoped, tag = 'scoped memory for tpu_custom_call.1']
    #allocation7 [shape = 'u8[122880]{0}', space=vmem, size = 0x1e000, scoped, tag = 'output window, operand 0']
    %7 = vsyncpa [#allocation3], 0
    %s8 = scalar_lea.sflag [#allocation3], 1
    %9 = vsyncpa %s8, 0
    %10 = vsyncpa [#allocation6], 0
    %11 = vsyncpa [#allocation4], 0
    %s12 = scalar_lea.sflag [#allocation4], 1
    %13 = vsyncpa %s12, 0
    loop: start=0, step=1, limit=4
    $region2: #{tpu_custom_call.1} parent=1 // loop_pre_header
      _
    $region3: #{tpu_custom_call.1} parent=1 // loop_header
      %s15 = sphi 0, %s19
      %p16 = scmp.ge.s32.totalorder %s15, 4
      %s22 = sphi 0, %s34
      %s23 = sphi 0, %s30
      %s24 = sphi 0, %s22
      %s25 = sphi 0, %s23
      %s26 = sphi 0, %s24
      %s27 = sphi 0, %s25
      %s39 = sphi 0, %s41
      %s42 = sphi 0, %s39
      %s43 = sphi 0, %s42
      %s59 = sphi 0, %s43
      %s63 = sphi 0, %s63
      %s65 = sphi 0, %s63
      %s66 = sphi 0, %s65
      %s80 = sphi 0, %s66
      %s86 = sphi 0, %s88
      %s89 = sphi 0, %s86
      %s90 = sphi 0, %s89
      %s106 = sphi 0, %s90
    $region4: #{tpu_custom_call.1} parent=1 // loop_header_branch
      %18 = sbr.rel (%p16) target = $region8
    $region5: #{tpu_custom_call.1} parent=1 // loop_body
      %s20 = ssub.s32 %s15, 1
      %s21 = ssub.s32 %s15, 2
      %s28 = sadd.s32 1, %s23
      %p29 = scmp.ge.s32.totalorder %s28, 1
      %s30 = scalar_select %p29, 0, %s28
      %s31 = sadd.s32 1, %s22
      %s32 = scalar_select %p29, %s31, %s22
      %p33 = scmp.ge.s32.totalorder %s32, 2
      %s34 = scalar_select %p33, 0, %s32
      %s35 = sadd.s32 %s22, %s23
      %s36 = sadd.s32 %s34, %s30
      %s37 = ssub.s32 %s35, %s36
      %p38 = scmp.eq.s32.totalorder %s37, 0
      %s40 = sadd.s32 %s39, 1
      %s41 = scalar_select %p38, %s39, %s40
      %p44 = pneg %p38
      %p45 = scmp.eq.s32.totalorder %s15, 1
      %p46 = por %p44, %p45
      %p47 = scmp.ne.s32.totalorder %s39, %s42
      %p48 = scmp.eq.s32.totalorder %s15, 0
      %p49 = por %p47, %p48
      %p50 = scmp.ne.s32.totalorder %s39, %s42
      %p51 = scmp.eq.s32.totalorder %s20, 1
      %p52 = por %p50, %p51
      %p53 = scmp.ne.s32.totalorder %s42, %s43
      %p54 = scmp.eq.s32.totalorder %s20, 0
      %p55 = por %p53, %p54
      %p56 = scmp.ne.s32.totalorder %s42, %s43
      %p57 = scmp.eq.s32.totalorder %s21, 1
      %p58 = por %p56, %p57
      %p60 = scmp.ne.s32.totalorder %s43, %s59
      %p61 = scmp.eq.s32.totalorder %s21, 0
      %p62 = por %p60, %p61
      %s64 = sadd.s32 %s63, 1
      %p67 = scmp.eq.s32.totalorder %s15, 1
      %p68 = scmp.ne.s32.totalorder %s63, %s65
      %p69 = scmp.eq.s32.totalorder %s15, 0
      %p70 = por %p68, %p69
      %p71 = scmp.ne.s32.totalorder %s63, %s65
      %p72 = scmp.eq.s32.totalorder %s20, 1
      %p73 = por %p71, %p72
      %p74 = scmp.ne.s32.totalorder %s65, %s66
      %p75 = scmp.eq.s32.totalorder %s20, 0
      %p76 = por %p74, %p75
      %p77 = scmp.ne.s32.totalorder %s65, %s66
      %p78 = scmp.eq.s32.totalorder %s21, 1
      %p79 = por %p77, %p78
      %p81 = scmp.ne.s32.totalorder %s66, %s80
      %p82 = scmp.eq.s32.totalorder %s21, 0
      %p83 = por %p81, %p82
      %s84 = ssub.s32 %s22, %s34
      %p85 = scmp.eq.s32.totalorder %s84, 0
      %s87 = sadd.s32 %s86, 1
      %s88 = scalar_select %p85, %s86, %s87
      %p91 = pneg %p85
      %p92 = scmp.eq.s32.totalorder %s15, 1
      %p93 = por %p91, %p92
      %p94 = scmp.ne.s32.totalorder %s86, %s89
      %p95 = scmp.eq.s32.totalorder %s15, 0
      %p96 = por %p94, %p95
      %p97 = scmp.ne.s32.totalorder %s86, %s89
      %p98 = scmp.eq.s32.totalorder %s20, 1
      %p99 = por %p97, %p98
      %p100 = scmp.ne.s32.totalorder %s89, %s90
      %p101 = scmp.eq.s32.totalorder %s20, 0
      %p102 = por %p100, %p101
      %p103 = scmp.ne.s32.totalorder %s89, %s90
      %p104 = scmp.eq.s32.totalorder %s21, 1
      %p105 = por %p103, %p104
      %p107 = scmp.ne.s32.totalorder %s90, %s106
      %p108 = scmp.eq.s32.totalorder %s21, 0
      %p109 = por %p107, %p108
      %p110 = scmp.le.s32.totalorder 1, %s15
      %p111 = scmp.lt.s32.totalorder %s15, 3
      %p112 = pnand %p110, %p111
      %p113 = pneg %p112
      // Predicated region
      $region9: #{tpu_custom_call.1} parent=5 // pred_check
        _
      $region10: #{tpu_custom_call.1} parent=5 // pred_check_branch
        %115 = sbr.rel (%p112) target = $region12
      $region11: #{tpu_custom_call.1} parent=5 // pred_region
        %s116 = ssub.s32 %s15, 1
        // Predicated region
        $region13: #{tpu_custom_call.1} parent=11 // pred_check
          %p117 = pneg %p76
        $region14: #{tpu_custom_call.1} parent=11 // pred_check_branch
          %119 = sbr.rel (%p117) target = $region16
        $region15: #{tpu_custom_call.1} parent=11 // pred_region
          %121 = vsyncadd [#allocation6], 0
          %s122 = sshll.u32 %s1, 4
          %s123 = int_to_ptr.hbm [resolvable:$true] %s122
          %s124 = sshll.u32 [#allocation5], 4
          %s125 = int_to_ptr.vmem [resolvable:$true] %s124
          %130 = dma.hbm_to_vmem [thread:$0]  %s123, 81920, %s125, [#allocation6], 640, 640, 40
        $region16: #{tpu_custom_call.1} parent=11 // pred_fallthru
          _
      $region12: #{tpu_custom_call.1} parent=5 // pred_fallthru
        _
      %p131 = scmp.lt.s32.totalorder %s15, 2
      // Predicated region
      $region17: #{tpu_custom_call.1} parent=5 // pred_check
        %p132 = pneg %p131
      $region18: #{tpu_custom_call.1} parent=5 // pred_check_branch
        %134 = sbr.rel (%p132) target = $region20
      $region19: #{tpu_custom_call.1} parent=5 // pred_region
        // Predicated region
        $region21: #{tpu_custom_call.1} parent=19 // pred_check
          %p135 = pneg %p49
        $region22: #{tpu_custom_call.1} parent=19 // pred_check_branch
          %137 = sbr.rel (%p135) target = $region24
        $region23: #{tpu_custom_call.1} parent=19 // pred_region
          #allocation9 [shape = 'u32[6]{0}', space=smem, size = 0x18, scoped, tag = 'DMA stride descriptor']
          %s138 = sand.u32 %s39, 1
          %s139 = scalar_lea.sflag [#allocation3], %s138
          %s140 = sand.u32 %s39, 1
          %s141 = smul.addr %s140, 128
          %s142 = scalar_lea.vmem [#allocation2], %s141
          %s143 = sadd.s32 %s22, %s23
          %s144 = smul.u32 2, %s143
          %146 = vsyncadd %s139, 0
          %s147 = smul.addr %s144, 8
          %s148 = smul.addr %s147, 4
          %s149 = scalar_lea.hbm %s0, %s148
          %s151 = sshll.u32 1, 14
          %s152 = sxor.u32 4294967295, %s151
          %s154 = sld [smem:[#allocation0]]
          %s155 = sadd.s32 2, %s154
          %s157 = sshll.u32 7, 26
          %s158 = sxor.u32 4294967295, %s157
          %s159 = sand.u32 0, %s158
          %s160 = sshll.u32 %s155, 26
          %s161 = sor.u32 %s159, %s160
          %s162 = sshll.u32 %s149, 4
          %s163 = int_to_ptr.hbm [resolvable:$true] %s162
          %s164 = sshll.u32 %s142, 4
          %s165 = int_to_ptr.vmem [resolvable:$true] %s164
          %171 = sst [smem:[#allocation9]] 2048
          %s172 = scalar_lea.smem [#allocation9], 1
          %173 = sst [smem:[%s172]] 1024
          %s174 = scalar_lea.smem [#allocation9], 2
          %175 = sst [smem:[%s174]] 2
          %s176 = scalar_lea.smem [#allocation9], 3
          %177 = sst [smem:[%s176]] 512
          %s178 = scalar_lea.smem [#allocation9], 4
          %179 = sst [smem:[%s178]] 512
          %s180 = scalar_lea.smem [#allocation9], 5
          %181 = sst [smem:[%s180]] 32
          %183 = dma.general %s163, 2048, %s165, %s139, [#allocation8], [#allocation9], %s161, 0
        $region24: #{tpu_custom_call.1} parent=19 // pred_fallthru
          _
      $region20: #{tpu_custom_call.1} parent=5 // pred_fallthru
        _
      %p184 = scmp.le.s32.totalorder 1, %s15
      %p185 = scmp.lt.s32.totalorder %s15, 3
      %p186 = pnand %p184, %p185
      %p187 = pneg %p186
      // Predicated region
      $region25: #{tpu_custom_call.1} parent=5 // pred_check
        _
      $region26: #{tpu_custom_call.1} parent=5 // pred_check_branch
        %189 = sbr.rel (%p186) target = $region28
      $region27: #{tpu_custom_call.1} parent=5 // pred_region
        %s190 = ssub.s32 %s15, 1
        %s191 = sand.u32 %s42, 1
        %s192 = scalar_lea.sflag [#allocation3], %s191
        %s193 = sand.u32 %s42, 1
        %s194 = smul.addr %s193, 128
        %s195 = scalar_lea.vmem [#allocation2], %s194
        // Predicated region
        $region29: #{tpu_custom_call.1} parent=27 // pred_check
          %p196 = pneg %p55
        $region30: #{tpu_custom_call.1} parent=27 // pred_check_branch
          %198 = sbr.rel (%p196) target = $region32
        $region31: #{tpu_custom_call.1} parent=27 // pred_region
          %200 = dma.done %s192, 2048
        $region32: #{tpu_custom_call.1} parent=27 // pred_fallthru
          _
        // Predicated region
        $region33: #{tpu_custom_call.1} parent=27 // pred_check
          %p201 = pneg %p76
        $region34: #{tpu_custom_call.1} parent=27 // pred_check_branch
          %203 = sbr.rel (%p201) target = $region36
        $region35: #{tpu_custom_call.1} parent=27 // pred_region
          %205 = dma.done [#allocation6], 81920
        $region36: #{tpu_custom_call.1} parent=27 // pred_fallthru
          _
        %s206 = sand.u32 %s42, 1
        %s207 = scalar_lea.sflag [#allocation3], %s206
        %s208 = sand.u32 %s42, 1
        %s209 = smul.addr %s208, 128
        %s210 = scalar_lea.vmem [#allocation2], %s209
        %p211 = pneg %p55
        %p212 = pneg %p52
        %p213 = pneg %p76
        %p214 = pneg %p73
        %p215 = pneg %p102
        %p216 = pneg %p99
        %s217 = sand.u32 %s89, 1
        %s218 = scalar_lea.sflag [#allocation4], %s217
        %s219 = sand.u32 %s89, 1
        %s220 = smul.addr %s219, 120
        %s221 = scalar_lea.vmem [#allocation7], %s220
        %s222 = sadd.s32 %s24, %s25
        %s223 = smul.u32 2, %s222
        %p224 = scmp.eq.s32.totalorder %s25, 0
        // Predicated region
        $region37: #{tpu_custom_call.1} parent=27 // pred_check
          %p225 = pneg %p224
        $region38: #{tpu_custom_call.1} parent=27 // pred_check_branch
          %227 = sbr.rel (%p225) target = $region40
        $region39: #{tpu_custom_call.1} parent=27 // pred_region
          %228 = vst [vmem:[%s221] sm:$0xff] 0.0
          %229 = vst [vmem:[%s221 + $0x8] sm:$0xff] 0.0
          %230 = vst [vmem:[%s221 + $0x10] sm:$0xff] 0.0
          %231 = vst [vmem:[%s221 + $0x18] sm:$0xff] 0.0
          %232 = vst [vmem:[%s221 + $0x20] sm:$0xff] 0.0
          %233 = vst [vmem:[%s221 + $0x28] sm:$0xff] 0.0
          %234 = vst [vmem:[%s221 + $0x30] sm:$0xff] 0.0
          %235 = vst [vmem:[%s221 + $0x38] sm:$0xff] 0.0
          %236 = vst [vmem:[%s221 + $0x40] sm:$0xff] 0.0
          %237 = vst [vmem:[%s221 + $0x48] sm:$0xff] 0.0
          %238 = vst [vmem:[%s221 + $0x50] sm:$0xff] 0.0
          %239 = vst [vmem:[%s221 + $0x58] sm:$0xff] 0.0
          %240 = vst [vmem:[%s221 + $0x60] sm:$0xff] 0.0
          %241 = vst [vmem:[%s221 + $0x68] sm:$0xff] 0.0
          %242 = vst [vmem:[%s221 + $0x70] sm:$0xff] 0.0
        $region40: #{tpu_custom_call.1} parent=27 // pred_fallthru
          _
        %v243 = vld [vmem:[%s195] sm:$0xff]
        %v244 = vld [vmem:[%s195 + $0x8] sm:$0xff]
        %v245 = vld [vmem:[%s195 + $0x10] sm:$0xff]
        %v246 = vld [vmem:[%s195 + $0x18] sm:$0xff]
        %v247 = vld [vmem:[%s195 + $0x20] sm:$0xff]
        %v248 = vld [vmem:[%s195 + $0x28] sm:$0xff]
        %v249 = vld [vmem:[%s195 + $0x30] sm:$0xff]
        %v250 = vld [vmem:[%s195 + $0x38] sm:$0xff]
        %v251 = vld [vmem:[%s195 + $0x40] sm:$0xff]
        %v252 = vld [vmem:[%s195 + $0x48] sm:$0xff]
        %v253 = vld [vmem:[%s195 + $0x50] sm:$0xff]
        %v254 = vld [vmem:[%s195 + $0x58] sm:$0xff]
        %v255 = vld [vmem:[%s195 + $0x60] sm:$0xff]
        %v256 = vld [vmem:[%s195 + $0x68] sm:$0xff]
        %v257 = vld [vmem:[%s195 + $0x70] sm:$0xff]
        %v258 = vld [vmem:[%s195 + $0x78] sm:$0xff]
        %v259 = vld [vmem:[#allocation5] sm:$0xff]
        %v260 = vld [vmem:[#allocation5 + $0x8] sm:$0xff]
        %v261 = vld [vmem:[#allocation5 + $0x10] sm:$0xff]
        %v262 = vld [vmem:[#allocation5 + $0x18] sm:$0xff]
        %v263 = vld [vmem:[#allocation5 + $0x20] sm:$0xff]
        %v264 = vld [vmem:[#allocation5 + $0x28] sm:$0xff]
        %v265 = vld [vmem:[#allocation5 + $0x30] sm:$0xff]
        %v266 = vld [vmem:[#allocation5 + $0x38] sm:$0xff]
        %v267 = vld [vmem:[#allocation5 + $0x40] sm:$0xff]
        %v268 = vld [vmem:[#allocation5 + $0x48] sm:$0xff]
        %v269 = vld [vmem:[#allocation5 + $0x50] sm:$0xff]
        %v270 = vld [vmem:[#allocation5 + $0x58] sm:$0xff]
        %v271 = vld [vmem:[#allocation5 + $0x60] sm:$0xff]
        %v272 = vld [vmem:[#allocation5 + $0x68] sm:$0xff]
        %v273 = vld [vmem:[#allocation5 + $0x70] sm:$0xff]
        %v274 = vld [vmem:[#allocation5 + $0x78] sm:$0xff]
        %v275 = vld [vmem:[#allocation5 + $0x80] sm:$0xff]
        %v276 = vld [vmem:[#allocation5 + $0x88] sm:$0xff]
        %v277 = vld [vmem:[#allocation5 + $0x90] sm:$0xff]
        %v278 = vld [vmem:[#allocation5 + $0x98] sm:$0xff]
        %v279 = vld [vmem:[#allocation5 + $0xa0] sm:$0xff]
        %v280 = vld [vmem:[#allocation5 + $0xa8] sm:$0xff]
        %v281 = vld [vmem:[#allocation5 + $0xb0] sm:$0xff]
        %v282 = vld [vmem:[#allocation5 + $0xb8] sm:$0xff]
        %v283 = vld [vmem:[#allocation5 + $0xc0] sm:$0xff]
        %v284 = vld [vmem:[#allocation5 + $0xc8] sm:$0xff]
        %v285 = vld [vmem:[#allocation5 + $0xd0] sm:$0xff]
        %v286 = vld [vmem:[#allocation5 + $0xd8] sm:$0xff]
        %v287 = vld [vmem:[#allocation5 + $0xe0] sm:$0xff]
        %v288 = vld [vmem:[#allocation5 + $0xe8] sm:$0xff]
        %v289 = vld [vmem:[#allocation5 + $0xf0] sm:$0xff]
        %v290 = vld [vmem:[#allocation5 + $0xf8] sm:$0xff]
        %v291 = vld [vmem:[#allocation5 + $0x100] sm:$0xff]
        %v292 = vld [vmem:[#allocation5 + $0x108] sm:$0xff]
        %v293 = vld [vmem:[#allocation5 + $0x110] sm:$0xff]
        %v294 = vld [vmem:[#allocation5 + $0x118] sm:$0xff]
        %v295 = vld [vmem:[#allocation5 + $0x120] sm:$0xff]
        %v296 = vld [vmem:[#allocation5 + $0x128] sm:$0xff]
        %v297 = vld [vmem:[#allocation5 + $0x130] sm:$0xff]
        %v298 = vld [vmem:[#allocation5 + $0x138] sm:$0xff]
        %v299 = vld [vmem:[#allocation5 + $0x140] sm:$0xff]
        %v300 = vld [vmem:[#allocation5 + $0x148] sm:$0xff]
        %v301 = vld [vmem:[#allocation5 + $0x150] sm:$0xff]
        %v302 = vld [vmem:[#allocation5 + $0x158] sm:$0xff]
        %v303 = vld [vmem:[#allocation5 + $0x160] sm:$0xff]
        %v304 = vld [vmem:[#allocation5 + $0x168] sm:$0xff]
        %v305 = vld [vmem:[#allocation5 + $0x170] sm:$0xff]
        %v306 = vld [vmem:[#allocation5 + $0x178] sm:$0xff]
        %v307 = vld [vmem:[#allocation5 + $0x180] sm:$0xff]
        %v308 = vld [vmem:[#allocation5 + $0x188] sm:$0xff]
        %v309 = vld [vmem:[#allocation5 + $0x190] sm:$0xff]
        %v310 = vld [vmem:[#allocation5 + $0x198] sm:$0xff]
        %v311 = vld [vmem:[#allocation5 + $0x1a0] sm:$0xff]
        %v312 = vld [vmem:[#allocation5 + $0x1a8] sm:$0xff]
        %v313 = vld [vmem:[#allocation5 + $0x1b0] sm:$0xff]
        %v314 = vld [vmem:[#allocation5 + $0x1b8] sm:$0xff]
        %v315 = vld [vmem:[#allocation5 + $0x1c0] sm:$0xff]
        %v316 = vld [vmem:[#allocation5 + $0x1c8] sm:$0xff]
        %v317 = vld [vmem:[#allocation5 + $0x1d0] sm:$0xff]
        %v318 = vld [vmem:[#allocation5 + $0x1d8] sm:$0xff]
        %v319 = vld [vmem:[#allocation5 + $0x1e0] sm:$0xff]
        %v320 = vld [vmem:[#allocation5 + $0x1e8] sm:$0xff]
        %v321 = vld [vmem:[#allocation5 + $0x1f0] sm:$0xff]
        %v322 = vld [vmem:[#allocation5 + $0x1f8] sm:$0xff]
        %v323 = vld [vmem:[#allocation5 + $0x200] sm:$0xff]
        %v324 = vld [vmem:[#allocation5 + $0x208] sm:$0xff]
        %v325 = vld [vmem:[#allocation5 + $0x210] sm:$0xff]
        %v326 = vld [vmem:[#allocation5 + $0x218] sm:$0xff]
        %v327 = vld [vmem:[#allocation5 + $0x220] sm:$0xff]
        %v328 = vld [vmem:[#allocation5 + $0x228] sm:$0xff]
        %v329 = vld [vmem:[#allocation5 + $0x230] sm:$0xff]
        %v330 = vld [vmem:[#allocation5 + $0x238] sm:$0xff]
        %v331 = vld [vmem:[#allocation5 + $0x240] sm:$0xff]
        %v332 = vld [vmem:[#allocation5 + $0x248] sm:$0xff]
        %v333 = vld [vmem:[#allocation5 + $0x250] sm:$0xff]
        %v334 = vld [vmem:[#allocation5 + $0x258] sm:$0xff]
        %v335 = vld [vmem:[#allocation5 + $0x260] sm:$0xff]
        %v336 = vld [vmem:[#allocation5 + $0x268] sm:$0xff]
        %v337 = vld [vmem:[#allocation5 + $0x270] sm:$0xff]
        %v338 = vld [vmem:[#allocation5 + $0x278] sm:$0xff]
        %v339 = vld [vmem:[#allocation5 + $0x280] sm:$0xff]
        %v340 = vld [vmem:[#allocation5 + $0x288] sm:$0xff]
        %v341 = vld [vmem:[#allocation5 + $0x290] sm:$0xff]
        %v342 = vld [vmem:[#allocation5 + $0x298] sm:$0xff]
        %v343 = vld [vmem:[#allocation5 + $0x2a0] sm:$0xff]
        %v344 = vld [vmem:[#allocation5 + $0x2a8] sm:$0xff]
        %v345 = vld [vmem:[#allocation5 + $0x2b0] sm:$0xff]
        %v346 = vld [vmem:[#allocation5 + $0x2b8] sm:$0xff]
        %v347 = vld [vmem:[#allocation5 + $0x2c0] sm:$0xff]
        %v348 = vld [vmem:[#allocation5 + $0x2c8] sm:$0xff]
        %v349 = vld [vmem:[#allocation5 + $0x2d0] sm:$0xff]
        %v350 = vld [vmem:[#allocation5 + $0x2d8] sm:$0xff]
        %v351 = vld [vmem:[#allocation5 + $0x2e0] sm:$0xff]
        %v352 = vld [vmem:[#allocation5 + $0x2e8] sm:$0xff]
        %v353 = vld [vmem:[#allocation5 + $0x2f0] sm:$0xff]
        %v354 = vld [vmem:[#allocation5 + $0x2f8] sm:$0xff]
        %v355 = vld [vmem:[#allocation5 + $0x300] sm:$0xff]
        %v356 = vld [vmem:[#allocation5 + $0x308] sm:$0xff]
        %v357 = vld [vmem:[#allocation5 + $0x310] sm:$0xff]
        %v358 = vld [vmem:[#allocation5 + $0x318] sm:$0xff]
        %v359 = vld [vmem:[#allocation5 + $0x320] sm:$0xff]
        %v360 = vld [vmem:[#allocation5 + $0x328] sm:$0xff]
        %v361 = vld [vmem:[#allocation5 + $0x330] sm:$0xff]
        %v362 = vld [vmem:[#allocation5 + $0x338] sm:$0xff]
        %v363 = vld [vmem:[#allocation5 + $0x340] sm:$0xff]
        %v364 = vld [vmem:[#allocation5 + $0x348] sm:$0xff]
        %v365 = vld [vmem:[#allocation5 + $0x350] sm:$0xff]
        %v366 = vld [vmem:[#allocation5 + $0x358] sm:$0xff]
        %v367 = vld [vmem:[#allocation5 + $0x360] sm:$0xff]
        %v368 = vld [vmem:[#allocation5 + $0x368] sm:$0xff]
        %v369 = vld [vmem:[#allocation5 + $0x370] sm:$0xff]
        %v370 = vld [vmem:[#allocation5 + $0x378] sm:$0xff]
        %v371 = vld [vmem:[#allocation5 + $0x380] sm:$0xff]
        %v372 = vld [vmem:[#allocation5 + $0x388] sm:$0xff]
        %v373 = vld [vmem:[#allocation5 + $0x390] sm:$0xff]
        %v374 = vld [vmem:[#allocation5 + $0x398] sm:$0xff]
        %v375 = vld [vmem:[#allocation5 + $0x3a0] sm:$0xff]
        %v376 = vld [vmem:[#allocation5 + $0x3a8] sm:$0xff]
        %v377 = vld [vmem:[#allocation5 + $0x3b0] sm:$0xff]
        %v378 = vld [vmem:[#allocation5 + $0x3b8] sm:$0xff]
        %v379 = vld [vmem:[#allocation5 + $0x3c0] sm:$0xff]
        %v380 = vld [vmem:[#allocation5 + $0x3c8] sm:$0xff]
        %v381 = vld [vmem:[#allocation5 + $0x3d0] sm:$0xff]
        %v382 = vld [vmem:[#allocation5 + $0x3d8] sm:$0xff]
        %v383 = vld [vmem:[#allocation5 + $0x3e0] sm:$0xff]
        %v384 = vld [vmem:[#allocation5 + $0x3e8] sm:$0xff]
        %v385 = vld [vmem:[#allocation5 + $0x3f0] sm:$0xff]
        %v386 = vld [vmem:[#allocation5 + $0x3f8] sm:$0xff]
        %v387 = vld [vmem:[#allocation5 + $0x400] sm:$0xff]
        %v388 = vld [vmem:[#allocation5 + $0x408] sm:$0xff]
        %v389 = vld [vmem:[#allocation5 + $0x410] sm:$0xff]
        %v390 = vld [vmem:[#allocation5 + $0x418] sm:$0xff]
        %v391 = vld [vmem:[#allocation5 + $0x420] sm:$0xff]
        %v392 = vld [vmem:[#allocation5 + $0x428] sm:$0xff]
        %v393 = vld [vmem:[#allocation5 + $0x430] sm:$0xff]
        %v394 = vld [vmem:[#allocation5 + $0x438] sm:$0xff]
        %v395 = vld [vmem:[#allocation5 + $0x440] sm:$0xff]
        %v396 = vld [vmem:[#allocation5 + $0x448] sm:$0xff]
        %v397 = vld [vmem:[#allocation5 + $0x450] sm:$0xff]
        %v398 = vld [vmem:[#allocation5 + $0x458] sm:$0xff]
        %v399 = vld [vmem:[#allocation5 + $0x460] sm:$0xff]
        %v400 = vld [vmem:[#allocation5 + $0x468] sm:$0xff]
        %v401 = vld [vmem:[#allocation5 + $0x470] sm:$0xff]
        %v402 = vld [vmem:[#allocation5 + $0x478] sm:$0xff]
        %v403 = vld [vmem:[#allocation5 + $0x480] sm:$0xff]
        %v404 = vld [vmem:[#allocation5 + $0x488] sm:$0xff]
        %v405 = vld [vmem:[#allocation5 + $0x490] sm:$0xff]
        %v406 = vld [vmem:[#allocation5 + $0x498] sm:$0xff]
        %v407 = vld [vmem:[#allocation5 + $0x4a0] sm:$0xff]
        %v408 = vld [vmem:[#allocation5 + $0x4a8] sm:$0xff]
        %v409 = vld [vmem:[#allocation5 + $0x4b0] sm:$0xff]
        %v410 = vld [vmem:[#allocation5 + $0x4b8] sm:$0xff]
        %v411 = vld [vmem:[#allocation5 + $0x4c0] sm:$0xff]
        %v412 = vld [vmem:[#allocation5 + $0x4c8] sm:$0xff]
        %v413 = vld [vmem:[#allocation5 + $0x4d0] sm:$0xff]
        %v414 = vld [vmem:[#allocation5 + $0x4d8] sm:$0xff]
        %v415 = vld [vmem:[#allocation5 + $0x4e0] sm:$0xff]
        %v416 = vld [vmem:[#allocation5 + $0x4e8] sm:$0xff]
        %v417 = vld [vmem:[#allocation5 + $0x4f0] sm:$0xff]
        %v418 = vld [vmem:[#allocation5 + $0x4f8] sm:$0xff]
        %v419 = vld [vmem:[#allocation5 + $0x500] sm:$0xff]
        %v420 = vld [vmem:[#allocation5 + $0x508] sm:$0xff]
        %v421 = vld [vmem:[#allocation5 + $0x510] sm:$0xff]
        %v422 = vld [vmem:[#allocation5 + $0x518] sm:$0xff]
        %v423 = vld [vmem:[#allocation5 + $0x520] sm:$0xff]
        %v424 = vld [vmem:[#allocation5 + $0x528] sm:$0xff]
        %v425 = vld [vmem:[#allocation5 + $0x530] sm:$0xff]
        %v426 = vld [vmem:[#allocation5 + $0x538] sm:$0xff]
        %v427 = vld [vmem:[#allocation5 + $0x540] sm:$0xff]
        %v428 = vld [vmem:[#allocation5 + $0x548] sm:$0xff]
        %v429 = vld [vmem:[#allocation5 + $0x550] sm:$0xff]
        %v430 = vld [vmem:[#allocation5 + $0x558] sm:$0xff]
        %v431 = vld [vmem:[#allocation5 + $0x560] sm:$0xff]
        %v432 = vld [vmem:[#allocation5 + $0x568] sm:$0xff]
        %v433 = vld [vmem:[#allocation5 + $0x570] sm:$0xff]
        %v434 = vld [vmem:[#allocation5 + $0x578] sm:$0xff]
        %v435 = vld [vmem:[#allocation5 + $0x580] sm:$0xff]
        %v436 = vld [vmem:[#allocation5 + $0x588] sm:$0xff]
        %v437 = vld [vmem:[#allocation5 + $0x590] sm:$0xff]
        %v438 = vld [vmem:[#allocation5 + $0x598] sm:$0xff]
        %v439 = vld [vmem:[#allocation5 + $0x5a0] sm:$0xff]
        %v440 = vld [vmem:[#allocation5 + $0x5a8] sm:$0xff]
        %v441 = vld [vmem:[#allocation5 + $0x5b0] sm:$0xff]
        %v442 = vld [vmem:[#allocation5 + $0x5b8] sm:$0xff]
        %v443 = vld [vmem:[#allocation5 + $0x5c0] sm:$0xff]
        %v444 = vld [vmem:[#allocation5 + $0x5c8] sm:$0xff]
        %v445 = vld [vmem:[#allocation5 + $0x5d0] sm:$0xff]
        %v446 = vld [vmem:[#allocation5 + $0x5d8] sm:$0xff]
        %v447 = vld [vmem:[#allocation5 + $0x5e0] sm:$0xff]
        %v448 = vld [vmem:[#allocation5 + $0x5e8] sm:$0xff]
        %v449 = vld [vmem:[#allocation5 + $0x5f0] sm:$0xff]
        %v450 = vld [vmem:[#allocation5 + $0x5f8] sm:$0xff]
        %v451 = vld [vmem:[#allocation5 + $0x600] sm:$0xff]
        %v452 = vld [vmem:[#allocation5 + $0x608] sm:$0xff]
        %v453 = vld [vmem:[#allocation5 + $0x610] sm:$0xff]
        %v454 = vld [vmem:[#allocation5 + $0x618] sm:$0xff]
        %v455 = vld [vmem:[#allocation5 + $0x620] sm:$0xff]
        %v456 = vld [vmem:[#allocation5 + $0x628] sm:$0xff]
        %v457 = vld [vmem:[#allocation5 + $0x630] sm:$0xff]
        %v458 = vld [vmem:[#allocation5 + $0x638] sm:$0xff]
        %v459 = vld [vmem:[#allocation5 + $0x640] sm:$0xff]
        %v460 = vld [vmem:[#allocation5 + $0x648] sm:$0xff]
        %v461 = vld [vmem:[#allocation5 + $0x650] sm:$0xff]
        %v462 = vld [vmem:[#allocation5 + $0x658] sm:$0xff]
        %v463 = vld [vmem:[#allocation5 + $0x660] sm:$0xff]
        %v464 = vld [vmem:[#allocation5 + $0x668] sm:$0xff]
        %v465 = vld [vmem:[#allocation5 + $0x670] sm:$0xff]
        %v466 = vld [vmem:[#allocation5 + $0x678] sm:$0xff]
        %v467 = vld [vmem:[#allocation5 + $0x680] sm:$0xff]
        %v468 = vld [vmem:[#allocation5 + $0x688] sm:$0xff]
        %v469 = vld [vmem:[#allocation5 + $0x690] sm:$0xff]
        %v470 = vld [vmem:[#allocation5 + $0x698] sm:$0xff]
        %v471 = vld [vmem:[#allocation5 + $0x6a0] sm:$0xff]
        %v472 = vld [vmem:[#allocation5 + $0x6a8] sm:$0xff]
        %v473 = vld [vmem:[#allocation5 + $0x6b0] sm:$0xff]
        %v474 = vld [vmem:[#allocation5 + $0x6b8] sm:$0xff]
        %v475 = vld [vmem:[#allocation5 + $0x6c0] sm:$0xff]
        %v476 = vld [vmem:[#allocation5 + $0x6c8] sm:$0xff]
        %v477 = vld [vmem:[#allocation5 + $0x6d0] sm:$0xff]
        %v478 = vld [vmem:[#allocation5 + $0x6d8] sm:$0xff]
        %v479 = vld [vmem:[#allocation5 + $0x6e0] sm:$0xff]
        %v480 = vld [vmem:[#allocation5 + $0x6e8] sm:$0xff]
        %v481 = vld [vmem:[#allocation5 + $0x6f0] sm:$0xff]
        %v482 = vld [vmem:[#allocation5 + $0x6f8] sm:$0xff]
        %v483 = vld [vmem:[#allocation5 + $0x700] sm:$0xff]
        %v484 = vld [vmem:[#allocation5 + $0x708] sm:$0xff]
        %v485 = vld [vmem:[#allocation5 + $0x710] sm:$0xff]
        %v486 = vld [vmem:[#allocation5 + $0x718] sm:$0xff]
        %v487 = vld [vmem:[#allocation5 + $0x720] sm:$0xff]
        %v488 = vld [vmem:[#allocation5 + $0x728] sm:$0xff]
        %v489 = vld [vmem:[#allocation5 + $0x730] sm:$0xff]
        %v490 = vld [vmem:[#allocation5 + $0x738] sm:$0xff]
        %v491 = vld [vmem:[#allocation5 + $0x740] sm:$0xff]
        %v492 = vld [vmem:[#allocation5 + $0x748] sm:$0xff]
        %v493 = vld [vmem:[#allocation5 + $0x750] sm:$0xff]
        %v494 = vld [vmem:[#allocation5 + $0x758] sm:$0xff]
        %v495 = vld [vmem:[#allocation5 + $0x760] sm:$0xff]
        %v496 = vld [vmem:[#allocation5 + $0x768] sm:$0xff]
        %v497 = vld [vmem:[#allocation5 + $0x770] sm:$0xff]
        %v498 = vld [vmem:[#allocation5 + $0x778] sm:$0xff]
        %v499 = vld [vmem:[#allocation5 + $0x780] sm:$0xff]
        %v500 = vld [vmem:[#allocation5 + $0x788] sm:$0xff]
        %v501 = vld [vmem:[#allocation5 + $0x790] sm:$0xff]
        %v502 = vld [vmem:[#allocation5 + $0x798] sm:$0xff]
        %v503 = vld [vmem:[#allocation5 + $0x7a0] sm:$0xff]
        %v504 = vld [vmem:[#allocation5 + $0x7a8] sm:$0xff]
        %v505 = vld [vmem:[#allocation5 + $0x7b0] sm:$0xff]
        %v506 = vld [vmem:[#allocation5 + $0x7b8] sm:$0xff]
        %v507 = vld [vmem:[#allocation5 + $0x7c0] sm:$0xff]
        %v508 = vld [vmem:[#allocation5 + $0x7c8] sm:$0xff]
        %v509 = vld [vmem:[#allocation5 + $0x7d0] sm:$0xff]
        %v510 = vld [vmem:[#allocation5 + $0x7d8] sm:$0xff]
        %v511 = vld [vmem:[#allocation5 + $0x7e0] sm:$0xff]
        %v512 = vld [vmem:[#allocation5 + $0x7e8] sm:$0xff]
        %v513 = vld [vmem:[#allocation5 + $0x7f0] sm:$0xff]
        %v514 = vld [vmem:[#allocation5 + $0x7f8] sm:$0xff]
        %v515 = vld [vmem:[#allocation5 + $0x800] sm:$0xff]
        %v516 = vld [vmem:[#allocation5 + $0x808] sm:$0xff]
        %v517 = vld [vmem:[#allocation5 + $0x810] sm:$0xff]
        %v518 = vld [vmem:[#allocation5 + $0x818] sm:$0xff]
        %v519 = vld [vmem:[#allocation5 + $0x820] sm:$0xff]
        %v520 = vld [vmem:[#allocation5 + $0x828] sm:$0xff]
        %v521 = vld [vmem:[#allocation5 + $0x830] sm:$0xff]
        %v522 = vld [vmem:[#allocation5 + $0x838] sm:$0xff]
        %v523 = vld [vmem:[#allocation5 + $0x840] sm:$0xff]
        %v524 = vld [vmem:[#allocation5 + $0x848] sm:$0xff]
        %v525 = vld [vmem:[#allocation5 + $0x850] sm:$0xff]
        %v526 = vld [vmem:[#allocation5 + $0x858] sm:$0xff]
        %v527 = vld [vmem:[#allocation5 + $0x860] sm:$0xff]
        %v528 = vld [vmem:[#allocation5 + $0x868] sm:$0xff]
        %v529 = vld [vmem:[#allocation5 + $0x870] sm:$0xff]
        %v530 = vld [vmem:[#allocation5 + $0x878] sm:$0xff]
        %v531 = vld [vmem:[#allocation5 + $0x880] sm:$0xff]
        %v532 = vld [vmem:[#allocation5 + $0x888] sm:$0xff]
        %v533 = vld [vmem:[#allocation5 + $0x890] sm:$0xff]
        %v534 = vld [vmem:[#allocation5 + $0x898] sm:$0xff]
        %v535 = vld [vmem:[#allocation5 + $0x8a0] sm:$0xff]
        %v536 = vld [vmem:[#allocation5 + $0x8a8] sm:$0xff]
        %v537 = vld [vmem:[#allocation5 + $0x8b0] sm:$0xff]
        %v538 = vld [vmem:[#allocation5 + $0x8b8] sm:$0xff]
        %v539 = vld [vmem:[#allocation5 + $0x8c0] sm:$0xff]
        %v540 = vld [vmem:[#allocation5 + $0x8c8] sm:$0xff]
        %v541 = vld [vmem:[#allocation5 + $0x8d0] sm:$0xff]
        %v542 = vld [vmem:[#allocation5 + $0x8d8] sm:$0xff]
        %v543 = vld [vmem:[#allocation5 + $0x8e0] sm:$0xff]
        %v544 = vld [vmem:[#allocation5 + $0x8e8] sm:$0xff]
        %v545 = vld [vmem:[#allocation5 + $0x8f0] sm:$0xff]
        %v546 = vld [vmem:[#allocation5 + $0x8f8] sm:$0xff]
        %v547 = vld [vmem:[#allocation5 + $0x900] sm:$0xff]
        %v548 = vld [vmem:[#allocation5 + $0x908] sm:$0xff]
        %v549 = vld [vmem:[#allocation5 + $0x910] sm:$0xff]
        %v550 = vld [vmem:[#allocation5 + $0x918] sm:$0xff]
        %v551 = vld [vmem:[#allocation5 + $0x920] sm:$0xff]
        %v552 = vld [vmem:[#allocation5 + $0x928] sm:$0xff]
        %v553 = vld [vmem:[#allocation5 + $0x930] sm:$0xff]
        %v554 = vld [vmem:[#allocation5 + $0x938] sm:$0xff]
        %v555 = vld [vmem:[#allocation5 + $0x940] sm:$0xff]
        %v556 = vld [vmem:[#allocation5 + $0x948] sm:$0xff]
        %v557 = vld [vmem:[#allocation5 + $0x950] sm:$0xff]
        %v558 = vld [vmem:[#allocation5 + $0x958] sm:$0xff]
        %v559 = vld [vmem:[#allocation5 + $0x960] sm:$0xff]
        %v560 = vld [vmem:[#allocation5 + $0x968] sm:$0xff]
        %v561 = vld [vmem:[#allocation5 + $0x970] sm:$0xff]
        %v562 = vld [vmem:[#allocation5 + $0x978] sm:$0xff]
        %v563 = vld [vmem:[#allocation5 + $0x980] sm:$0xff]
        %v564 = vld [vmem:[#allocation5 + $0x988] sm:$0xff]
        %v565 = vld [vmem:[#allocation5 + $0x990] sm:$0xff]
        %v566 = vld [vmem:[#allocation5 + $0x998] sm:$0xff]
        %v567 = vld [vmem:[#allocation5 + $0x9a0] sm:$0xff]
        %v568 = vld [vmem:[#allocation5 + $0x9a8] sm:$0xff]
        %v569 = vld [vmem:[#allocation5 + $0x9b0] sm:$0xff]
        %v570 = vld [vmem:[#allocation5 + $0x9b8] sm:$0xff]
        %v571 = vld [vmem:[#allocation5 + $0x9c0] sm:$0xff]
        %v572 = vld [vmem:[#allocation5 + $0x9c8] sm:$0xff]
        %v573 = vld [vmem:[#allocation5 + $0x9d0] sm:$0xff]
        %v574 = vld [vmem:[#allocation5 + $0x9d8] sm:$0xff]
        %v575 = vld [vmem:[#allocation5 + $0x9e0] sm:$0xff]
        %v576 = vld [vmem:[#allocation5 + $0x9e8] sm:$0xff]
        %v577 = vld [vmem:[#allocation5 + $0x9f0] sm:$0xff]
        %v578 = vld [vmem:[#allocation5 + $0x9f8] sm:$0xff]
        %v579 = vld [vmem:[#allocation5 + $0xa00] sm:$0xff]
        %v580 = vld [vmem:[#allocation5 + $0xa08] sm:$0xff]
        %v581 = vld [vmem:[#allocation5 + $0xa10] sm:$0xff]
        %v582 = vld [vmem:[#allocation5 + $0xa18] sm:$0xff]
        %v583 = vld [vmem:[#allocation5 + $0xa20] sm:$0xff]
        %v584 = vld [vmem:[#allocation5 + $0xa28] sm:$0xff]
        %v585 = vld [vmem:[#allocation5 + $0xa30] sm:$0xff]
        %v586 = vld [vmem:[#allocation5 + $0xa38] sm:$0xff]
        %v587 = vld [vmem:[#allocation5 + $0xa40] sm:$0xff]
        %v588 = vld [vmem:[#allocation5 + $0xa48] sm:$0xff]
        %v589 = vld [vmem:[#allocation5 + $0xa50] sm:$0xff]
        %v590 = vld [vmem:[#allocation5 + $0xa58] sm:$0xff]
        %v591 = vld [vmem:[#allocation5 + $0xa60] sm:$0xff]
        %v592 = vld [vmem:[#allocation5 + $0xa68] sm:$0xff]
        %v593 = vld [vmem:[#allocation5 + $0xa70] sm:$0xff]
        %v594 = vld [vmem:[#allocation5 + $0xa78] sm:$0xff]
        %v595 = vld [vmem:[#allocation5 + $0xa80] sm:$0xff]
        %v596 = vld [vmem:[#allocation5 + $0xa88] sm:$0xff]
        %v597 = vld [vmem:[#allocation5 + $0xa90] sm:$0xff]
        %v598 = vld [vmem:[#allocation5 + $0xa98] sm:$0xff]
        %v599 = vld [vmem:[#allocation5 + $0xaa0] sm:$0xff]
        %v600 = vld [vmem:[#allocation5 + $0xaa8] sm:$0xff]
        %v601 = vld [vmem:[#allocation5 + $0xab0] sm:$0xff]
        %v602 = vld [vmem:[#allocation5 + $0xab8] sm:$0xff]
        %v603 = vld [vmem:[#allocation5 + $0xac0] sm:$0xff]
        %v604 = vld [vmem:[#allocation5 + $0xac8] sm:$0xff]
        %v605 = vld [vmem:[#allocation5 + $0xad0] sm:$0xff]
        %v606 = vld [vmem:[#allocation5 + $0xad8] sm:$0xff]
        %v607 = vld [vmem:[#allocation5 + $0xae0] sm:$0xff]
        %v608 = vld [vmem:[#allocation5 + $0xae8] sm:$0xff]
        %v609 = vld [vmem:[#allocation5 + $0xaf0] sm:$0xff]
        %v610 = vld [vmem:[#allocation5 + $0xaf8] sm:$0xff]
        %v611 = vld [vmem:[#allocation5 + $0xb00] sm:$0xff]
        %v612 = vld [vmem:[#allocation5 + $0xb08] sm:$0xff]
        %v613 = vld [vmem:[#allocation5 + $0xb10] sm:$0xff]
        %v614 = vld [vmem:[#allocation5 + $0xb18] sm:$0xff]
        %v615 = vld [vmem:[#allocation5 + $0xb20] sm:$0xff]
        %v616 = vld [vmem:[#allocation5 + $0xb28] sm:$0xff]
        %v617 = vld [vmem:[#allocation5 + $0xb30] sm:$0xff]
        %v618 = vld [vmem:[#allocation5 + $0xb38] sm:$0xff]
        %v619 = vld [vmem:[#allocation5 + $0xb40] sm:$0xff]
        %v620 = vld [vmem:[#allocation5 + $0xb48] sm:$0xff]
        %v621 = vld [vmem:[#allocation5 + $0xb50] sm:$0xff]
        %v622 = vld [vmem:[#allocation5 + $0xb58] sm:$0xff]
        %v623 = vld [vmem:[#allocation5 + $0xb60] sm:$0xff]
        %v624 = vld [vmem:[#allocation5 + $0xb68] sm:$0xff]
        %v625 = vld [vmem:[#allocation5 + $0xb70] sm:$0xff]
        %v626 = vld [vmem:[#allocation5 + $0xb78] sm:$0xff]
        %v627 = vld [vmem:[#allocation5 + $0xb80] sm:$0xff]
        %v628 = vld [vmem:[#allocation5 + $0xb88] sm:$0xff]
        %v629 = vld [vmem:[#allocation5 + $0xb90] sm:$0xff]
        %v630 = vld [vmem:[#allocation5 + $0xb98] sm:$0xff]
        %v631 = vld [vmem:[#allocation5 + $0xba0] sm:$0xff]
        %v632 = vld [vmem:[#allocation5 + $0xba8] sm:$0xff]
        %v633 = vld [vmem:[#allocation5 + $0xbb0] sm:$0xff]
        %v634 = vld [vmem:[#allocation5 + $0xbb8] sm:$0xff]
        %v635 = vld [vmem:[#allocation5 + $0xbc0] sm:$0xff]
        %v636 = vld [vmem:[#allocation5 + $0xbc8] sm:$0xff]
        %v637 = vld [vmem:[#allocation5 + $0xbd0] sm:$0xff]
        %v638 = vld [vmem:[#allocation5 + $0xbd8] sm:$0xff]
        %v639 = vld [vmem:[#allocation5 + $0xbe0] sm:$0xff]
        %v640 = vld [vmem:[#allocation5 + $0xbe8] sm:$0xff]
        %v641 = vld [vmem:[#allocation5 + $0xbf0] sm:$0xff]
        %v642 = vld [vmem:[#allocation5 + $0xbf8] sm:$0xff]
        %v643 = vld [vmem:[#allocation5 + $0xc00] sm:$0xff]
        %v644 = vld [vmem:[#allocation5 + $0xc08] sm:$0xff]
        %v645 = vld [vmem:[#allocation5 + $0xc10] sm:$0xff]
        %v646 = vld [vmem:[#allocation5 + $0xc18] sm:$0xff]
        %v647 = vld [vmem:[#allocation5 + $0xc20] sm:$0xff]
        %v648 = vld [vmem:[#allocation5 + $0xc28] sm:$0xff]
        %v649 = vld [vmem:[#allocation5 + $0xc30] sm:$0xff]
        %v650 = vld [vmem:[#allocation5 + $0xc38] sm:$0xff]
        %v651 = vld [vmem:[#allocation5 + $0xc40] sm:$0xff]
        %v652 = vld [vmem:[#allocation5 + $0xc48] sm:$0xff]
        %v653 = vld [vmem:[#allocation5 + $0xc50] sm:$0xff]
        %v654 = vld [vmem:[#allocation5 + $0xc58] sm:$0xff]
        %v655 = vld [vmem:[#allocation5 + $0xc60] sm:$0xff]
        %v656 = vld [vmem:[#allocation5 + $0xc68] sm:$0xff]
        %v657 = vld [vmem:[#allocation5 + $0xc70] sm:$0xff]
        %v658 = vld [vmem:[#allocation5 + $0xc78] sm:$0xff]
        %v659 = vld [vmem:[#allocation5 + $0xc80] sm:$0xff]
        %v660 = vld [vmem:[#allocation5 + $0xc88] sm:$0xff]
        %v661 = vld [vmem:[#allocation5 + $0xc90] sm:$0xff]
        %v662 = vld [vmem:[#allocation5 + $0xc98] sm:$0xff]
        %v663 = vld [vmem:[#allocation5 + $0xca0] sm:$0xff]
        %v664 = vld [vmem:[#allocation5 + $0xca8] sm:$0xff]
        %v665 = vld [vmem:[#allocation5 + $0xcb0] sm:$0xff]
        %v666 = vld [vmem:[#allocation5 + $0xcb8] sm:$0xff]
        %v667 = vld [vmem:[#allocation5 + $0xcc0] sm:$0xff]
        %v668 = vld [vmem:[#allocation5 + $0xcc8] sm:$0xff]
        %v669 = vld [vmem:[#allocation5 + $0xcd0] sm:$0xff]
        %v670 = vld [vmem:[#allocation5 + $0xcd8] sm:$0xff]
        %v671 = vld [vmem:[#allocation5 + $0xce0] sm:$0xff]
        %v672 = vld [vmem:[#allocation5 + $0xce8] sm:$0xff]
        %v673 = vld [vmem:[#allocation5 + $0xcf0] sm:$0xff]
        %v674 = vld [vmem:[#allocation5 + $0xcf8] sm:$0xff]
        %v675 = vld [vmem:[#allocation5 + $0xd00] sm:$0xff]
        %v676 = vld [vmem:[#allocation5 + $0xd08] sm:$0xff]
        %v677 = vld [vmem:[#allocation5 + $0xd10] sm:$0xff]
        %v678 = vld [vmem:[#allocation5 + $0xd18] sm:$0xff]
        %v679 = vld [vmem:[#allocation5 + $0xd20] sm:$0xff]
        %v680 = vld [vmem:[#allocation5 + $0xd28] sm:$0xff]
        %v681 = vld [vmem:[#allocation5 + $0xd30] sm:$0xff]
        %v682 = vld [vmem:[#allocation5 + $0xd38] sm:$0xff]
        %v683 = vld [vmem:[#allocation5 + $0xd40] sm:$0xff]
        %v684 = vld [vmem:[#allocation5 + $0xd48] sm:$0xff]
        %v685 = vld [vmem:[#allocation5 + $0xd50] sm:$0xff]
        %v686 = vld [vmem:[#allocation5 + $0xd58] sm:$0xff]
        %v687 = vld [vmem:[#allocation5 + $0xd60] sm:$0xff]
        %v688 = vld [vmem:[#allocation5 + $0xd68] sm:$0xff]
        %v689 = vld [vmem:[#allocation5 + $0xd70] sm:$0xff]
        %v690 = vld [vmem:[#allocation5 + $0xd78] sm:$0xff]
        %v691 = vld [vmem:[#allocation5 + $0xd80] sm:$0xff]
        %v692 = vld [vmem:[#allocation5 + $0xd88] sm:$0xff]
        %v693 = vld [vmem:[#allocation5 + $0xd90] sm:$0xff]
        %v694 = vld [vmem:[#allocation5 + $0xd98] sm:$0xff]
        %v695 = vld [vmem:[#allocation5 + $0xda0] sm:$0xff]
        %v696 = vld [vmem:[#allocation5 + $0xda8] sm:$0xff]
        %v697 = vld [vmem:[#allocation5 + $0xdb0] sm:$0xff]
        %v698 = vld [vmem:[#allocation5 + $0xdb8] sm:$0xff]
        %v699 = vld [vmem:[#allocation5 + $0xdc0] sm:$0xff]
        %v700 = vld [vmem:[#allocation5 + $0xdc8] sm:$0xff]
        %v701 = vld [vmem:[#allocation5 + $0xdd0] sm:$0xff]
        %v702 = vld [vmem:[#allocation5 + $0xdd8] sm:$0xff]
        %v703 = vld [vmem:[#allocation5 + $0xde0] sm:$0xff]
        %v704 = vld [vmem:[#allocation5 + $0xde8] sm:$0xff]
        %v705 = vld [vmem:[#allocation5 + $0xdf0] sm:$0xff]
        %v706 = vld [vmem:[#allocation5 + $0xdf8] sm:$0xff]
        %v707 = vld [vmem:[#allocation5 + $0xe00] sm:$0xff]
        %v708 = vld [vmem:[#allocation5 + $0xe08] sm:$0xff]
        %v709 = vld [vmem:[#allocation5 + $0xe10] sm:$0xff]
        %v710 = vld [vmem:[#allocation5 + $0xe18] sm:$0xff]
        %v711 = vld [vmem:[#allocation5 + $0xe20] sm:$0xff]
        %v712 = vld [vmem:[#allocation5 + $0xe28] sm:$0xff]
        %v713 = vld [vmem:[#allocation5 + $0xe30] sm:$0xff]
        %v714 = vld [vmem:[#allocation5 + $0xe38] sm:$0xff]
        %v715 = vld [vmem:[#allocation5 + $0xe40] sm:$0xff]
        %v716 = vld [vmem:[#allocation5 + $0xe48] sm:$0xff]
        %v717 = vld [vmem:[#allocation5 + $0xe50] sm:$0xff]
        %v718 = vld [vmem:[#allocation5 + $0xe58] sm:$0xff]
        %v719 = vld [vmem:[#allocation5 + $0xe60] sm:$0xff]
        %v720 = vld [vmem:[#allocation5 + $0xe68] sm:$0xff]
        %v721 = vld [vmem:[#allocation5 + $0xe70] sm:$0xff]
        %v722 = vld [vmem:[#allocation5 + $0xe78] sm:$0xff]
        %v723 = vld [vmem:[#allocation5 + $0xe80] sm:$0xff]
        %v724 = vld [vmem:[#allocation5 + $0xe88] sm:$0xff]
        %v725 = vld [vmem:[#allocation5 + $0xe90] sm:$0xff]
        %v726 = vld [vmem:[#allocation5 + $0xe98] sm:$0xff]
        %v727 = vld [vmem:[#allocation5 + $0xea0] sm:$0xff]
        %v728 = vld [vmem:[#allocation5 + $0xea8] sm:$0xff]
        %v729 = vld [vmem:[#allocation5 + $0xeb0] sm:$0xff]
        %v730 = vld [vmem:[#allocation5 + $0xeb8] sm:$0xff]
        %v731 = vld [vmem:[#allocation5 + $0xec0] sm:$0xff]
        %v732 = vld [vmem:[#allocation5 + $0xec8] sm:$0xff]
        %v733 = vld [vmem:[#allocation5 + $0xed0] sm:$0xff]
        %v734 = vld [vmem:[#allocation5 + $0xed8] sm:$0xff]
        %v735 = vld [vmem:[#allocation5 + $0xee0] sm:$0xff]
        %v736 = vld [vmem:[#allocation5 + $0xee8] sm:$0xff]
        %v737 = vld [vmem:[#allocation5 + $0xef0] sm:$0xff]
        %v738 = vld [vmem:[#allocation5 + $0xef8] sm:$0xff]
        %v739 = vld [vmem:[#allocation5 + $0xf00] sm:$0xff]
        %v740 = vld [vmem:[#allocation5 + $0xf08] sm:$0xff]
        %v741 = vld [vmem:[#allocation5 + $0xf10] sm:$0xff]
        %v742 = vld [vmem:[#allocation5 + $0xf18] sm:$0xff]
        %v743 = vld [vmem:[#allocation5 + $0xf20] sm:$0xff]
        %v744 = vld [vmem:[#allocation5 + $0xf28] sm:$0xff]
        %v745 = vld [vmem:[#allocation5 + $0xf30] sm:$0xff]
        %v746 = vld [vmem:[#allocation5 + $0xf38] sm:$0xff]
        %v747 = vld [vmem:[#allocation5 + $0xf40] sm:$0xff]
        %v748 = vld [vmem:[#allocation5 + $0xf48] sm:$0xff]
        %v749 = vld [vmem:[#allocation5 + $0xf50] sm:$0xff]
        %v750 = vld [vmem:[#allocation5 + $0xf58] sm:$0xff]
        %v751 = vld [vmem:[#allocation5 + $0xf60] sm:$0xff]
        %v752 = vld [vmem:[#allocation5 + $0xf68] sm:$0xff]
        %v753 = vld [vmem:[#allocation5 + $0xf70] sm:$0xff]
        %v754 = vld [vmem:[#allocation5 + $0xf78] sm:$0xff]
        %v755 = vld [vmem:[#allocation5 + $0xf80] sm:$0xff]
        %v756 = vld [vmem:[#allocation5 + $0xf88] sm:$0xff]
        %v757 = vld [vmem:[#allocation5 + $0xf90] sm:$0xff]
        %v758 = vld [vmem:[#allocation5 + $0xf98] sm:$0xff]
        %v759 = vld [vmem:[#allocation5 + $0xfa0] sm:$0xff]
        %v760 = vld [vmem:[#allocation5 + $0xfa8] sm:$0xff]
        %v761 = vld [vmem:[#allocation5 + $0xfb0] sm:$0xff]
        %v762 = vld [vmem:[#allocation5 + $0xfb8] sm:$0xff]
        %v763 = vld [vmem:[#allocation5 + $0xfc0] sm:$0xff]
        %v764 = vld [vmem:[#allocation5 + $0xfc8] sm:$0xff]
        %v765 = vld [vmem:[#allocation5 + $0xfd0] sm:$0xff]
        %v766 = vld [vmem:[#allocation5 + $0xfd8] sm:$0xff]
        %v767 = vld [vmem:[#allocation5 + $0xfe0] sm:$0xff]
        %v768 = vld [vmem:[#allocation5 + $0xfe8] sm:$0xff]
        %v769 = vld [vmem:[#allocation5 + $0xff0] sm:$0xff]
        %v770 = vld [vmem:[#allocation5 + $0xff8] sm:$0xff]
        %v771 = vld [vmem:[#allocation5 + $0x1000] sm:$0xff]
        %v772 = vld [vmem:[#allocation5 + $0x1008] sm:$0xff]
        %v773 = vld [vmem:[#allocation5 + $0x1010] sm:$0xff]
        %v774 = vld [vmem:[#allocation5 + $0x1018] sm:$0xff]
        %v775 = vld [vmem:[#allocation5 + $0x1020] sm:$0xff]
        %v776 = vld [vmem:[#allocation5 + $0x1028] sm:$0xff]
        %v777 = vld [vmem:[#allocation5 + $0x1030] sm:$0xff]
        %v778 = vld [vmem:[#allocation5 + $0x1038] sm:$0xff]
        %v779 = vld [vmem:[#allocation5 + $0x1040] sm:$0xff]
        %v780 = vld [vmem:[#allocation5 + $0x1048] sm:$0xff]
        %v781 = vld [vmem:[#allocation5 + $0x1050] sm:$0xff]
        %v782 = vld [vmem:[#allocation5 + $0x1058] sm:$0xff]
        %v783 = vld [vmem:[#allocation5 + $0x1060] sm:$0xff]
        %v784 = vld [vmem:[#allocation5 + $0x1068] sm:$0xff]
        %v785 = vld [vmem:[#allocation5 + $0x1070] sm:$0xff]
        %v786 = vld [vmem:[#allocation5 + $0x1078] sm:$0xff]
        %v787 = vld [vmem:[#allocation5 + $0x1080] sm:$0xff]
        %v788 = vld [vmem:[#allocation5 + $0x1088] sm:$0xff]
        %v789 = vld [vmem:[#allocation5 + $0x1090] sm:$0xff]
        %v790 = vld [vmem:[#allocation5 + $0x1098] sm:$0xff]
        %v791 = vld [vmem:[#allocation5 + $0x10a0] sm:$0xff]
        %v792 = vld [vmem:[#allocation5 + $0x10a8] sm:$0xff]
        %v793 = vld [vmem:[#allocation5 + $0x10b0] sm:$0xff]
        %v794 = vld [vmem:[#allocation5 + $0x10b8] sm:$0xff]
        %v795 = vld [vmem:[#allocation5 + $0x10c0] sm:$0xff]
        %v796 = vld [vmem:[#allocation5 + $0x10c8] sm:$0xff]
        %v797 = vld [vmem:[#allocation5 + $0x10d0] sm:$0xff]
        %v798 = vld [vmem:[#allocation5 + $0x10d8] sm:$0xff]
        %v799 = vld [vmem:[#allocation5 + $0x10e0] sm:$0xff]
        %v800 = vld [vmem:[#allocation5 + $0x10e8] sm:$0xff]
        %v801 = vld [vmem:[#allocation5 + $0x10f0] sm:$0xff]
        %v802 = vld [vmem:[#allocation5 + $0x10f8] sm:$0xff]
        %v803 = vld [vmem:[#allocation5 + $0x1100] sm:$0xff]
        %v804 = vld [vmem:[#allocation5 + $0x1108] sm:$0xff]
        %v805 = vld [vmem:[#allocation5 + $0x1110] sm:$0xff]
        %v806 = vld [vmem:[#allocation5 + $0x1118] sm:$0xff]
        %v807 = vld [vmem:[#allocation5 + $0x1120] sm:$0xff]
        %v808 = vld [vmem:[#allocation5 + $0x1128] sm:$0xff]
        %v809 = vld [vmem:[#allocation5 + $0x1130] sm:$0xff]
        %v810 = vld [vmem:[#allocation5 + $0x1138] sm:$0xff]
        %v811 = vld [vmem:[#allocation5 + $0x1140] sm:$0xff]
        %v812 = vld [vmem:[#allocation5 + $0x1148] sm:$0xff]
        %v813 = vld [vmem:[#allocation5 + $0x1150] sm:$0xff]
        %v814 = vld [vmem:[#allocation5 + $0x1158] sm:$0xff]
        %v815 = vld [vmem:[#allocation5 + $0x1160] sm:$0xff]
        %v816 = vld [vmem:[#allocation5 + $0x1168] sm:$0xff]
        %v817 = vld [vmem:[#allocation5 + $0x1170] sm:$0xff]
        %v818 = vld [vmem:[#allocation5 + $0x1178] sm:$0xff]
        %v819 = vld [vmem:[#allocation5 + $0x1180] sm:$0xff]
        %v820 = vld [vmem:[#allocation5 + $0x1188] sm:$0xff]
        %v821 = vld [vmem:[#allocation5 + $0x1190] sm:$0xff]
        %v822 = vld [vmem:[#allocation5 + $0x1198] sm:$0xff]
        %v823 = vld [vmem:[#allocation5 + $0x11a0] sm:$0xff]
        %v824 = vld [vmem:[#allocation5 + $0x11a8] sm:$0xff]
        %v825 = vld [vmem:[#allocation5 + $0x11b0] sm:$0xff]
        %v826 = vld [vmem:[#allocation5 + $0x11b8] sm:$0xff]
        %v827 = vld [vmem:[#allocation5 + $0x11c0] sm:$0xff]
        %v828 = vld [vmem:[#allocation5 + $0x11c8] sm:$0xff]
        %v829 = vld [vmem:[#allocation5 + $0x11d0] sm:$0xff]
        %v830 = vld [vmem:[#allocation5 + $0x11d8] sm:$0xff]
        %v831 = vld [vmem:[#allocation5 + $0x11e0] sm:$0xff]
        %v832 = vld [vmem:[#allocation5 + $0x11e8] sm:$0xff]
        %v833 = vld [vmem:[#allocation5 + $0x11f0] sm:$0xff]
        %v834 = vld [vmem:[#allocation5 + $0x11f8] sm:$0xff]
        %v835 = vld [vmem:[#allocation5 + $0x1200] sm:$0xff]
        %v836 = vld [vmem:[#allocation5 + $0x1208] sm:$0xff]
        %v837 = vld [vmem:[#allocation5 + $0x1210] sm:$0xff]
        %v838 = vld [vmem:[#allocation5 + $0x1218] sm:$0xff]
        %v839 = vld [vmem:[#allocation5 + $0x1220] sm:$0xff]
        %v840 = vld [vmem:[#allocation5 + $0x1228] sm:$0xff]
        %v841 = vld [vmem:[#allocation5 + $0x1230] sm:$0xff]
        %v842 = vld [vmem:[#allocation5 + $0x1238] sm:$0xff]
        %v843 = vld [vmem:[#allocation5 + $0x1240] sm:$0xff]
        %v844 = vld [vmem:[#allocation5 + $0x1248] sm:$0xff]
        %v845 = vld [vmem:[#allocation5 + $0x1250] sm:$0xff]
        %v846 = vld [vmem:[#allocation5 + $0x1258] sm:$0xff]
        %v847 = vld [vmem:[#allocation5 + $0x1260] sm:$0xff]
        %v848 = vld [vmem:[#allocation5 + $0x1268] sm:$0xff]
        %v849 = vld [vmem:[#allocation5 + $0x1270] sm:$0xff]
        %v850 = vld [vmem:[#allocation5 + $0x1278] sm:$0xff]
        %v851 = vld [vmem:[#allocation5 + $0x1280] sm:$0xff]
        %v852 = vld [vmem:[#allocation5 + $0x1288] sm:$0xff]
        %v853 = vld [vmem:[#allocation5 + $0x1290] sm:$0xff]
        %v854 = vld [vmem:[#allocation5 + $0x1298] sm:$0xff]
        %v855 = vld [vmem:[#allocation5 + $0x12a0] sm:$0xff]
        %v856 = vld [vmem:[#allocation5 + $0x12a8] sm:$0xff]
        %v857 = vld [vmem:[#allocation5 + $0x12b0] sm:$0xff]
        %v858 = vld [vmem:[#allocation5 + $0x12b8] sm:$0xff]
        %v859 = vld [vmem:[#allocation5 + $0x12c0] sm:$0xff]
        %v860 = vld [vmem:[#allocation5 + $0x12c8] sm:$0xff]
        %v861 = vld [vmem:[#allocation5 + $0x12d0] sm:$0xff]
        %v862 = vld [vmem:[#allocation5 + $0x12d8] sm:$0xff]
        %v863 = vld [vmem:[#allocation5 + $0x12e0] sm:$0xff]
        %v864 = vld [vmem:[#allocation5 + $0x12e8] sm:$0xff]
        %v865 = vld [vmem:[#allocation5 + $0x12f0] sm:$0xff]
        %v866 = vld [vmem:[#allocation5 + $0x12f8] sm:$0xff]
        %v867 = vld [vmem:[#allocation5 + $0x1300] sm:$0xff]
        %v868 = vld [vmem:[#allocation5 + $0x1308] sm:$0xff]
        %v869 = vld [vmem:[#allocation5 + $0x1310] sm:$0xff]
        %v870 = vld [vmem:[#allocation5 + $0x1318] sm:$0xff]
        %v871 = vld [vmem:[#allocation5 + $0x1320] sm:$0xff]
        %v872 = vld [vmem:[#allocation5 + $0x1328] sm:$0xff]
        %v873 = vld [vmem:[#allocation5 + $0x1330] sm:$0xff]
        %v874 = vld [vmem:[#allocation5 + $0x1338] sm:$0xff]
        %v875 = vld [vmem:[#allocation5 + $0x1340] sm:$0xff]
        %v876 = vld [vmem:[#allocation5 + $0x1348] sm:$0xff]
        %v877 = vld [vmem:[#allocation5 + $0x1350] sm:$0xff]
        %v878 = vld [vmem:[#allocation5 + $0x1358] sm:$0xff]
        %v879 = vld [vmem:[#allocation5 + $0x1360] sm:$0xff]
        %v880 = vld [vmem:[#allocation5 + $0x1368] sm:$0xff]
        %v881 = vld [vmem:[#allocation5 + $0x1370] sm:$0xff]
        %v882 = vld [vmem:[#allocation5 + $0x1378] sm:$0xff]
        %v883 = vld [vmem:[#allocation5 + $0x1380] sm:$0xff]
        %v884 = vld [vmem:[#allocation5 + $0x1388] sm:$0xff]
        %v885 = vld [vmem:[#allocation5 + $0x1390] sm:$0xff]
        %v886 = vld [vmem:[#allocation5 + $0x1398] sm:$0xff]
        %v887 = vld [vmem:[#allocation5 + $0x13a0] sm:$0xff]
        %v888 = vld [vmem:[#allocation5 + $0x13a8] sm:$0xff]
        %v889 = vld [vmem:[#allocation5 + $0x13b0] sm:$0xff]
        %v890 = vld [vmem:[#allocation5 + $0x13b8] sm:$0xff]
        %v891 = vld [vmem:[#allocation5 + $0x13c0] sm:$0xff]
        %v892 = vld [vmem:[#allocation5 + $0x13c8] sm:$0xff]
        %v893 = vld [vmem:[#allocation5 + $0x13d0] sm:$0xff]
        %v894 = vld [vmem:[#allocation5 + $0x13d8] sm:$0xff]
        %v895 = vld [vmem:[#allocation5 + $0x13e0] sm:$0xff]
        %v896 = vld [vmem:[#allocation5 + $0x13e8] sm:$0xff]
        %v897 = vld [vmem:[#allocation5 + $0x13f0] sm:$0xff]
        %v898 = vld [vmem:[#allocation5 + $0x13f8] sm:$0xff]
        %v915 = vunpack.c.l.b16 %v243
        %v916 = vunpack.c.h.b16 %v243
        %v917 = vunpack.c.l.b16 %v244
        %v918 = vunpack.c.h.b16 %v244
        %v919 = vunpack.c.l.b16 %v245
        %v920 = vunpack.c.h.b16 %v245
        %v921 = vunpack.c.l.b16 %v246
        %v922 = vunpack.c.h.b16 %v246
        %v923 = vunpack.c.l.b16 %v247
        %v924 = vunpack.c.h.b16 %v247
        %v925 = vunpack.c.l.b16 %v248
        %v926 = vunpack.c.h.b16 %v248
        %v927 = vunpack.c.l.b16 %v249
        %v928 = vunpack.c.h.b16 %v249
        %v929 = vunpack.c.l.b16 %v250
        %v930 = vunpack.c.h.b16 %v250
        %v931 = vunpack.c.l.b16 %v251
        %v932 = vunpack.c.h.b16 %v251
        %v933 = vunpack.c.l.b16 %v252
        %v934 = vunpack.c.h.b16 %v252
        %v935 = vunpack.c.l.b16 %v253
        %v936 = vunpack.c.h.b16 %v253
        %v937 = vunpack.c.l.b16 %v254
        %v938 = vunpack.c.h.b16 %v254
        %v939 = vunpack.c.l.b16 %v255
        %v940 = vunpack.c.h.b16 %v255
        %v941 = vunpack.c.l.b16 %v256
        %v942 = vunpack.c.h.b16 %v256
        %v943 = vunpack.c.l.b16 %v257
        %v944 = vunpack.c.h.b16 %v257
        %v945 = vunpack.c.l.b16 %v258
        %v946 = vunpack.c.h.b16 %v258
        %v947 = vpack.c.b16 %v923, %v915
        %v948 = vpack.c.b16 %v924, %v916
        %v949 = vpack.c.b16 %v925, %v917
        %v950 = vpack.c.b16 %v926, %v918
        %v951 = vpack.c.b16 %v927, %v919
        %v952 = vpack.c.b16 %v928, %v920
        %v953 = vpack.c.b16 %v929, %v921
        %v954 = vpack.c.b16 %v930, %v922
        %v955 = vpack.c.b16 %v939, %v931
        %v956 = vpack.c.b16 %v940, %v932
        %v957 = vpack.c.b16 %v941, %v933
        %v958 = vpack.c.b16 %v942, %v934
        %v959 = vpack.c.b16 %v943, %v935
        %v960 = vpack.c.b16 %v944, %v936
        %v961 = vpack.c.b16 %v945, %v937
        %v962 = vpack.c.b16 %v946, %v938
        %v1619 = vunpack.c.l.b16 %v259
        %v1620 = vunpack.c.h.b16 %v259
        %v1621 = vunpack.c.l.b16 %v260
        %v1622 = vunpack.c.h.b16 %v260
        %v1623 = vunpack.c.l.b16 %v261
        %v1624 = vunpack.c.h.b16 %v261
        %v1625 = vunpack.c.l.b16 %v262
        %v1626 = vunpack.c.h.b16 %v262
        %v1627 = vunpack.c.l.b16 %v263
        %v1628 = vunpack.c.h.b16 %v263
        %v1629 = vunpack.c.l.b16 %v264
        %v1630 = vunpack.c.h.b16 %v264
        %v1631 = vunpack.c.l.b16 %v265
        %v1632 = vunpack.c.h.b16 %v265
        %v1633 = vunpack.c.l.b16 %v266
        %v1634 = vunpack.c.h.b16 %v266
        %v1635 = vunpack.c.l.b16 %v267
        %v1636 = vunpack.c.h.b16 %v267
        %v1637 = vunpack.c.l.b16 %v268
        %v1638 = vunpack.c.h.b16 %v268
        %v1639 = vunpack.c.l.b16 %v269
        %v1640 = vunpack.c.h.b16 %v269
        %v1641 = vunpack.c.l.b16 %v270
        %v1642 = vunpack.c.h.b16 %v270
        %v1643 = vunpack.c.l.b16 %v271
        %v1644 = vunpack.c.h.b16 %v271
        %v1645 = vunpack.c.l.b16 %v272
        %v1646 = vunpack.c.h.b16 %v272
        %v1647 = vunpack.c.l.b16 %v273
        %v1648 = vunpack.c.h.b16 %v273
        %v1649 = vunpack.c.l.b16 %v274
        %v1650 = vunpack.c.h.b16 %v274
        %v1651 = vunpack.c.l.b16 %v275
        %v1652 = vunpack.c.h.b16 %v275
        %v1653 = vunpack.c.l.b16 %v276
        %v1654 = vunpack.c.h.b16 %v276
        %v1655 = vunpack.c.l.b16 %v277
        %v1656 = vunpack.c.h.b16 %v277
        %v1657 = vunpack.c.l.b16 %v278
        %v1658 = vunpack.c.h.b16 %v278
        %v1659 = vunpack.c.l.b16 %v279
        %v1660 = vunpack.c.h.b16 %v279
        %v1661 = vunpack.c.l.b16 %v280
        %v1662 = vunpack.c.h.b16 %v280
        %v1663 = vunpack.c.l.b16 %v281
        %v1664 = vunpack.c.h.b16 %v281
        %v1665 = vunpack.c.l.b16 %v282
        %v1666 = vunpack.c.h.b16 %v282
        %v1667 = vunpack.c.l.b16 %v283
        %v1668 = vunpack.c.h.b16 %v283
        %v1669 = vunpack.c.l.b16 %v284
        %v1670 = vunpack.c.h.b16 %v284
        %v1671 = vunpack.c.l.b16 %v285
        %v1672 = vunpack.c.h.b16 %v285
        %v1673 = vunpack.c.l.b16 %v286
        %v1674 = vunpack.c.h.b16 %v286
        %v1675 = vunpack.c.l.b16 %v287
        %v1676 = vunpack.c.h.b16 %v287
        %v1677 = vunpack.c.l.b16 %v288
        %v1678 = vunpack.c.h.b16 %v288
        %v1679 = vunpack.c.l.b16 %v289
        %v1680 = vunpack.c.h.b16 %v289
        %v1681 = vunpack.c.l.b16 %v290
        %v1682 = vunpack.c.h.b16 %v290
        %v1683 = vunpack.c.l.b16 %v291
        %v1684 = vunpack.c.h.b16 %v291
        %v1685 = vunpack.c.l.b16 %v292
        %v1686 = vunpack.c.h.b16 %v292
        %v1687 = vunpack.c.l.b16 %v293
        %v1688 = vunpack.c.h.b16 %v293
        %v1689 = vunpack.c.l.b16 %v294
        %v1690 = vunpack.c.h.b16 %v294
        %v1691 = vunpack.c.l.b16 %v295
        %v1692 = vunpack.c.h.b16 %v295
        %v1693 = vunpack.c.l.b16 %v296
        %v1694 = vunpack.c.h.b16 %v296
        %v1695 = vunpack.c.l.b16 %v297
        %v1696 = vunpack.c.h.b16 %v297
        %v1697 = vunpack.c.l.b16 %v298
        %v1698 = vunpack.c.h.b16 %v298
        %v1699 = vunpack.c.l.b16 %v299
        %v1700 = vunpack.c.h.b16 %v299
        %v1701 = vunpack.c.l.b16 %v300
        %v1702 = vunpack.c.h.b16 %v300
        %v1703 = vunpack.c.l.b16 %v301
        %v1704 = vunpack.c.h.b16 %v301
        %v1705 = vunpack.c.l.b16 %v302
        %v1706 = vunpack.c.h.b16 %v302
        %v1707 = vunpack.c.l.b16 %v303
        %v1708 = vunpack.c.h.b16 %v303
        %v1709 = vunpack.c.l.b16 %v304
        %v1710 = vunpack.c.h.b16 %v304
        %v1711 = vunpack.c.l.b16 %v305
        %v1712 = vunpack.c.h.b16 %v305
        %v1713 = vunpack.c.l.b16 %v306
        %v1714 = vunpack.c.h.b16 %v306
        %v1715 = vunpack.c.l.b16 %v307
        %v1716 = vunpack.c.h.b16 %v307
        %v1717 = vunpack.c.l.b16 %v308
        %v1718 = vunpack.c.h.b16 %v308
        %v1719 = vunpack.c.l.b16 %v309
        %v1720 = vunpack.c.h.b16 %v309
        %v1721 = vunpack.c.l.b16 %v310
        %v1722 = vunpack.c.h.b16 %v310
        %v1723 = vunpack.c.l.b16 %v311
        %v1724 = vunpack.c.h.b16 %v311
        %v1725 = vunpack.c.l.b16 %v312
        %v1726 = vunpack.c.h.b16 %v312
        %v1727 = vunpack.c.l.b16 %v313
        %v1728 = vunpack.c.h.b16 %v313
        %v1729 = vunpack.c.l.b16 %v314
        %v1730 = vunpack.c.h.b16 %v314
        %v1731 = vunpack.c.l.b16 %v315
        %v1732 = vunpack.c.h.b16 %v315
        %v1733 = vunpack.c.l.b16 %v316
        %v1734 = vunpack.c.h.b16 %v316
        %v1735 = vunpack.c.l.b16 %v317
        %v1736 = vunpack.c.h.b16 %v317
        %v1737 = vunpack.c.l.b16 %v318
        %v1738 = vunpack.c.h.b16 %v318
        %v1739 = vunpack.c.l.b16 %v319
        %v1740 = vunpack.c.h.b16 %v319
        %v1741 = vunpack.c.l.b16 %v320
        %v1742 = vunpack.c.h.b16 %v320
        %v1743 = vunpack.c.l.b16 %v321
        %v1744 = vunpack.c.h.b16 %v321
        %v1745 = vunpack.c.l.b16 %v322
        %v1746 = vunpack.c.h.b16 %v322
        %v1747 = vunpack.c.l.b16 %v323
        %v1748 = vunpack.c.h.b16 %v323
        %v1749 = vunpack.c.l.b16 %v324
        %v1750 = vunpack.c.h.b16 %v324
        %v1751 = vunpack.c.l.b16 %v325
        %v1752 = vunpack.c.h.b16 %v325
        %v1753 = vunpack.c.l.b16 %v326
        %v1754 = vunpack.c.h.b16 %v326
        %v1755 = vunpack.c.l.b16 %v327
        %v1756 = vunpack.c.h.b16 %v327
        %v1757 = vunpack.c.l.b16 %v328
        %v1758 = vunpack.c.h.b16 %v328
        %v1759 = vunpack.c.l.b16 %v329
        %v1760 = vunpack.c.h.b16 %v329
        %v1761 = vunpack.c.l.b16 %v330
        %v1762 = vunpack.c.h.b16 %v330
        %v1763 = vunpack.c.l.b16 %v331
        %v1764 = vunpack.c.h.b16 %v331
        %v1765 = vunpack.c.l.b16 %v332
        %v1766 = vunpack.c.h.b16 %v332
        %v1767 = vunpack.c.l.b16 %v333
        %v1768 = vunpack.c.h.b16 %v333
        %v1769 = vunpack.c.l.b16 %v334
        %v1770 = vunpack.c.h.b16 %v334
        %v1771 = vunpack.c.l.b16 %v335
        %v1772 = vunpack.c.h.b16 %v335
        %v1773 = vunpack.c.l.b16 %v336
        %v1774 = vunpack.c.h.b16 %v336
        %v1775 = vunpack.c.l.b16 %v337
        %v1776 = vunpack.c.h.b16 %v337
        %v1777 = vunpack.c.l.b16 %v338
        %v1778 = vunpack.c.h.b16 %v338
        %v1779 = vunpack.c.l.b16 %v339
        %v1780 = vunpack.c.h.b16 %v339
        %v1781 = vunpack.c.l.b16 %v340
        %v1782 = vunpack.c.h.b16 %v340
        %v1783 = vunpack.c.l.b16 %v341
        %v1784 = vunpack.c.h.b16 %v341
        %v1785 = vunpack.c.l.b16 %v342
        %v1786 = vunpack.c.h.b16 %v342
        %v1787 = vunpack.c.l.b16 %v343
        %v1788 = vunpack.c.h.b16 %v343
        %v1789 = vunpack.c.l.b16 %v344
        %v1790 = vunpack.c.h.b16 %v344
        %v1791 = vunpack.c.l.b16 %v345
        %v1792 = vunpack.c.h.b16 %v345
        %v1793 = vunpack.c.l.b16 %v346
        %v1794 = vunpack.c.h.b16 %v346
        %v1795 = vunpack.c.l.b16 %v347
        %v1796 = vunpack.c.h.b16 %v347
        %v1797 = vunpack.c.l.b16 %v348
        %v1798 = vunpack.c.h.b16 %v348
        %v1799 = vunpack.c.l.b16 %v349
        %v1800 = vunpack.c.h.b16 %v349
        %v1801 = vunpack.c.l.b16 %v350
        %v1802 = vunpack.c.h.b16 %v350
        %v1803 = vunpack.c.l.b16 %v351
        %v1804 = vunpack.c.h.b16 %v351
        %v1805 = vunpack.c.l.b16 %v352
        %v1806 = vunpack.c.h.b16 %v352
        %v1807 = vunpack.c.l.b16 %v353
        %v1808 = vunpack.c.h.b16 %v353
        %v1809 = vunpack.c.l.b16 %v354
        %v1810 = vunpack.c.h.b16 %v354
        %v1811 = vunpack.c.l.b16 %v355
        %v1812 = vunpack.c.h.b16 %v355
        %v1813 = vunpack.c.l.b16 %v356
        %v1814 = vunpack.c.h.b16 %v356
        %v1815 = vunpack.c.l.b16 %v357
        %v1816 = vunpack.c.h.b16 %v357
        %v1817 = vunpack.c.l.b16 %v358
        %v1818 = vunpack.c.h.b16 %v358
        %v1819 = vunpack.c.l.b16 %v359
        %v1820 = vunpack.c.h.b16 %v359
        %v1821 = vunpack.c.l.b16 %v360
        %v1822 = vunpack.c.h.b16 %v360
        %v1823 = vunpack.c.l.b16 %v361
        %v1824 = vunpack.c.h.b16 %v361
        %v1825 = vunpack.c.l.b16 %v362
        %v1826 = vunpack.c.h.b16 %v362
        %v1827 = vunpack.c.l.b16 %v363
        %v1828 = vunpack.c.h.b16 %v363
        %v1829 = vunpack.c.l.b16 %v364
        %v1830 = vunpack.c.h.b16 %v364
        %v1831 = vunpack.c.l.b16 %v365
        %v1832 = vunpack.c.h.b16 %v365
        %v1833 = vunpack.c.l.b16 %v366
        %v1834 = vunpack.c.h.b16 %v366
        %v1835 = vunpack.c.l.b16 %v367
        %v1836 = vunpack.c.h.b16 %v367
        %v1837 = vunpack.c.l.b16 %v368
        %v1838 = vunpack.c.h.b16 %v368
        %v1839 = vunpack.c.l.b16 %v369
        %v1840 = vunpack.c.h.b16 %v369
        %v1841 = vunpack.c.l.b16 %v370
        %v1842 = vunpack.c.h.b16 %v370
        %v1843 = vunpack.c.l.b16 %v371
        %v1844 = vunpack.c.h.b16 %v371
        %v1845 = vunpack.c.l.b16 %v372
        %v1846 = vunpack.c.h.b16 %v372
        %v1847 = vunpack.c.l.b16 %v373
        %v1848 = vunpack.c.h.b16 %v373
        %v1849 = vunpack.c.l.b16 %v374
        %v1850 = vunpack.c.h.b16 %v374
        %v1851 = vunpack.c.l.b16 %v375
        %v1852 = vunpack.c.h.b16 %v375
        %v1853 = vunpack.c.l.b16 %v376
        %v1854 = vunpack.c.h.b16 %v376
        %v1855 = vunpack.c.l.b16 %v377
        %v1856 = vunpack.c.h.b16 %v377
        %v1857 = vunpack.c.l.b16 %v378
        %v1858 = vunpack.c.h.b16 %v378
        %v1859 = vunpack.c.l.b16 %v379
        %v1860 = vunpack.c.h.b16 %v379
        %v1861 = vunpack.c.l.b16 %v380
        %v1862 = vunpack.c.h.b16 %v380
        %v1863 = vunpack.c.l.b16 %v381
        %v1864 = vunpack.c.h.b16 %v381
        %v1865 = vunpack.c.l.b16 %v382
        %v1866 = vunpack.c.h.b16 %v382
        %v1867 = vunpack.c.l.b16 %v383
        %v1868 = vunpack.c.h.b16 %v383
        %v1869 = vunpack.c.l.b16 %v384
        %v1870 = vunpack.c.h.b16 %v384
        %v1871 = vunpack.c.l.b16 %v385
        %v1872 = vunpack.c.h.b16 %v385
        %v1873 = vunpack.c.l.b16 %v386
        %v1874 = vunpack.c.h.b16 %v386
        %v1875 = vunpack.c.l.b16 %v387
        %v1876 = vunpack.c.h.b16 %v387
        %v1877 = vunpack.c.l.b16 %v388
        %v1878 = vunpack.c.h.b16 %v388
        %v1879 = vunpack.c.l.b16 %v389
        %v1880 = vunpack.c.h.b16 %v389
        %v1881 = vunpack.c.l.b16 %v390
        %v1882 = vunpack.c.h.b16 %v390
        %v1883 = vunpack.c.l.b16 %v391
        %v1884 = vunpack.c.h.b16 %v391
        %v1885 = vunpack.c.l.b16 %v392
        %v1886 = vunpack.c.h.b16 %v392
        %v1887 = vunpack.c.l.b16 %v393
        %v1888 = vunpack.c.h.b16 %v393
        %v1889 = vunpack.c.l.b16 %v394
        %v1890 = vunpack.c.h.b16 %v394
        %v1891 = vunpack.c.l.b16 %v395
        %v1892 = vunpack.c.h.b16 %v395
        %v1893 = vunpack.c.l.b16 %v396
        %v1894 = vunpack.c.h.b16 %v396
        %v1895 = vunpack.c.l.b16 %v397
        %v1896 = vunpack.c.h.b16 %v397
        %v1897 = vunpack.c.l.b16 %v398
        %v1898 = vunpack.c.h.b16 %v398
        %v1899 = vunpack.c.l.b16 %v399
        %v1900 = vunpack.c.h.b16 %v399
        %v1901 = vunpack.c.l.b16 %v400
        %v1902 = vunpack.c.h.b16 %v400
        %v1903 = vunpack.c.l.b16 %v401
        %v1904 = vunpack.c.h.b16 %v401
        %v1905 = vunpack.c.l.b16 %v402
        %v1906 = vunpack.c.h.b16 %v402
        %v1907 = vunpack.c.l.b16 %v403
        %v1908 = vunpack.c.h.b16 %v403
        %v1909 = vunpack.c.l.b16 %v404
        %v1910 = vunpack.c.h.b16 %v404
        %v1911 = vunpack.c.l.b16 %v405
        %v1912 = vunpack.c.h.b16 %v405
        %v1913 = vunpack.c.l.b16 %v406
        %v1914 = vunpack.c.h.b16 %v406
        %v1915 = vunpack.c.l.b16 %v407
        %v1916 = vunpack.c.h.b16 %v407
        %v1917 = vunpack.c.l.b16 %v408
        %v1918 = vunpack.c.h.b16 %v408
        %v1919 = vunpack.c.l.b16 %v409
        %v1920 = vunpack.c.h.b16 %v409
        %v1921 = vunpack.c.l.b16 %v410
        %v1922 = vunpack.c.h.b16 %v410
        %v1923 = vunpack.c.l.b16 %v411
        %v1924 = vunpack.c.h.b16 %v411
        %v1925 = vunpack.c.l.b16 %v412
        %v1926 = vunpack.c.h.b16 %v412
        %v1927 = vunpack.c.l.b16 %v413
        %v1928 = vunpack.c.h.b16 %v413
        %v1929 = vunpack.c.l.b16 %v414
        %v1930 = vunpack.c.h.b16 %v414
        %v1931 = vunpack.c.l.b16 %v415
        %v1932 = vunpack.c.h.b16 %v415
        %v1933 = vunpack.c.l.b16 %v416
        %v1934 = vunpack.c.h.b16 %v416
        %v1935 = vunpack.c.l.b16 %v417
        %v1936 = vunpack.c.h.b16 %v417
        %v1937 = vunpack.c.l.b16 %v418
        %v1938 = vunpack.c.h.b16 %v418
        %v1939 = vunpack.c.l.b16 %v419
        %v1940 = vunpack.c.h.b16 %v419
        %v1941 = vunpack.c.l.b16 %v420
        %v1942 = vunpack.c.h.b16 %v420
        %v1943 = vunpack.c.l.b16 %v421
        %v1944 = vunpack.c.h.b16 %v421
        %v1945 = vunpack.c.l.b16 %v422
        %v1946 = vunpack.c.h.b16 %v422
        %v1947 = vunpack.c.l.b16 %v423
        %v1948 = vunpack.c.h.b16 %v423
        %v1949 = vunpack.c.l.b16 %v424
        %v1950 = vunpack.c.h.b16 %v424
        %v1951 = vunpack.c.l.b16 %v425
        %v1952 = vunpack.c.h.b16 %v425
        %v1953 = vunpack.c.l.b16 %v426
        %v1954 = vunpack.c.h.b16 %v426
        %v1955 = vunpack.c.l.b16 %v427
        %v1956 = vunpack.c.h.b16 %v427
        %v1957 = vunpack.c.l.b16 %v428
        %v1958 = vunpack.c.h.b16 %v428
        %v1959 = vunpack.c.l.b16 %v429
        %v1960 = vunpack.c.h.b16 %v429
        %v1961 = vunpack.c.l.b16 %v430
        %v1962 = vunpack.c.h.b16 %v430
        %v1963 = vunpack.c.l.b16 %v431
        %v1964 = vunpack.c.h.b16 %v431
        %v1965 = vunpack.c.l.b16 %v432
        %v1966 = vunpack.c.h.b16 %v432
        %v1967 = vunpack.c.l.b16 %v433
        %v1968 = vunpack.c.h.b16 %v433
        %v1969 = vunpack.c.l.b16 %v434
        %v1970 = vunpack.c.h.b16 %v434
        %v1971 = vunpack.c.l.b16 %v435
        %v1972 = vunpack.c.h.b16 %v435
        %v1973 = vunpack.c.l.b16 %v436
        %v1974 = vunpack.c.h.b16 %v436
        %v1975 = vunpack.c.l.b16 %v437
        %v1976 = vunpack.c.h.b16 %v437
        %v1977 = vunpack.c.l.b16 %v438
        %v1978 = vunpack.c.h.b16 %v438
        %v1979 = vunpack.c.l.b16 %v439
        %v1980 = vunpack.c.h.b16 %v439
        %v1981 = vunpack.c.l.b16 %v440
        %v1982 = vunpack.c.h.b16 %v440
        %v1983 = vunpack.c.l.b16 %v441
        %v1984 = vunpack.c.h.b16 %v441
        %v1985 = vunpack.c.l.b16 %v442
        %v1986 = vunpack.c.h.b16 %v442
        %v1987 = vunpack.c.l.b16 %v443
        %v1988 = vunpack.c.h.b16 %v443
        %v1989 = vunpack.c.l.b16 %v444
        %v1990 = vunpack.c.h.b16 %v444
        %v1991 = vunpack.c.l.b16 %v445
        %v1992 = vunpack.c.h.b16 %v445
        %v1993 = vunpack.c.l.b16 %v446
        %v1994 = vunpack.c.h.b16 %v446
        %v1995 = vunpack.c.l.b16 %v447
        %v1996 = vunpack.c.h.b16 %v447
        %v1997 = vunpack.c.l.b16 %v448
        %v1998 = vunpack.c.h.b16 %v448
        %v1999 = vunpack.c.l.b16 %v449
        %v2000 = vunpack.c.h.b16 %v449
        %v2001 = vunpack.c.l.b16 %v450
        %v2002 = vunpack.c.h.b16 %v450
        %v2003 = vunpack.c.l.b16 %v451
        %v2004 = vunpack.c.h.b16 %v451
        %v2005 = vunpack.c.l.b16 %v452
        %v2006 = vunpack.c.h.b16 %v452
        %v2007 = vunpack.c.l.b16 %v453
        %v2008 = vunpack.c.h.b16 %v453
        %v2009 = vunpack.c.l.b16 %v454
        %v2010 = vunpack.c.h.b16 %v454
        %v2011 = vunpack.c.l.b16 %v455
        %v2012 = vunpack.c.h.b16 %v455
        %v2013 = vunpack.c.l.b16 %v456
        %v2014 = vunpack.c.h.b16 %v456
        %v2015 = vunpack.c.l.b16 %v457
        %v2016 = vunpack.c.h.b16 %v457
        %v2017 = vunpack.c.l.b16 %v458
        %v2018 = vunpack.c.h.b16 %v458
        %v2019 = vunpack.c.l.b16 %v459
        %v2020 = vunpack.c.h.b16 %v459
        %v2021 = vunpack.c.l.b16 %v460
        %v2022 = vunpack.c.h.b16 %v460
        %v2023 = vunpack.c.l.b16 %v461
        %v2024 = vunpack.c.h.b16 %v461
        %v2025 = vunpack.c.l.b16 %v462
        %v2026 = vunpack.c.h.b16 %v462
        %v2027 = vunpack.c.l.b16 %v463
        %v2028 = vunpack.c.h.b16 %v463
        %v2029 = vunpack.c.l.b16 %v464
        %v2030 = vunpack.c.h.b16 %v464
        %v2031 = vunpack.c.l.b16 %v465
        %v2032 = vunpack.c.h.b16 %v465
        %v2033 = vunpack.c.l.b16 %v466
        %v2034 = vunpack.c.h.b16 %v466
        %v2035 = vunpack.c.l.b16 %v467
        %v2036 = vunpack.c.h.b16 %v467
        %v2037 = vunpack.c.l.b16 %v468
        %v2038 = vunpack.c.h.b16 %v468
        %v2039 = vunpack.c.l.b16 %v469
        %v2040 = vunpack.c.h.b16 %v469
        %v2041 = vunpack.c.l.b16 %v470
        %v2042 = vunpack.c.h.b16 %v470
        %v2043 = vunpack.c.l.b16 %v471
        %v2044 = vunpack.c.h.b16 %v471
        %v2045 = vunpack.c.l.b16 %v472
        %v2046 = vunpack.c.h.b16 %v472
        %v2047 = vunpack.c.l.b16 %v473
        %v2048 = vunpack.c.h.b16 %v473
        %v2049 = vunpack.c.l.b16 %v474
        %v2050 = vunpack.c.h.b16 %v474
        %v2051 = vunpack.c.l.b16 %v475
        %v2052 = vunpack.c.h.b16 %v475
        %v2053 = vunpack.c.l.b16 %v476
        %v2054 = vunpack.c.h.b16 %v476
        %v2055 = vunpack.c.l.b16 %v477
        %v2056 = vunpack.c.h.b16 %v477
        %v2057 = vunpack.c.l.b16 %v478
        %v2058 = vunpack.c.h.b16 %v478
        %v2059 = vunpack.c.l.b16 %v479
        %v2060 = vunpack.c.h.b16 %v479
        %v2061 = vunpack.c.l.b16 %v480
        %v2062 = vunpack.c.h.b16 %v480
        %v2063 = vunpack.c.l.b16 %v481
        %v2064 = vunpack.c.h.b16 %v481
        %v2065 = vunpack.c.l.b16 %v482
        %v2066 = vunpack.c.h.b16 %v482
        %v2067 = vunpack.c.l.b16 %v483
        %v2068 = vunpack.c.h.b16 %v483
        %v2069 = vunpack.c.l.b16 %v484
        %v2070 = vunpack.c.h.b16 %v484
        %v2071 = vunpack.c.l.b16 %v485
        %v2072 = vunpack.c.h.b16 %v485
        %v2073 = vunpack.c.l.b16 %v486
        %v2074 = vunpack.c.h.b16 %v486
        %v2075 = vunpack.c.l.b16 %v487
        %v2076 = vunpack.c.h.b16 %v487
        %v2077 = vunpack.c.l.b16 %v488
        %v2078 = vunpack.c.h.b16 %v488
        %v2079 = vunpack.c.l.b16 %v489
        %v2080 = vunpack.c.h.b16 %v489
        %v2081 = vunpack.c.l.b16 %v490
        %v2082 = vunpack.c.h.b16 %v490
        %v2083 = vunpack.c.l.b16 %v491
        %v2084 = vunpack.c.h.b16 %v491
        %v2085 = vunpack.c.l.b16 %v492
        %v2086 = vunpack.c.h.b16 %v492
        %v2087 = vunpack.c.l.b16 %v493
        %v2088 = vunpack.c.h.b16 %v493
        %v2089 = vunpack.c.l.b16 %v494
        %v2090 = vunpack.c.h.b16 %v494
        %v2091 = vunpack.c.l.b16 %v495
        %v2092 = vunpack.c.h.b16 %v495
        %v2093 = vunpack.c.l.b16 %v496
        %v2094 = vunpack.c.h.b16 %v496
        %v2095 = vunpack.c.l.b16 %v497
        %v2096 = vunpack.c.h.b16 %v497
        %v2097 = vunpack.c.l.b16 %v498
        %v2098 = vunpack.c.h.b16 %v498
        %v2099 = vunpack.c.l.b16 %v499
        %v2100 = vunpack.c.h.b16 %v499
        %v2101 = vunpack.c.l.b16 %v500
        %v2102 = vunpack.c.h.b16 %v500
        %v2103 = vunpack.c.l.b16 %v501
        %v2104 = vunpack.c.h.b16 %v501
        %v2105 = vunpack.c.l.b16 %v502
        %v2106 = vunpack.c.h.b16 %v502
        %v2107 = vunpack.c.l.b16 %v503
        %v2108 = vunpack.c.h.b16 %v503
        %v2109 = vunpack.c.l.b16 %v504
        %v2110 = vunpack.c.h.b16 %v504
        %v2111 = vunpack.c.l.b16 %v505
        %v2112 = vunpack.c.h.b16 %v505
        %v2113 = vunpack.c.l.b16 %v506
        %v2114 = vunpack.c.h.b16 %v506
        %v2115 = vunpack.c.l.b16 %v507
        %v2116 = vunpack.c.h.b16 %v507
        %v2117 = vunpack.c.l.b16 %v508
        %v2118 = vunpack.c.h.b16 %v508
        %v2119 = vunpack.c.l.b16 %v509
        %v2120 = vunpack.c.h.b16 %v509
        %v2121 = vunpack.c.l.b16 %v510
        %v2122 = vunpack.c.h.b16 %v510
        %v2123 = vunpack.c.l.b16 %v511
        %v2124 = vunpack.c.h.b16 %v511
        %v2125 = vunpack.c.l.b16 %v512
        %v2126 = vunpack.c.h.b16 %v512
        %v2127 = vunpack.c.l.b16 %v513
        %v2128 = vunpack.c.h.b16 %v513
        %v2129 = vunpack.c.l.b16 %v514
        %v2130 = vunpack.c.h.b16 %v514
        %v2131 = vunpack.c.l.b16 %v515
        %v2132 = vunpack.c.h.b16 %v515
        %v2133 = vunpack.c.l.b16 %v516
        %v2134 = vunpack.c.h.b16 %v516
        %v2135 = vunpack.c.l.b16 %v517
        %v2136 = vunpack.c.h.b16 %v517
        %v2137 = vunpack.c.l.b16 %v518
        %v2138 = vunpack.c.h.b16 %v518
        %v2139 = vunpack.c.l.b16 %v519
        %v2140 = vunpack.c.h.b16 %v519
        %v2141 = vunpack.c.l.b16 %v520
        %v2142 = vunpack.c.h.b16 %v520
        %v2143 = vunpack.c.l.b16 %v521
        %v2144 = vunpack.c.h.b16 %v521
        %v2145 = vunpack.c.l.b16 %v522
        %v2146 = vunpack.c.h.b16 %v522
        %v2147 = vunpack.c.l.b16 %v523
        %v2148 = vunpack.c.h.b16 %v523
        %v2149 = vunpack.c.l.b16 %v524
        %v2150 = vunpack.c.h.b16 %v524
        %v2151 = vunpack.c.l.b16 %v525
        %v2152 = vunpack.c.h.b16 %v525
        %v2153 = vunpack.c.l.b16 %v526
        %v2154 = vunpack.c.h.b16 %v526
        %v2155 = vunpack.c.l.b16 %v527
        %v2156 = vunpack.c.h.b16 %v527
        %v2157 = vunpack.c.l.b16 %v528
        %v2158 = vunpack.c.h.b16 %v528
        %v2159 = vunpack.c.l.b16 %v529
        %v2160 = vunpack.c.h.b16 %v529
        %v2161 = vunpack.c.l.b16 %v530
        %v2162 = vunpack.c.h.b16 %v530
        %v2163 = vunpack.c.l.b16 %v531
        %v2164 = vunpack.c.h.b16 %v531
        %v2165 = vunpack.c.l.b16 %v532
        %v2166 = vunpack.c.h.b16 %v532
        %v2167 = vunpack.c.l.b16 %v533
        %v2168 = vunpack.c.h.b16 %v533
        %v2169 = vunpack.c.l.b16 %v534
        %v2170 = vunpack.c.h.b16 %v534
        %v2171 = vunpack.c.l.b16 %v535
        %v2172 = vunpack.c.h.b16 %v535
        %v2173 = vunpack.c.l.b16 %v536
        %v2174 = vunpack.c.h.b16 %v536
        %v2175 = vunpack.c.l.b16 %v537
        %v2176 = vunpack.c.h.b16 %v537
        %v2177 = vunpack.c.l.b16 %v538
        %v2178 = vunpack.c.h.b16 %v538
        %v2179 = vunpack.c.l.b16 %v539
        %v2180 = vunpack.c.h.b16 %v539
        %v2181 = vunpack.c.l.b16 %v540
        %v2182 = vunpack.c.h.b16 %v540
        %v2183 = vunpack.c.l.b16 %v541
        %v2184 = vunpack.c.h.b16 %v541
        %v2185 = vunpack.c.l.b16 %v542
        %v2186 = vunpack.c.h.b16 %v542
        %v2187 = vunpack.c.l.b16 %v543
        %v2188 = vunpack.c.h.b16 %v543
        %v2189 = vunpack.c.l.b16 %v544
        %v2190 = vunpack.c.h.b16 %v544
        %v2191 = vunpack.c.l.b16 %v545
        %v2192 = vunpack.c.h.b16 %v545
        %v2193 = vunpack.c.l.b16 %v546
        %v2194 = vunpack.c.h.b16 %v546
        %v2195 = vunpack.c.l.b16 %v547
        %v2196 = vunpack.c.h.b16 %v547
        %v2197 = vunpack.c.l.b16 %v548
        %v2198 = vunpack.c.h.b16 %v548
        %v2199 = vunpack.c.l.b16 %v549
        %v2200 = vunpack.c.h.b16 %v549
        %v2201 = vunpack.c.l.b16 %v550
        %v2202 = vunpack.c.h.b16 %v550
        %v2203 = vunpack.c.l.b16 %v551
        %v2204 = vunpack.c.h.b16 %v551
        %v2205 = vunpack.c.l.b16 %v552
        %v2206 = vunpack.c.h.b16 %v552
        %v2207 = vunpack.c.l.b16 %v553
        %v2208 = vunpack.c.h.b16 %v553
        %v2209 = vunpack.c.l.b16 %v554
        %v2210 = vunpack.c.h.b16 %v554
        %v2211 = vunpack.c.l.b16 %v555
        %v2212 = vunpack.c.h.b16 %v555
        %v2213 = vunpack.c.l.b16 %v556
        %v2214 = vunpack.c.h.b16 %v556
        %v2215 = vunpack.c.l.b16 %v557
        %v2216 = vunpack.c.h.b16 %v557
        %v2217 = vunpack.c.l.b16 %v558
        %v2218 = vunpack.c.h.b16 %v558
        %v2219 = vunpack.c.l.b16 %v559
        %v2220 = vunpack.c.h.b16 %v559
        %v2221 = vunpack.c.l.b16 %v560
        %v2222 = vunpack.c.h.b16 %v560
        %v2223 = vunpack.c.l.b16 %v561
        %v2224 = vunpack.c.h.b16 %v561
        %v2225 = vunpack.c.l.b16 %v562
        %v2226 = vunpack.c.h.b16 %v562
        %v2227 = vunpack.c.l.b16 %v563
        %v2228 = vunpack.c.h.b16 %v563
        %v2229 = vunpack.c.l.b16 %v564
        %v2230 = vunpack.c.h.b16 %v564
        %v2231 = vunpack.c.l.b16 %v565
        %v2232 = vunpack.c.h.b16 %v565
        %v2233 = vunpack.c.l.b16 %v566
        %v2234 = vunpack.c.h.b16 %v566
        %v2235 = vunpack.c.l.b16 %v567
        %v2236 = vunpack.c.h.b16 %v567
        %v2237 = vunpack.c.l.b16 %v568
        %v2238 = vunpack.c.h.b16 %v568
        %v2239 = vunpack.c.l.b16 %v569
        %v2240 = vunpack.c.h.b16 %v569
        %v2241 = vunpack.c.l.b16 %v570
        %v2242 = vunpack.c.h.b16 %v570
        %v2243 = vunpack.c.l.b16 %v571
        %v2244 = vunpack.c.h.b16 %v571
        %v2245 = vunpack.c.l.b16 %v572
        %v2246 = vunpack.c.h.b16 %v572
        %v2247 = vunpack.c.l.b16 %v573
        %v2248 = vunpack.c.h.b16 %v573
        %v2249 = vunpack.c.l.b16 %v574
        %v2250 = vunpack.c.h.b16 %v574
        %v2251 = vunpack.c.l.b16 %v575
        %v2252 = vunpack.c.h.b16 %v575
        %v2253 = vunpack.c.l.b16 %v576
        %v2254 = vunpack.c.h.b16 %v576
        %v2255 = vunpack.c.l.b16 %v577
        %v2256 = vunpack.c.h.b16 %v577
        %v2257 = vunpack.c.l.b16 %v578
        %v2258 = vunpack.c.h.b16 %v578
        %v2259 = vunpack.c.l.b16 %v579
        %v2260 = vunpack.c.h.b16 %v579
        %v2261 = vunpack.c.l.b16 %v580
        %v2262 = vunpack.c.h.b16 %v580
        %v2263 = vunpack.c.l.b16 %v581
        %v2264 = vunpack.c.h.b16 %v581
        %v2265 = vunpack.c.l.b16 %v582
        %v2266 = vunpack.c.h.b16 %v582
        %v2267 = vunpack.c.l.b16 %v583
        %v2268 = vunpack.c.h.b16 %v583
        %v2269 = vunpack.c.l.b16 %v584
        %v2270 = vunpack.c.h.b16 %v584
        %v2271 = vunpack.c.l.b16 %v585
        %v2272 = vunpack.c.h.b16 %v585
        %v2273 = vunpack.c.l.b16 %v586
        %v2274 = vunpack.c.h.b16 %v586
        %v2275 = vunpack.c.l.b16 %v587
        %v2276 = vunpack.c.h.b16 %v587
        %v2277 = vunpack.c.l.b16 %v588
        %v2278 = vunpack.c.h.b16 %v588
        %v2279 = vunpack.c.l.b16 %v589
        %v2280 = vunpack.c.h.b16 %v589
        %v2281 = vunpack.c.l.b16 %v590
        %v2282 = vunpack.c.h.b16 %v590
        %v2283 = vunpack.c.l.b16 %v591
        %v2284 = vunpack.c.h.b16 %v591
        %v2285 = vunpack.c.l.b16 %v592
        %v2286 = vunpack.c.h.b16 %v592
        %v2287 = vunpack.c.l.b16 %v593
        %v2288 = vunpack.c.h.b16 %v593
        %v2289 = vunpack.c.l.b16 %v594
        %v2290 = vunpack.c.h.b16 %v594
        %v2291 = vunpack.c.l.b16 %v595
        %v2292 = vunpack.c.h.b16 %v595
        %v2293 = vunpack.c.l.b16 %v596
        %v2294 = vunpack.c.h.b16 %v596
        %v2295 = vunpack.c.l.b16 %v597
        %v2296 = vunpack.c.h.b16 %v597
        %v2297 = vunpack.c.l.b16 %v598
        %v2298 = vunpack.c.h.b16 %v598
        %v2299 = vunpack.c.l.b16 %v599
        %v2300 = vunpack.c.h.b16 %v599
        %v2301 = vunpack.c.l.b16 %v600
        %v2302 = vunpack.c.h.b16 %v600
        %v2303 = vunpack.c.l.b16 %v601
        %v2304 = vunpack.c.h.b16 %v601
        %v2305 = vunpack.c.l.b16 %v602
        %v2306 = vunpack.c.h.b16 %v602
        %v2307 = vunpack.c.l.b16 %v603
        %v2308 = vunpack.c.h.b16 %v603
        %v2309 = vunpack.c.l.b16 %v604
        %v2310 = vunpack.c.h.b16 %v604
        %v2311 = vunpack.c.l.b16 %v605
        %v2312 = vunpack.c.h.b16 %v605
        %v2313 = vunpack.c.l.b16 %v606
        %v2314 = vunpack.c.h.b16 %v606
        %v2315 = vunpack.c.l.b16 %v607
        %v2316 = vunpack.c.h.b16 %v607
        %v2317 = vunpack.c.l.b16 %v608
        %v2318 = vunpack.c.h.b16 %v608
        %v2319 = vunpack.c.l.b16 %v609
        %v2320 = vunpack.c.h.b16 %v609
        %v2321 = vunpack.c.l.b16 %v610
        %v2322 = vunpack.c.h.b16 %v610
        %v2323 = vunpack.c.l.b16 %v611
        %v2324 = vunpack.c.h.b16 %v611
        %v2325 = vunpack.c.l.b16 %v612
        %v2326 = vunpack.c.h.b16 %v612
        %v2327 = vunpack.c.l.b16 %v613
        %v2328 = vunpack.c.h.b16 %v613
        %v2329 = vunpack.c.l.b16 %v614
        %v2330 = vunpack.c.h.b16 %v614
        %v2331 = vunpack.c.l.b16 %v615
        %v2332 = vunpack.c.h.b16 %v615
        %v2333 = vunpack.c.l.b16 %v616
        %v2334 = vunpack.c.h.b16 %v616
        %v2335 = vunpack.c.l.b16 %v617
        %v2336 = vunpack.c.h.b16 %v617
        %v2337 = vunpack.c.l.b16 %v618
        %v2338 = vunpack.c.h.b16 %v618
        %v2339 = vunpack.c.l.b16 %v619
        %v2340 = vunpack.c.h.b16 %v619
        %v2341 = vunpack.c.l.b16 %v620
        %v2342 = vunpack.c.h.b16 %v620
        %v2343 = vunpack.c.l.b16 %v621
        %v2344 = vunpack.c.h.b16 %v621
        %v2345 = vunpack.c.l.b16 %v622
        %v2346 = vunpack.c.h.b16 %v622
        %v2347 = vunpack.c.l.b16 %v623
        %v2348 = vunpack.c.h.b16 %v623
        %v2349 = vunpack.c.l.b16 %v624
        %v2350 = vunpack.c.h.b16 %v624
        %v2351 = vunpack.c.l.b16 %v625
        %v2352 = vunpack.c.h.b16 %v625
        %v2353 = vunpack.c.l.b16 %v626
        %v2354 = vunpack.c.h.b16 %v626
        %v2355 = vunpack.c.l.b16 %v627
        %v2356 = vunpack.c.h.b16 %v627
        %v2357 = vunpack.c.l.b16 %v628
        %v2358 = vunpack.c.h.b16 %v628
        %v2359 = vunpack.c.l.b16 %v629
        %v2360 = vunpack.c.h.b16 %v629
        %v2361 = vunpack.c.l.b16 %v630
        %v2362 = vunpack.c.h.b16 %v630
        %v2363 = vunpack.c.l.b16 %v631
        %v2364 = vunpack.c.h.b16 %v631
        %v2365 = vunpack.c.l.b16 %v632
        %v2366 = vunpack.c.h.b16 %v632
        %v2367 = vunpack.c.l.b16 %v633
        %v2368 = vunpack.c.h.b16 %v633
        %v2369 = vunpack.c.l.b16 %v634
        %v2370 = vunpack.c.h.b16 %v634
        %v2371 = vunpack.c.l.b16 %v635
        %v2372 = vunpack.c.h.b16 %v635
        %v2373 = vunpack.c.l.b16 %v636
        %v2374 = vunpack.c.h.b16 %v636
        %v2375 = vunpack.c.l.b16 %v637
        %v2376 = vunpack.c.h.b16 %v637
        %v2377 = vunpack.c.l.b16 %v638
        %v2378 = vunpack.c.h.b16 %v638
        %v2379 = vunpack.c.l.b16 %v639
        %v2380 = vunpack.c.h.b16 %v639
        %v2381 = vunpack.c.l.b16 %v640
        %v2382 = vunpack.c.h.b16 %v640
        %v2383 = vunpack.c.l.b16 %v641
        %v2384 = vunpack.c.h.b16 %v641
        %v2385 = vunpack.c.l.b16 %v642
        %v2386 = vunpack.c.h.b16 %v642
        %v2387 = vunpack.c.l.b16 %v643
        %v2388 = vunpack.c.h.b16 %v643
        %v2389 = vunpack.c.l.b16 %v644
        %v2390 = vunpack.c.h.b16 %v644
        %v2391 = vunpack.c.l.b16 %v645
        %v2392 = vunpack.c.h.b16 %v645
        %v2393 = vunpack.c.l.b16 %v646
        %v2394 = vunpack.c.h.b16 %v646
        %v2395 = vunpack.c.l.b16 %v647
        %v2396 = vunpack.c.h.b16 %v647
        %v2397 = vunpack.c.l.b16 %v648
        %v2398 = vunpack.c.h.b16 %v648
        %v2399 = vunpack.c.l.b16 %v649
        %v2400 = vunpack.c.h.b16 %v649
        %v2401 = vunpack.c.l.b16 %v650
        %v2402 = vunpack.c.h.b16 %v650
        %v2403 = vunpack.c.l.b16 %v651
        %v2404 = vunpack.c.h.b16 %v651
        %v2405 = vunpack.c.l.b16 %v652
        %v2406 = vunpack.c.h.b16 %v652
        %v2407 = vunpack.c.l.b16 %v653
        %v2408 = vunpack.c.h.b16 %v653
        %v2409 = vunpack.c.l.b16 %v654
        %v2410 = vunpack.c.h.b16 %v654
        %v2411 = vunpack.c.l.b16 %v655
        %v2412 = vunpack.c.h.b16 %v655
        %v2413 = vunpack.c.l.b16 %v656
        %v2414 = vunpack.c.h.b16 %v656
        %v2415 = vunpack.c.l.b16 %v657
        %v2416 = vunpack.c.h.b16 %v657
        %v2417 = vunpack.c.l.b16 %v658
        %v2418 = vunpack.c.h.b16 %v658
        %v2419 = vunpack.c.l.b16 %v659
        %v2420 = vunpack.c.h.b16 %v659
        %v2421 = vunpack.c.l.b16 %v660
        %v2422 = vunpack.c.h.b16 %v660
        %v2423 = vunpack.c.l.b16 %v661
        %v2424 = vunpack.c.h.b16 %v661
        %v2425 = vunpack.c.l.b16 %v662
        %v2426 = vunpack.c.h.b16 %v662
        %v2427 = vunpack.c.l.b16 %v663
        %v2428 = vunpack.c.h.b16 %v663
        %v2429 = vunpack.c.l.b16 %v664
        %v2430 = vunpack.c.h.b16 %v664
        %v2431 = vunpack.c.l.b16 %v665
        %v2432 = vunpack.c.h.b16 %v665
        %v2433 = vunpack.c.l.b16 %v666
        %v2434 = vunpack.c.h.b16 %v666
        %v2435 = vunpack.c.l.b16 %v667
        %v2436 = vunpack.c.h.b16 %v667
        %v2437 = vunpack.c.l.b16 %v668
        %v2438 = vunpack.c.h.b16 %v668
        %v2439 = vunpack.c.l.b16 %v669
        %v2440 = vunpack.c.h.b16 %v669
        %v2441 = vunpack.c.l.b16 %v670
        %v2442 = vunpack.c.h.b16 %v670
        %v2443 = vunpack.c.l.b16 %v671
        %v2444 = vunpack.c.h.b16 %v671
        %v2445 = vunpack.c.l.b16 %v672
        %v2446 = vunpack.c.h.b16 %v672
        %v2447 = vunpack.c.l.b16 %v673
        %v2448 = vunpack.c.h.b16 %v673
        %v2449 = vunpack.c.l.b16 %v674
        %v2450 = vunpack.c.h.b16 %v674
        %v2451 = vunpack.c.l.b16 %v675
        %v2452 = vunpack.c.h.b16 %v675
        %v2453 = vunpack.c.l.b16 %v676
        %v2454 = vunpack.c.h.b16 %v676
        %v2455 = vunpack.c.l.b16 %v677
        %v2456 = vunpack.c.h.b16 %v677
        %v2457 = vunpack.c.l.b16 %v678
        %v2458 = vunpack.c.h.b16 %v678
        %v2459 = vunpack.c.l.b16 %v679
        %v2460 = vunpack.c.h.b16 %v679
        %v2461 = vunpack.c.l.b16 %v680
        %v2462 = vunpack.c.h.b16 %v680
        %v2463 = vunpack.c.l.b16 %v681
        %v2464 = vunpack.c.h.b16 %v681
        %v2465 = vunpack.c.l.b16 %v682
        %v2466 = vunpack.c.h.b16 %v682
        %v2467 = vunpack.c.l.b16 %v683
        %v2468 = vunpack.c.h.b16 %v683
        %v2469 = vunpack.c.l.b16 %v684
        %v2470 = vunpack.c.h.b16 %v684
        %v2471 = vunpack.c.l.b16 %v685
        %v2472 = vunpack.c.h.b16 %v685
        %v2473 = vunpack.c.l.b16 %v686
        %v2474 = vunpack.c.h.b16 %v686
        %v2475 = vunpack.c.l.b16 %v687
        %v2476 = vunpack.c.h.b16 %v687
        %v2477 = vunpack.c.l.b16 %v688
        %v2478 = vunpack.c.h.b16 %v688
        %v2479 = vunpack.c.l.b16 %v689
        %v2480 = vunpack.c.h.b16 %v689
        %v2481 = vunpack.c.l.b16 %v690
        %v2482 = vunpack.c.h.b16 %v690
        %v2483 = vunpack.c.l.b16 %v691
        %v2484 = vunpack.c.h.b16 %v691
        %v2485 = vunpack.c.l.b16 %v692
        %v2486 = vunpack.c.h.b16 %v692
        %v2487 = vunpack.c.l.b16 %v693
        %v2488 = vunpack.c.h.b16 %v693
        %v2489 = vunpack.c.l.b16 %v694
        %v2490 = vunpack.c.h.b16 %v694
        %v2491 = vunpack.c.l.b16 %v695
        %v2492 = vunpack.c.h.b16 %v695
        %v2493 = vunpack.c.l.b16 %v696
        %v2494 = vunpack.c.h.b16 %v696
        %v2495 = vunpack.c.l.b16 %v697
        %v2496 = vunpack.c.h.b16 %v697
        %v2497 = vunpack.c.l.b16 %v698
        %v2498 = vunpack.c.h.b16 %v698
        %v2499 = vunpack.c.l.b16 %v699
        %v2500 = vunpack.c.h.b16 %v699
        %v2501 = vunpack.c.l.b16 %v700
        %v2502 = vunpack.c.h.b16 %v700
        %v2503 = vunpack.c.l.b16 %v701
        %v2504 = vunpack.c.h.b16 %v701
        %v2505 = vunpack.c.l.b16 %v702
        %v2506 = vunpack.c.h.b16 %v702
        %v2507 = vunpack.c.l.b16 %v703
        %v2508 = vunpack.c.h.b16 %v703
        %v2509 = vunpack.c.l.b16 %v704
        %v2510 = vunpack.c.h.b16 %v704
        %v2511 = vunpack.c.l.b16 %v705
        %v2512 = vunpack.c.h.b16 %v705
        %v2513 = vunpack.c.l.b16 %v706
        %v2514 = vunpack.c.h.b16 %v706
        %v2515 = vunpack.c.l.b16 %v707
        %v2516 = vunpack.c.h.b16 %v707
        %v2517 = vunpack.c.l.b16 %v708
        %v2518 = vunpack.c.h.b16 %v708
        %v2519 = vunpack.c.l.b16 %v709
        %v2520 = vunpack.c.h.b16 %v709
        %v2521 = vunpack.c.l.b16 %v710
        %v2522 = vunpack.c.h.b16 %v710
        %v2523 = vunpack.c.l.b16 %v711
        %v2524 = vunpack.c.h.b16 %v711
        %v2525 = vunpack.c.l.b16 %v712
        %v2526 = vunpack.c.h.b16 %v712
        %v2527 = vunpack.c.l.b16 %v713
        %v2528 = vunpack.c.h.b16 %v713
        %v2529 = vunpack.c.l.b16 %v714
        %v2530 = vunpack.c.h.b16 %v714
        %v2531 = vunpack.c.l.b16 %v715
        %v2532 = vunpack.c.h.b16 %v715
        %v2533 = vunpack.c.l.b16 %v716
        %v2534 = vunpack.c.h.b16 %v716
        %v2535 = vunpack.c.l.b16 %v717
        %v2536 = vunpack.c.h.b16 %v717
        %v2537 = vunpack.c.l.b16 %v718
        %v2538 = vunpack.c.h.b16 %v718
        %v2539 = vunpack.c.l.b16 %v719
        %v2540 = vunpack.c.h.b16 %v719
        %v2541 = vunpack.c.l.b16 %v720
        %v2542 = vunpack.c.h.b16 %v720
        %v2543 = vunpack.c.l.b16 %v721
        %v2544 = vunpack.c.h.b16 %v721
        %v2545 = vunpack.c.l.b16 %v722
        %v2546 = vunpack.c.h.b16 %v722
        %v2547 = vunpack.c.l.b16 %v723
        %v2548 = vunpack.c.h.b16 %v723
        %v2549 = vunpack.c.l.b16 %v724
        %v2550 = vunpack.c.h.b16 %v724
        %v2551 = vunpack.c.l.b16 %v725
        %v2552 = vunpack.c.h.b16 %v725
        %v2553 = vunpack.c.l.b16 %v726
        %v2554 = vunpack.c.h.b16 %v726
        %v2555 = vunpack.c.l.b16 %v727
        %v2556 = vunpack.c.h.b16 %v727
        %v2557 = vunpack.c.l.b16 %v728
        %v2558 = vunpack.c.h.b16 %v728
        %v2559 = vunpack.c.l.b16 %v729
        %v2560 = vunpack.c.h.b16 %v729
        %v2561 = vunpack.c.l.b16 %v730
        %v2562 = vunpack.c.h.b16 %v730
        %v2563 = vunpack.c.l.b16 %v731
        %v2564 = vunpack.c.h.b16 %v731
        %v2565 = vunpack.c.l.b16 %v732
        %v2566 = vunpack.c.h.b16 %v732
        %v2567 = vunpack.c.l.b16 %v733
        %v2568 = vunpack.c.h.b16 %v733
        %v2569 = vunpack.c.l.b16 %v734
        %v2570 = vunpack.c.h.b16 %v734
        %v2571 = vunpack.c.l.b16 %v735
        %v2572 = vunpack.c.h.b16 %v735
        %v2573 = vunpack.c.l.b16 %v736
        %v2574 = vunpack.c.h.b16 %v736
        %v2575 = vunpack.c.l.b16 %v737
        %v2576 = vunpack.c.h.b16 %v737
        %v2577 = vunpack.c.l.b16 %v738
        %v2578 = vunpack.c.h.b16 %v738
        %v2579 = vunpack.c.l.b16 %v739
        %v2580 = vunpack.c.h.b16 %v739
        %v2581 = vunpack.c.l.b16 %v740
        %v2582 = vunpack.c.h.b16 %v740
        %v2583 = vunpack.c.l.b16 %v741
        %v2584 = vunpack.c.h.b16 %v741
        %v2585 = vunpack.c.l.b16 %v742
        %v2586 = vunpack.c.h.b16 %v742
        %v2587 = vunpack.c.l.b16 %v743
        %v2588 = vunpack.c.h.b16 %v743
        %v2589 = vunpack.c.l.b16 %v744
        %v2590 = vunpack.c.h.b16 %v744
        %v2591 = vunpack.c.l.b16 %v745
        %v2592 = vunpack.c.h.b16 %v745
        %v2593 = vunpack.c.l.b16 %v746
        %v2594 = vunpack.c.h.b16 %v746
        %v2595 = vunpack.c.l.b16 %v747
        %v2596 = vunpack.c.h.b16 %v747
        %v2597 = vunpack.c.l.b16 %v748
        %v2598 = vunpack.c.h.b16 %v748
        %v2599 = vunpack.c.l.b16 %v749
        %v2600 = vunpack.c.h.b16 %v749
        %v2601 = vunpack.c.l.b16 %v750
        %v2602 = vunpack.c.h.b16 %v750
        %v2603 = vunpack.c.l.b16 %v751
        %v2604 = vunpack.c.h.b16 %v751
        %v2605 = vunpack.c.l.b16 %v752
        %v2606 = vunpack.c.h.b16 %v752
        %v2607 = vunpack.c.l.b16 %v753
        %v2608 = vunpack.c.h.b16 %v753
        %v2609 = vunpack.c.l.b16 %v754
        %v2610 = vunpack.c.h.b16 %v754
        %v2611 = vunpack.c.l.b16 %v755
        %v2612 = vunpack.c.h.b16 %v755
        %v2613 = vunpack.c.l.b16 %v756
        %v2614 = vunpack.c.h.b16 %v756
        %v2615 = vunpack.c.l.b16 %v757
        %v2616 = vunpack.c.h.b16 %v757
        %v2617 = vunpack.c.l.b16 %v758
        %v2618 = vunpack.c.h.b16 %v758
        %v2619 = vunpack.c.l.b16 %v759
        %v2620 = vunpack.c.h.b16 %v759
        %v2621 = vunpack.c.l.b16 %v760
        %v2622 = vunpack.c.h.b16 %v760
        %v2623 = vunpack.c.l.b16 %v761
        %v2624 = vunpack.c.h.b16 %v761
        %v2625 = vunpack.c.l.b16 %v762
        %v2626 = vunpack.c.h.b16 %v762
        %v2627 = vunpack.c.l.b16 %v763
        %v2628 = vunpack.c.h.b16 %v763
        %v2629 = vunpack.c.l.b16 %v764
        %v2630 = vunpack.c.h.b16 %v764
        %v2631 = vunpack.c.l.b16 %v765
        %v2632 = vunpack.c.h.b16 %v765
        %v2633 = vunpack.c.l.b16 %v766
        %v2634 = vunpack.c.h.b16 %v766
        %v2635 = vunpack.c.l.b16 %v767
        %v2636 = vunpack.c.h.b16 %v767
        %v2637 = vunpack.c.l.b16 %v768
        %v2638 = vunpack.c.h.b16 %v768
        %v2639 = vunpack.c.l.b16 %v769
        %v2640 = vunpack.c.h.b16 %v769
        %v2641 = vunpack.c.l.b16 %v770
        %v2642 = vunpack.c.h.b16 %v770
        %v2643 = vunpack.c.l.b16 %v771
        %v2644 = vunpack.c.h.b16 %v771
        %v2645 = vunpack.c.l.b16 %v772
        %v2646 = vunpack.c.h.b16 %v772
        %v2647 = vunpack.c.l.b16 %v773
        %v2648 = vunpack.c.h.b16 %v773
        %v2649 = vunpack.c.l.b16 %v774
        %v2650 = vunpack.c.h.b16 %v774
        %v2651 = vunpack.c.l.b16 %v775
        %v2652 = vunpack.c.h.b16 %v775
        %v2653 = vunpack.c.l.b16 %v776
        %v2654 = vunpack.c.h.b16 %v776
        %v2655 = vunpack.c.l.b16 %v777
        %v2656 = vunpack.c.h.b16 %v777
        %v2657 = vunpack.c.l.b16 %v778
        %v2658 = vunpack.c.h.b16 %v778
        %v2659 = vunpack.c.l.b16 %v779
        %v2660 = vunpack.c.h.b16 %v779
        %v2661 = vunpack.c.l.b16 %v780
        %v2662 = vunpack.c.h.b16 %v780
        %v2663 = vunpack.c.l.b16 %v781
        %v2664 = vunpack.c.h.b16 %v781
        %v2665 = vunpack.c.l.b16 %v782
        %v2666 = vunpack.c.h.b16 %v782
        %v2667 = vunpack.c.l.b16 %v783
        %v2668 = vunpack.c.h.b16 %v783
        %v2669 = vunpack.c.l.b16 %v784
        %v2670 = vunpack.c.h.b16 %v784
        %v2671 = vunpack.c.l.b16 %v785
        %v2672 = vunpack.c.h.b16 %v785
        %v2673 = vunpack.c.l.b16 %v786
        %v2674 = vunpack.c.h.b16 %v786
        %v2675 = vunpack.c.l.b16 %v787
        %v2676 = vunpack.c.h.b16 %v787
        %v2677 = vunpack.c.l.b16 %v788
        %v2678 = vunpack.c.h.b16 %v788
        %v2679 = vunpack.c.l.b16 %v789
        %v2680 = vunpack.c.h.b16 %v789
        %v2681 = vunpack.c.l.b16 %v790
        %v2682 = vunpack.c.h.b16 %v790
        %v2683 = vunpack.c.l.b16 %v791
        %v2684 = vunpack.c.h.b16 %v791
        %v2685 = vunpack.c.l.b16 %v792
        %v2686 = vunpack.c.h.b16 %v792
        %v2687 = vunpack.c.l.b16 %v793
        %v2688 = vunpack.c.h.b16 %v793
        %v2689 = vunpack.c.l.b16 %v794
        %v2690 = vunpack.c.h.b16 %v794
        %v2691 = vunpack.c.l.b16 %v795
        %v2692 = vunpack.c.h.b16 %v795
        %v2693 = vunpack.c.l.b16 %v796
        %v2694 = vunpack.c.h.b16 %v796
        %v2695 = vunpack.c.l.b16 %v797
        %v2696 = vunpack.c.h.b16 %v797
        %v2697 = vunpack.c.l.b16 %v798
        %v2698 = vunpack.c.h.b16 %v798
        %v2699 = vunpack.c.l.b16 %v799
        %v2700 = vunpack.c.h.b16 %v799
        %v2701 = vunpack.c.l.b16 %v800
        %v2702 = vunpack.c.h.b16 %v800
        %v2703 = vunpack.c.l.b16 %v801
        %v2704 = vunpack.c.h.b16 %v801
        %v2705 = vunpack.c.l.b16 %v802
        %v2706 = vunpack.c.h.b16 %v802
        %v2707 = vunpack.c.l.b16 %v803
        %v2708 = vunpack.c.h.b16 %v803
        %v2709 = vunpack.c.l.b16 %v804
        %v2710 = vunpack.c.h.b16 %v804
        %v2711 = vunpack.c.l.b16 %v805
        %v2712 = vunpack.c.h.b16 %v805
        %v2713 = vunpack.c.l.b16 %v806
        %v2714 = vunpack.c.h.b16 %v806
        %v2715 = vunpack.c.l.b16 %v807
        %v2716 = vunpack.c.h.b16 %v807
        %v2717 = vunpack.c.l.b16 %v808
        %v2718 = vunpack.c.h.b16 %v808
        %v2719 = vunpack.c.l.b16 %v809
        %v2720 = vunpack.c.h.b16 %v809
        %v2721 = vunpack.c.l.b16 %v810
        %v2722 = vunpack.c.h.b16 %v810
        %v2723 = vunpack.c.l.b16 %v811
        %v2724 = vunpack.c.h.b16 %v811
        %v2725 = vunpack.c.l.b16 %v812
        %v2726 = vunpack.c.h.b16 %v812
        %v2727 = vunpack.c.l.b16 %v813
        %v2728 = vunpack.c.h.b16 %v813
        %v2729 = vunpack.c.l.b16 %v814
        %v2730 = vunpack.c.h.b16 %v814
        %v2731 = vunpack.c.l.b16 %v815
        %v2732 = vunpack.c.h.b16 %v815
        %v2733 = vunpack.c.l.b16 %v816
        %v2734 = vunpack.c.h.b16 %v816
        %v2735 = vunpack.c.l.b16 %v817
        %v2736 = vunpack.c.h.b16 %v817
        %v2737 = vunpack.c.l.b16 %v818
        %v2738 = vunpack.c.h.b16 %v818
        %v2739 = vunpack.c.l.b16 %v819
        %v2740 = vunpack.c.h.b16 %v819
        %v2741 = vunpack.c.l.b16 %v820
        %v2742 = vunpack.c.h.b16 %v820
        %v2743 = vunpack.c.l.b16 %v821
        %v2744 = vunpack.c.h.b16 %v821
        %v2745 = vunpack.c.l.b16 %v822
        %v2746 = vunpack.c.h.b16 %v822
        %v2747 = vunpack.c.l.b16 %v823
        %v2748 = vunpack.c.h.b16 %v823
        %v2749 = vunpack.c.l.b16 %v824
        %v2750 = vunpack.c.h.b16 %v824
        %v2751 = vunpack.c.l.b16 %v825
        %v2752 = vunpack.c.h.b16 %v825
        %v2753 = vunpack.c.l.b16 %v826
        %v2754 = vunpack.c.h.b16 %v826
        %v2755 = vunpack.c.l.b16 %v827
        %v2756 = vunpack.c.h.b16 %v827
        %v2757 = vunpack.c.l.b16 %v828
        %v2758 = vunpack.c.h.b16 %v828
        %v2759 = vunpack.c.l.b16 %v829
        %v2760 = vunpack.c.h.b16 %v829
        %v2761 = vunpack.c.l.b16 %v830
        %v2762 = vunpack.c.h.b16 %v830
        %v2763 = vunpack.c.l.b16 %v831
        %v2764 = vunpack.c.h.b16 %v831
        %v2765 = vunpack.c.l.b16 %v832
        %v2766 = vunpack.c.h.b16 %v832
        %v2767 = vunpack.c.l.b16 %v833
        %v2768 = vunpack.c.h.b16 %v833
        %v2769 = vunpack.c.l.b16 %v834
        %v2770 = vunpack.c.h.b16 %v834
        %v2771 = vunpack.c.l.b16 %v835
        %v2772 = vunpack.c.h.b16 %v835
        %v2773 = vunpack.c.l.b16 %v836
        %v2774 = vunpack.c.h.b16 %v836
        %v2775 = vunpack.c.l.b16 %v837
        %v2776 = vunpack.c.h.b16 %v837
        %v2777 = vunpack.c.l.b16 %v838
        %v2778 = vunpack.c.h.b16 %v838
        %v2779 = vunpack.c.l.b16 %v839
        %v2780 = vunpack.c.h.b16 %v839
        %v2781 = vunpack.c.l.b16 %v840
        %v2782 = vunpack.c.h.b16 %v840
        %v2783 = vunpack.c.l.b16 %v841
        %v2784 = vunpack.c.h.b16 %v841
        %v2785 = vunpack.c.l.b16 %v842
        %v2786 = vunpack.c.h.b16 %v842
        %v2787 = vunpack.c.l.b16 %v843
        %v2788 = vunpack.c.h.b16 %v843
        %v2789 = vunpack.c.l.b16 %v844
        %v2790 = vunpack.c.h.b16 %v844
        %v2791 = vunpack.c.l.b16 %v845
        %v2792 = vunpack.c.h.b16 %v845
        %v2793 = vunpack.c.l.b16 %v846
        %v2794 = vunpack.c.h.b16 %v846
        %v2795 = vunpack.c.l.b16 %v847
        %v2796 = vunpack.c.h.b16 %v847
        %v2797 = vunpack.c.l.b16 %v848
        %v2798 = vunpack.c.h.b16 %v848
        %v2799 = vunpack.c.l.b16 %v849
        %v2800 = vunpack.c.h.b16 %v849
        %v2801 = vunpack.c.l.b16 %v850
        %v2802 = vunpack.c.h.b16 %v850
        %v2803 = vunpack.c.l.b16 %v851
        %v2804 = vunpack.c.h.b16 %v851
        %v2805 = vunpack.c.l.b16 %v852
        %v2806 = vunpack.c.h.b16 %v852
        %v2807 = vunpack.c.l.b16 %v853
        %v2808 = vunpack.c.h.b16 %v853
        %v2809 = vunpack.c.l.b16 %v854
        %v2810 = vunpack.c.h.b16 %v854
        %v2811 = vunpack.c.l.b16 %v855
        %v2812 = vunpack.c.h.b16 %v855
        %v2813 = vunpack.c.l.b16 %v856
        %v2814 = vunpack.c.h.b16 %v856
        %v2815 = vunpack.c.l.b16 %v857
        %v2816 = vunpack.c.h.b16 %v857
        %v2817 = vunpack.c.l.b16 %v858
        %v2818 = vunpack.c.h.b16 %v858
        %v2819 = vunpack.c.l.b16 %v859
        %v2820 = vunpack.c.h.b16 %v859
        %v2821 = vunpack.c.l.b16 %v860
        %v2822 = vunpack.c.h.b16 %v860
        %v2823 = vunpack.c.l.b16 %v861
        %v2824 = vunpack.c.h.b16 %v861
        %v2825 = vunpack.c.l.b16 %v862
        %v2826 = vunpack.c.h.b16 %v862
        %v2827 = vunpack.c.l.b16 %v863
        %v2828 = vunpack.c.h.b16 %v863
        %v2829 = vunpack.c.l.b16 %v864
        %v2830 = vunpack.c.h.b16 %v864
        %v2831 = vunpack.c.l.b16 %v865
        %v2832 = vunpack.c.h.b16 %v865
        %v2833 = vunpack.c.l.b16 %v866
        %v2834 = vunpack.c.h.b16 %v866
        %v2835 = vunpack.c.l.b16 %v867
        %v2836 = vunpack.c.h.b16 %v867
        %v2837 = vunpack.c.l.b16 %v868
        %v2838 = vunpack.c.h.b16 %v868
        %v2839 = vunpack.c.l.b16 %v869
        %v2840 = vunpack.c.h.b16 %v869
        %v2841 = vunpack.c.l.b16 %v870
        %v2842 = vunpack.c.h.b16 %v870
        %v2843 = vunpack.c.l.b16 %v871
        %v2844 = vunpack.c.h.b16 %v871
        %v2845 = vunpack.c.l.b16 %v872
        %v2846 = vunpack.c.h.b16 %v872
        %v2847 = vunpack.c.l.b16 %v873
        %v2848 = vunpack.c.h.b16 %v873
        %v2849 = vunpack.c.l.b16 %v874
        %v2850 = vunpack.c.h.b16 %v874
        %v2851 = vunpack.c.l.b16 %v875
        %v2852 = vunpack.c.h.b16 %v875
        %v2853 = vunpack.c.l.b16 %v876
        %v2854 = vunpack.c.h.b16 %v876
        %v2855 = vunpack.c.l.b16 %v877
        %v2856 = vunpack.c.h.b16 %v877
        %v2857 = vunpack.c.l.b16 %v878
        %v2858 = vunpack.c.h.b16 %v878
        %v2859 = vunpack.c.l.b16 %v879
        %v2860 = vunpack.c.h.b16 %v879
        %v2861 = vunpack.c.l.b16 %v880
        %v2862 = vunpack.c.h.b16 %v880
        %v2863 = vunpack.c.l.b16 %v881
        %v2864 = vunpack.c.h.b16 %v881
        %v2865 = vunpack.c.l.b16 %v882
        %v2866 = vunpack.c.h.b16 %v882
        %v2867 = vunpack.c.l.b16 %v883
        %v2868 = vunpack.c.h.b16 %v883
        %v2869 = vunpack.c.l.b16 %v884
        %v2870 = vunpack.c.h.b16 %v884
        %v2871 = vunpack.c.l.b16 %v885
        %v2872 = vunpack.c.h.b16 %v885
        %v2873 = vunpack.c.l.b16 %v886
        %v2874 = vunpack.c.h.b16 %v886
        %v2875 = vunpack.c.l.b16 %v887
        %v2876 = vunpack.c.h.b16 %v887
        %v2877 = vunpack.c.l.b16 %v888
        %v2878 = vunpack.c.h.b16 %v888
        %v2879 = vunpack.c.l.b16 %v889
        %v2880 = vunpack.c.h.b16 %v889
        %v2881 = vunpack.c.l.b16 %v890
        %v2882 = vunpack.c.h.b16 %v890
        %v2883 = vunpack.c.l.b16 %v891
        %v2884 = vunpack.c.h.b16 %v891
        %v2885 = vunpack.c.l.b16 %v892
        %v2886 = vunpack.c.h.b16 %v892
        %v2887 = vunpack.c.l.b16 %v893
        %v2888 = vunpack.c.h.b16 %v893
        %v2889 = vunpack.c.l.b16 %v894
        %v2890 = vunpack.c.h.b16 %v894
        %v2891 = vunpack.c.l.b16 %v895
        %v2892 = vunpack.c.h.b16 %v895
        %v2893 = vunpack.c.l.b16 %v896
        %v2894 = vunpack.c.h.b16 %v896
        %v2895 = vunpack.c.l.b16 %v897
        %v2896 = vunpack.c.h.b16 %v897
        %v2897 = vunpack.c.l.b16 %v898
        %v2898 = vunpack.c.h.b16 %v898
        %v2899 = vpack.c.b16 %v1629, %v1619
        %v2900 = vpack.c.b16 %v1630, %v1620
        %v2901 = vpack.c.b16 %v1631, %v1621
        %v2902 = vpack.c.b16 %v1632, %v1622
        %v2903 = vpack.c.b16 %v1633, %v1623
        %v2904 = vpack.c.b16 %v1634, %v1624
        %v2905 = vpack.c.b16 %v1635, %v1625
        %v2906 = vpack.c.b16 %v1636, %v1626
        %v2907 = vpack.c.b16 %v1637, %v1627
        %v2908 = vpack.c.b16 %v1638, %v1628
        %v2909 = vpack.c.b16 %v1649, %v1639
        %v2910 = vpack.c.b16 %v1650, %v1640
        %v2911 = vpack.c.b16 %v1651, %v1641
        %v2912 = vpack.c.b16 %v1652, %v1642
        %v2913 = vpack.c.b16 %v1653, %v1643
        %v2914 = vpack.c.b16 %v1654, %v1644
        %v2915 = vpack.c.b16 %v1655, %v1645
        %v2916 = vpack.c.b16 %v1656, %v1646
        %v2917 = vpack.c.b16 %v1657, %v1647
        %v2918 = vpack.c.b16 %v1658, %v1648
        %v2919 = vpack.c.b16 %v1669, %v1659
        %v2920 = vpack.c.b16 %v1670, %v1660
        %v2921 = vpack.c.b16 %v1671, %v1661
        %v2922 = vpack.c.b16 %v1672, %v1662
        %v2923 = vpack.c.b16 %v1673, %v1663
        %v2924 = vpack.c.b16 %v1674, %v1664
        %v2925 = vpack.c.b16 %v1675, %v1665
        %v2926 = vpack.c.b16 %v1676, %v1666
        %v2927 = vpack.c.b16 %v1677, %v1667
        %v2928 = vpack.c.b16 %v1678, %v1668
        %v2929 = vpack.c.b16 %v1689, %v1679
        %v2930 = vpack.c.b16 %v1690, %v1680
        %v2931 = vpack.c.b16 %v1691, %v1681
        %v2932 = vpack.c.b16 %v1692, %v1682
        %v2933 = vpack.c.b16 %v1693, %v1683
        %v2934 = vpack.c.b16 %v1694, %v1684
        %v2935 = vpack.c.b16 %v1695, %v1685
        %v2936 = vpack.c.b16 %v1696, %v1686
        %v2937 = vpack.c.b16 %v1697, %v1687
        %v2938 = vpack.c.b16 %v1698, %v1688
        %v2939 = vpack.c.b16 %v1709, %v1699
        %v2940 = vpack.c.b16 %v1710, %v1700
        %v2941 = vpack.c.b16 %v1711, %v1701
        %v2942 = vpack.c.b16 %v1712, %v1702
        %v2943 = vpack.c.b16 %v1713, %v1703
        %v2944 = vpack.c.b16 %v1714, %v1704
        %v2945 = vpack.c.b16 %v1715, %v1705
        %v2946 = vpack.c.b16 %v1716, %v1706
        %v2947 = vpack.c.b16 %v1717, %v1707
        %v2948 = vpack.c.b16 %v1718, %v1708
        %v2949 = vpack.c.b16 %v1729, %v1719
        %v2950 = vpack.c.b16 %v1730, %v1720
        %v2951 = vpack.c.b16 %v1731, %v1721
        %v2952 = vpack.c.b16 %v1732, %v1722
        %v2953 = vpack.c.b16 %v1733, %v1723
        %v2954 = vpack.c.b16 %v1734, %v1724
        %v2955 = vpack.c.b16 %v1735, %v1725
        %v2956 = vpack.c.b16 %v1736, %v1726
        %v2957 = vpack.c.b16 %v1737, %v1727
        %v2958 = vpack.c.b16 %v1738, %v1728
        %v2959 = vpack.c.b16 %v1749, %v1739
        %v2960 = vpack.c.b16 %v1750, %v1740
        %v2961 = vpack.c.b16 %v1751, %v1741
        %v2962 = vpack.c.b16 %v1752, %v1742
        %v2963 = vpack.c.b16 %v1753, %v1743
        %v2964 = vpack.c.b16 %v1754, %v1744
        %v2965 = vpack.c.b16 %v1755, %v1745
        %v2966 = vpack.c.b16 %v1756, %v1746
        %v2967 = vpack.c.b16 %v1757, %v1747
        %v2968 = vpack.c.b16 %v1758, %v1748
        %v2969 = vpack.c.b16 %v1769, %v1759
        %v2970 = vpack.c.b16 %v1770, %v1760
        %v2971 = vpack.c.b16 %v1771, %v1761
        %v2972 = vpack.c.b16 %v1772, %v1762
        %v2973 = vpack.c.b16 %v1773, %v1763
        %v2974 = vpack.c.b16 %v1774, %v1764
        %v2975 = vpack.c.b16 %v1775, %v1765
        %v2976 = vpack.c.b16 %v1776, %v1766
        %v2977 = vpack.c.b16 %v1777, %v1767
        %v2978 = vpack.c.b16 %v1778, %v1768
        %v2979 = vpack.c.b16 %v1789, %v1779
        %v2980 = vpack.c.b16 %v1790, %v1780
        %v2981 = vpack.c.b16 %v1791, %v1781
        %v2982 = vpack.c.b16 %v1792, %v1782
        %v2983 = vpack.c.b16 %v1793, %v1783
        %v2984 = vpack.c.b16 %v1794, %v1784
        %v2985 = vpack.c.b16 %v1795, %v1785
        %v2986 = vpack.c.b16 %v1796, %v1786
        %v2987 = vpack.c.b16 %v1797, %v1787
        %v2988 = vpack.c.b16 %v1798, %v1788
        %v2989 = vpack.c.b16 %v1809, %v1799
        %v2990 = vpack.c.b16 %v1810, %v1800
        %v2991 = vpack.c.b16 %v1811, %v1801
        %v2992 = vpack.c.b16 %v1812, %v1802
        %v2993 = vpack.c.b16 %v1813, %v1803
        %v2994 = vpack.c.b16 %v1814, %v1804
        %v2995 = vpack.c.b16 %v1815, %v1805
        %v2996 = vpack.c.b16 %v1816, %v1806
        %v2997 = vpack.c.b16 %v1817, %v1807
        %v2998 = vpack.c.b16 %v1818, %v1808
        %v2999 = vpack.c.b16 %v1829, %v1819
        %v3000 = vpack.c.b16 %v1830, %v1820
        %v3001 = vpack.c.b16 %v1831, %v1821
        %v3002 = vpack.c.b16 %v1832, %v1822
        %v3003 = vpack.c.b16 %v1833, %v1823
        %v3004 = vpack.c.b16 %v1834, %v1824
        %v3005 = vpack.c.b16 %v1835, %v1825
        %v3006 = vpack.c.b16 %v1836, %v1826
        %v3007 = vpack.c.b16 %v1837, %v1827
        %v3008 = vpack.c.b16 %v1838, %v1828
        %v3009 = vpack.c.b16 %v1849, %v1839
        %v3010 = vpack.c.b16 %v1850, %v1840
        %v3011 = vpack.c.b16 %v1851, %v1841
        %v3012 = vpack.c.b16 %v1852, %v1842
        %v3013 = vpack.c.b16 %v1853, %v1843
        %v3014 = vpack.c.b16 %v1854, %v1844
        %v3015 = vpack.c.b16 %v1855, %v1845
        %v3016 = vpack.c.b16 %v1856, %v1846
        %v3017 = vpack.c.b16 %v1857, %v1847
        %v3018 = vpack.c.b16 %v1858, %v1848
        %v3019 = vpack.c.b16 %v1869, %v1859
        %v3020 = vpack.c.b16 %v1870, %v1860
        %v3021 = vpack.c.b16 %v1871, %v1861
        %v3022 = vpack.c.b16 %v1872, %v1862
        %v3023 = vpack.c.b16 %v1873, %v1863
        %v3024 = vpack.c.b16 %v1874, %v1864
        %v3025 = vpack.c.b16 %v1875, %v1865
        %v3026 = vpack.c.b16 %v1876, %v1866
        %v3027 = vpack.c.b16 %v1877, %v1867
        %v3028 = vpack.c.b16 %v1878, %v1868
        %v3029 = vpack.c.b16 %v1889, %v1879
        %v3030 = vpack.c.b16 %v1890, %v1880
        %v3031 = vpack.c.b16 %v1891, %v1881
        %v3032 = vpack.c.b16 %v1892, %v1882
        %v3033 = vpack.c.b16 %v1893, %v1883
        %v3034 = vpack.c.b16 %v1894, %v1884
        %v3035 = vpack.c.b16 %v1895, %v1885
        %v3036 = vpack.c.b16 %v1896, %v1886
        %v3037 = vpack.c.b16 %v1897, %v1887
        %v3038 = vpack.c.b16 %v1898, %v1888
        %v3039 = vpack.c.b16 %v1909, %v1899
        %v3040 = vpack.c.b16 %v1910, %v1900
        %v3041 = vpack.c.b16 %v1911, %v1901
        %v3042 = vpack.c.b16 %v1912, %v1902
        %v3043 = vpack.c.b16 %v1913, %v1903
        %v3044 = vpack.c.b16 %v1914, %v1904
        %v3045 = vpack.c.b16 %v1915, %v1905
        %v3046 = vpack.c.b16 %v1916, %v1906
        %v3047 = vpack.c.b16 %v1917, %v1907
        %v3048 = vpack.c.b16 %v1918, %v1908
        %v3049 = vpack.c.b16 %v1929, %v1919
        %v3050 = vpack.c.b16 %v1930, %v1920
        %v3051 = vpack.c.b16 %v1931, %v1921
        %v3052 = vpack.c.b16 %v1932, %v1922
        %v3053 = vpack.c.b16 %v1933, %v1923
        %v3054 = vpack.c.b16 %v1934, %v1924
        %v3055 = vpack.c.b16 %v1935, %v1925
        %v3056 = vpack.c.b16 %v1936, %v1926
        %v3057 = vpack.c.b16 %v1937, %v1927
        %v3058 = vpack.c.b16 %v1938, %v1928
        %v3059 = vpack.c.b16 %v1949, %v1939
        %v3060 = vpack.c.b16 %v1950, %v1940
        %v3061 = vpack.c.b16 %v1951, %v1941
        %v3062 = vpack.c.b16 %v1952, %v1942
        %v3063 = vpack.c.b16 %v1953, %v1943
        %v3064 = vpack.c.b16 %v1954, %v1944
        %v3065 = vpack.c.b16 %v1955, %v1945
        %v3066 = vpack.c.b16 %v1956, %v1946
        %v3067 = vpack.c.b16 %v1957, %v1947
        %v3068 = vpack.c.b16 %v1958, %v1948
        %v3069 = vpack.c.b16 %v1969, %v1959
        %v3070 = vpack.c.b16 %v1970, %v1960
        %v3071 = vpack.c.b16 %v1971, %v1961
        %v3072 = vpack.c.b16 %v1972, %v1962
        %v3073 = vpack.c.b16 %v1973, %v1963
        %v3074 = vpack.c.b16 %v1974, %v1964
        %v3075 = vpack.c.b16 %v1975, %v1965
        %v3076 = vpack.c.b16 %v1976, %v1966
        %v3077 = vpack.c.b16 %v1977, %v1967
        %v3078 = vpack.c.b16 %v1978, %v1968
        %v3079 = vpack.c.b16 %v1989, %v1979
        %v3080 = vpack.c.b16 %v1990, %v1980
        %v3081 = vpack.c.b16 %v1991, %v1981
        %v3082 = vpack.c.b16 %v1992, %v1982
        %v3083 = vpack.c.b16 %v1993, %v1983
        %v3084 = vpack.c.b16 %v1994, %v1984
        %v3085 = vpack.c.b16 %v1995, %v1985
        %v3086 = vpack.c.b16 %v1996, %v1986
        %v3087 = vpack.c.b16 %v1997, %v1987
        %v3088 = vpack.c.b16 %v1998, %v1988
        %v3089 = vpack.c.b16 %v2009, %v1999
        %v3090 = vpack.c.b16 %v2010, %v2000
        %v3091 = vpack.c.b16 %v2011, %v2001
        %v3092 = vpack.c.b16 %v2012, %v2002
        %v3093 = vpack.c.b16 %v2013, %v2003
        %v3094 = vpack.c.b16 %v2014, %v2004
        %v3095 = vpack.c.b16 %v2015, %v2005
        %v3096 = vpack.c.b16 %v2016, %v2006
        %v3097 = vpack.c.b16 %v2017, %v2007
        %v3098 = vpack.c.b16 %v2018, %v2008
        %v3099 = vpack.c.b16 %v2029, %v2019
        %v3100 = vpack.c.b16 %v2030, %v2020
        %v3101 = vpack.c.b16 %v2031, %v2021
        %v3102 = vpack.c.b16 %v2032, %v2022
        %v3103 = vpack.c.b16 %v2033, %v2023
        %v3104 = vpack.c.b16 %v2034, %v2024
        %v3105 = vpack.c.b16 %v2035, %v2025
        %v3106 = vpack.c.b16 %v2036, %v2026
        %v3107 = vpack.c.b16 %v2037, %v2027
        %v3108 = vpack.c.b16 %v2038, %v2028
        %v3109 = vpack.c.b16 %v2049, %v2039
        %v3110 = vpack.c.b16 %v2050, %v2040
        %v3111 = vpack.c.b16 %v2051, %v2041
        %v3112 = vpack.c.b16 %v2052, %v2042
        %v3113 = vpack.c.b16 %v2053, %v2043
        %v3114 = vpack.c.b16 %v2054, %v2044
        %v3115 = vpack.c.b16 %v2055, %v2045
        %v3116 = vpack.c.b16 %v2056, %v2046
        %v3117 = vpack.c.b16 %v2057, %v2047
        %v3118 = vpack.c.b16 %v2058, %v2048
        %v3119 = vpack.c.b16 %v2069, %v2059
        %v3120 = vpack.c.b16 %v2070, %v2060
        %v3121 = vpack.c.b16 %v2071, %v2061
        %v3122 = vpack.c.b16 %v2072, %v2062
        %v3123 = vpack.c.b16 %v2073, %v2063
        %v3124 = vpack.c.b16 %v2074, %v2064
        %v3125 = vpack.c.b16 %v2075, %v2065
        %v3126 = vpack.c.b16 %v2076, %v2066
        %v3127 = vpack.c.b16 %v2077, %v2067
        %v3128 = vpack.c.b16 %v2078, %v2068
        %v3129 = vpack.c.b16 %v2089, %v2079
        %v3130 = vpack.c.b16 %v2090, %v2080
        %v3131 = vpack.c.b16 %v2091, %v2081
        %v3132 = vpack.c.b16 %v2092, %v2082
        %v3133 = vpack.c.b16 %v2093, %v2083
        %v3134 = vpack.c.b16 %v2094, %v2084
        %v3135 = vpack.c.b16 %v2095, %v2085
        %v3136 = vpack.c.b16 %v2096, %v2086
        %v3137 = vpack.c.b16 %v2097, %v2087
        %v3138 = vpack.c.b16 %v2098, %v2088
        %v3139 = vpack.c.b16 %v2109, %v2099
        %v3140 = vpack.c.b16 %v2110, %v2100
        %v3141 = vpack.c.b16 %v2111, %v2101
        %v3142 = vpack.c.b16 %v2112, %v2102
        %v3143 = vpack.c.b16 %v2113, %v2103
        %v3144 = vpack.c.b16 %v2114, %v2104
        %v3145 = vpack.c.b16 %v2115, %v2105
        %v3146 = vpack.c.b16 %v2116, %v2106
        %v3147 = vpack.c.b16 %v2117, %v2107
        %v3148 = vpack.c.b16 %v2118, %v2108
        %v3149 = vpack.c.b16 %v2129, %v2119
        %v3150 = vpack.c.b16 %v2130, %v2120
        %v3151 = vpack.c.b16 %v2131, %v2121
        %v3152 = vpack.c.b16 %v2132, %v2122
        %v3153 = vpack.c.b16 %v2133, %v2123
        %v3154 = vpack.c.b16 %v2134, %v2124
        %v3155 = vpack.c.b16 %v2135, %v2125
        %v3156 = vpack.c.b16 %v2136, %v2126
        %v3157 = vpack.c.b16 %v2137, %v2127
        %v3158 = vpack.c.b16 %v2138, %v2128
        %v3159 = vpack.c.b16 %v2149, %v2139
        %v3160 = vpack.c.b16 %v2150, %v2140
        %v3161 = vpack.c.b16 %v2151, %v2141
        %v3162 = vpack.c.b16 %v2152, %v2142
        %v3163 = vpack.c.b16 %v2153, %v2143
        %v3164 = vpack.c.b16 %v2154, %v2144
        %v3165 = vpack.c.b16 %v2155, %v2145
        %v3166 = vpack.c.b16 %v2156, %v2146
        %v3167 = vpack.c.b16 %v2157, %v2147
        %v3168 = vpack.c.b16 %v2158, %v2148
        %v3169 = vpack.c.b16 %v2169, %v2159
        %v3170 = vpack.c.b16 %v2170, %v2160
        %v3171 = vpack.c.b16 %v2171, %v2161
        %v3172 = vpack.c.b16 %v2172, %v2162
        %v3173 = vpack.c.b16 %v2173, %v2163
        %v3174 = vpack.c.b16 %v2174, %v2164
        %v3175 = vpack.c.b16 %v2175, %v2165
        %v3176 = vpack.c.b16 %v2176, %v2166
        %v3177 = vpack.c.b16 %v2177, %v2167
        %v3178 = vpack.c.b16 %v2178, %v2168
        %v3179 = vpack.c.b16 %v2189, %v2179
        %v3180 = vpack.c.b16 %v2190, %v2180
        %v3181 = vpack.c.b16 %v2191, %v2181
        %v3182 = vpack.c.b16 %v2192, %v2182
        %v3183 = vpack.c.b16 %v2193, %v2183
        %v3184 = vpack.c.b16 %v2194, %v2184
        %v3185 = vpack.c.b16 %v2195, %v2185
        %v3186 = vpack.c.b16 %v2196, %v2186
        %v3187 = vpack.c.b16 %v2197, %v2187
        %v3188 = vpack.c.b16 %v2198, %v2188
        %v3189 = vpack.c.b16 %v2209, %v2199
        %v3190 = vpack.c.b16 %v2210, %v2200
        %v3191 = vpack.c.b16 %v2211, %v2201
        %v3192 = vpack.c.b16 %v2212, %v2202
        %v3193 = vpack.c.b16 %v2213, %v2203
        %v3194 = vpack.c.b16 %v2214, %v2204
        %v3195 = vpack.c.b16 %v2215, %v2205
        %v3196 = vpack.c.b16 %v2216, %v2206
        %v3197 = vpack.c.b16 %v2217, %v2207
        %v3198 = vpack.c.b16 %v2218, %v2208
        %v3199 = vpack.c.b16 %v2229, %v2219
        %v3200 = vpack.c.b16 %v2230, %v2220
        %v3201 = vpack.c.b16 %v2231, %v2221
        %v3202 = vpack.c.b16 %v2232, %v2222
        %v3203 = vpack.c.b16 %v2233, %v2223
        %v3204 = vpack.c.b16 %v2234, %v2224
        %v3205 = vpack.c.b16 %v2235, %v2225
        %v3206 = vpack.c.b16 %v2236, %v2226
        %v3207 = vpack.c.b16 %v2237, %v2227
        %v3208 = vpack.c.b16 %v2238, %v2228
        %v3209 = vpack.c.b16 %v2249, %v2239
        %v3210 = vpack.c.b16 %v2250, %v2240
        %v3211 = vpack.c.b16 %v2251, %v2241
        %v3212 = vpack.c.b16 %v2252, %v2242
        %v3213 = vpack.c.b16 %v2253, %v2243
        %v3214 = vpack.c.b16 %v2254, %v2244
        %v3215 = vpack.c.b16 %v2255, %v2245
        %v3216 = vpack.c.b16 %v2256, %v2246
        %v3217 = vpack.c.b16 %v2257, %v2247
        %v3218 = vpack.c.b16 %v2258, %v2248
        %v3219 = vpack.c.b16 %v2269, %v2259
        %v3220 = vpack.c.b16 %v2270, %v2260
        %v3221 = vpack.c.b16 %v2271, %v2261
        %v3222 = vpack.c.b16 %v2272, %v2262
        %v3223 = vpack.c.b16 %v2273, %v2263
        %v3224 = vpack.c.b16 %v2274, %v2264
        %v3225 = vpack.c.b16 %v2275, %v2265
        %v3226 = vpack.c.b16 %v2276, %v2266
        %v3227 = vpack.c.b16 %v2277, %v2267
        %v3228 = vpack.c.b16 %v2278, %v2268
        %v3229 = vpack.c.b16 %v2289, %v2279
        %v3230 = vpack.c.b16 %v2290, %v2280
        %v3231 = vpack.c.b16 %v2291, %v2281
        %v3232 = vpack.c.b16 %v2292, %v2282
        %v3233 = vpack.c.b16 %v2293, %v2283
        %v3234 = vpack.c.b16 %v2294, %v2284
        %v3235 = vpack.c.b16 %v2295, %v2285
        %v3236 = vpack.c.b16 %v2296, %v2286
        %v3237 = vpack.c.b16 %v2297, %v2287
        %v3238 = vpack.c.b16 %v2298, %v2288
        %v3239 = vpack.c.b16 %v2309, %v2299
        %v3240 = vpack.c.b16 %v2310, %v2300
        %v3241 = vpack.c.b16 %v2311, %v2301
        %v3242 = vpack.c.b16 %v2312, %v2302
        %v3243 = vpack.c.b16 %v2313, %v2303
        %v3244 = vpack.c.b16 %v2314, %v2304
        %v3245 = vpack.c.b16 %v2315, %v2305
        %v3246 = vpack.c.b16 %v2316, %v2306
        %v3247 = vpack.c.b16 %v2317, %v2307
        %v3248 = vpack.c.b16 %v2318, %v2308
        %v3249 = vpack.c.b16 %v2329, %v2319
        %v3250 = vpack.c.b16 %v2330, %v2320
        %v3251 = vpack.c.b16 %v2331, %v2321
        %v3252 = vpack.c.b16 %v2332, %v2322
        %v3253 = vpack.c.b16 %v2333, %v2323
        %v3254 = vpack.c.b16 %v2334, %v2324
        %v3255 = vpack.c.b16 %v2335, %v2325
        %v3256 = vpack.c.b16 %v2336, %v2326
        %v3257 = vpack.c.b16 %v2337, %v2327
        %v3258 = vpack.c.b16 %v2338, %v2328
        %v3259 = vpack.c.b16 %v2349, %v2339
        %v3260 = vpack.c.b16 %v2350, %v2340
        %v3261 = vpack.c.b16 %v2351, %v2341
        %v3262 = vpack.c.b16 %v2352, %v2342
        %v3263 = vpack.c.b16 %v2353, %v2343
        %v3264 = vpack.c.b16 %v2354, %v2344
        %v3265 = vpack.c.b16 %v2355, %v2345
        %v3266 = vpack.c.b16 %v2356, %v2346
        %v3267 = vpack.c.b16 %v2357, %v2347
        %v3268 = vpack.c.b16 %v2358, %v2348
        %v3269 = vpack.c.b16 %v2369, %v2359
        %v3270 = vpack.c.b16 %v2370, %v2360
        %v3271 = vpack.c.b16 %v2371, %v2361
        %v3272 = vpack.c.b16 %v2372, %v2362
        %v3273 = vpack.c.b16 %v2373, %v2363
        %v3274 = vpack.c.b16 %v2374, %v2364
        %v3275 = vpack.c.b16 %v2375, %v2365
        %v3276 = vpack.c.b16 %v2376, %v2366
        %v3277 = vpack.c.b16 %v2377, %v2367
        %v3278 = vpack.c.b16 %v2378, %v2368
        %v3279 = vpack.c.b16 %v2389, %v2379
        %v3280 = vpack.c.b16 %v2390, %v2380
        %v3281 = vpack.c.b16 %v2391, %v2381
        %v3282 = vpack.c.b16 %v2392, %v2382
        %v3283 = vpack.c.b16 %v2393, %v2383
        %v3284 = vpack.c.b16 %v2394, %v2384
        %v3285 = vpack.c.b16 %v2395, %v2385
        %v3286 = vpack.c.b16 %v2396, %v2386
        %v3287 = vpack.c.b16 %v2397, %v2387
        %v3288 = vpack.c.b16 %v2398, %v2388
        %v3289 = vpack.c.b16 %v2409, %v2399
        %v3290 = vpack.c.b16 %v2410, %v2400
        %v3291 = vpack.c.b16 %v2411, %v2401
        %v3292 = vpack.c.b16 %v2412, %v2402
        %v3293 = vpack.c.b16 %v2413, %v2403
        %v3294 = vpack.c.b16 %v2414, %v2404
        %v3295 = vpack.c.b16 %v2415, %v2405
        %v3296 = vpack.c.b16 %v2416, %v2406
        %v3297 = vpack.c.b16 %v2417, %v2407
        %v3298 = vpack.c.b16 %v2418, %v2408
        %v3299 = vpack.c.b16 %v2429, %v2419
        %v3300 = vpack.c.b16 %v2430, %v2420
        %v3301 = vpack.c.b16 %v2431, %v2421
        %v3302 = vpack.c.b16 %v2432, %v2422
        %v3303 = vpack.c.b16 %v2433, %v2423
        %v3304 = vpack.c.b16 %v2434, %v2424
        %v3305 = vpack.c.b16 %v2435, %v2425
        %v3306 = vpack.c.b16 %v2436, %v2426
        %v3307 = vpack.c.b16 %v2437, %v2427
        %v3308 = vpack.c.b16 %v2438, %v2428
        %v3309 = vpack.c.b16 %v2449, %v2439
        %v3310 = vpack.c.b16 %v2450, %v2440
        %v3311 = vpack.c.b16 %v2451, %v2441
        %v3312 = vpack.c.b16 %v2452, %v2442
        %v3313 = vpack.c.b16 %v2453, %v2443
        %v3314 = vpack.c.b16 %v2454, %v2444
        %v3315 = vpack.c.b16 %v2455, %v2445
        %v3316 = vpack.c.b16 %v2456, %v2446
        %v3317 = vpack.c.b16 %v2457, %v2447
        %v3318 = vpack.c.b16 %v2458, %v2448
        %v3319 = vpack.c.b16 %v2469, %v2459
        %v3320 = vpack.c.b16 %v2470, %v2460
        %v3321 = vpack.c.b16 %v2471, %v2461
        %v3322 = vpack.c.b16 %v2472, %v2462
        %v3323 = vpack.c.b16 %v2473, %v2463
        %v3324 = vpack.c.b16 %v2474, %v2464
        %v3325 = vpack.c.b16 %v2475, %v2465
        %v3326 = vpack.c.b16 %v2476, %v2466
        %v3327 = vpack.c.b16 %v2477, %v2467
        %v3328 = vpack.c.b16 %v2478, %v2468
        %v3329 = vpack.c.b16 %v2489, %v2479
        %v3330 = vpack.c.b16 %v2490, %v2480
        %v3331 = vpack.c.b16 %v2491, %v2481
        %v3332 = vpack.c.b16 %v2492, %v2482
        %v3333 = vpack.c.b16 %v2493, %v2483
        %v3334 = vpack.c.b16 %v2494, %v2484
        %v3335 = vpack.c.b16 %v2495, %v2485
        %v3336 = vpack.c.b16 %v2496, %v2486
        %v3337 = vpack.c.b16 %v2497, %v2487
        %v3338 = vpack.c.b16 %v2498, %v2488
        %v3339 = vpack.c.b16 %v2509, %v2499
        %v3340 = vpack.c.b16 %v2510, %v2500
        %v3341 = vpack.c.b16 %v2511, %v2501
        %v3342 = vpack.c.b16 %v2512, %v2502
        %v3343 = vpack.c.b16 %v2513, %v2503
        %v3344 = vpack.c.b16 %v2514, %v2504
        %v3345 = vpack.c.b16 %v2515, %v2505
        %v3346 = vpack.c.b16 %v2516, %v2506
        %v3347 = vpack.c.b16 %v2517, %v2507
        %v3348 = vpack.c.b16 %v2518, %v2508
        %v3349 = vpack.c.b16 %v2529, %v2519
        %v3350 = vpack.c.b16 %v2530, %v2520
        %v3351 = vpack.c.b16 %v2531, %v2521
        %v3352 = vpack.c.b16 %v2532, %v2522
        %v3353 = vpack.c.b16 %v2533, %v2523
        %v3354 = vpack.c.b16 %v2534, %v2524
        %v3355 = vpack.c.b16 %v2535, %v2525
        %v3356 = vpack.c.b16 %v2536, %v2526
        %v3357 = vpack.c.b16 %v2537, %v2527
        %v3358 = vpack.c.b16 %v2538, %v2528
        %v3359 = vpack.c.b16 %v2549, %v2539
        %v3360 = vpack.c.b16 %v2550, %v2540
        %v3361 = vpack.c.b16 %v2551, %v2541
        %v3362 = vpack.c.b16 %v2552, %v2542
        %v3363 = vpack.c.b16 %v2553, %v2543
        %v3364 = vpack.c.b16 %v2554, %v2544
        %v3365 = vpack.c.b16 %v2555, %v2545
        %v3366 = vpack.c.b16 %v2556, %v2546
        %v3367 = vpack.c.b16 %v2557, %v2547
        %v3368 = vpack.c.b16 %v2558, %v2548
        %v3369 = vpack.c.b16 %v2569, %v2559
        %v3370 = vpack.c.b16 %v2570, %v2560
        %v3371 = vpack.c.b16 %v2571, %v2561
        %v3372 = vpack.c.b16 %v2572, %v2562
        %v3373 = vpack.c.b16 %v2573, %v2563
        %v3374 = vpack.c.b16 %v2574, %v2564
        %v3375 = vpack.c.b16 %v2575, %v2565
        %v3376 = vpack.c.b16 %v2576, %v2566
        %v3377 = vpack.c.b16 %v2577, %v2567
        %v3378 = vpack.c.b16 %v2578, %v2568
        %v3379 = vpack.c.b16 %v2589, %v2579
        %v3380 = vpack.c.b16 %v2590, %v2580
        %v3381 = vpack.c.b16 %v2591, %v2581
        %v3382 = vpack.c.b16 %v2592, %v2582
        %v3383 = vpack.c.b16 %v2593, %v2583
        %v3384 = vpack.c.b16 %v2594, %v2584
        %v3385 = vpack.c.b16 %v2595, %v2585
        %v3386 = vpack.c.b16 %v2596, %v2586
        %v3387 = vpack.c.b16 %v2597, %v2587
        %v3388 = vpack.c.b16 %v2598, %v2588
        %v3389 = vpack.c.b16 %v2609, %v2599
        %v3390 = vpack.c.b16 %v2610, %v2600
        %v3391 = vpack.c.b16 %v2611, %v2601
        %v3392 = vpack.c.b16 %v2612, %v2602
        %v3393 = vpack.c.b16 %v2613, %v2603
        %v3394 = vpack.c.b16 %v2614, %v2604
        %v3395 = vpack.c.b16 %v2615, %v2605
        %v3396 = vpack.c.b16 %v2616, %v2606
        %v3397 = vpack.c.b16 %v2617, %v2607
        %v3398 = vpack.c.b16 %v2618, %v2608
        %v3399 = vpack.c.b16 %v2629, %v2619
        %v3400 = vpack.c.b16 %v2630, %v2620
        %v3401 = vpack.c.b16 %v2631, %v2621
        %v3402 = vpack.c.b16 %v2632, %v2622
        %v3403 = vpack.c.b16 %v2633, %v2623
        %v3404 = vpack.c.b16 %v2634, %v2624
        %v3405 = vpack.c.b16 %v2635, %v2625
        %v3406 = vpack.c.b16 %v2636, %v2626
        %v3407 = vpack.c.b16 %v2637, %v2627
        %v3408 = vpack.c.b16 %v2638, %v2628
        %v3409 = vpack.c.b16 %v2649, %v2639
        %v3410 = vpack.c.b16 %v2650, %v2640
        %v3411 = vpack.c.b16 %v2651, %v2641
        %v3412 = vpack.c.b16 %v2652, %v2642
        %v3413 = vpack.c.b16 %v2653, %v2643
        %v3414 = vpack.c.b16 %v2654, %v2644
        %v3415 = vpack.c.b16 %v2655, %v2645
        %v3416 = vpack.c.b16 %v2656, %v2646
        %v3417 = vpack.c.b16 %v2657, %v2647
        %v3418 = vpack.c.b16 %v2658, %v2648
        %v3419 = vpack.c.b16 %v2669, %v2659
        %v3420 = vpack.c.b16 %v2670, %v2660
        %v3421 = vpack.c.b16 %v2671, %v2661
        %v3422 = vpack.c.b16 %v2672, %v2662
        %v3423 = vpack.c.b16 %v2673, %v2663
        %v3424 = vpack.c.b16 %v2674, %v2664
        %v3425 = vpack.c.b16 %v2675, %v2665
        %v3426 = vpack.c.b16 %v2676, %v2666
        %v3427 = vpack.c.b16 %v2677, %v2667
        %v3428 = vpack.c.b16 %v2678, %v2668
        %v3429 = vpack.c.b16 %v2689, %v2679
        %v3430 = vpack.c.b16 %v2690, %v2680
        %v3431 = vpack.c.b16 %v2691, %v2681
        %v3432 = vpack.c.b16 %v2692, %v2682
        %v3433 = vpack.c.b16 %v2693, %v2683
        %v3434 = vpack.c.b16 %v2694, %v2684
        %v3435 = vpack.c.b16 %v2695, %v2685
        %v3436 = vpack.c.b16 %v2696, %v2686
        %v3437 = vpack.c.b16 %v2697, %v2687
        %v3438 = vpack.c.b16 %v2698, %v2688
        %v3439 = vpack.c.b16 %v2709, %v2699
        %v3440 = vpack.c.b16 %v2710, %v2700
        %v3441 = vpack.c.b16 %v2711, %v2701
        %v3442 = vpack.c.b16 %v2712, %v2702
        %v3443 = vpack.c.b16 %v2713, %v2703
        %v3444 = vpack.c.b16 %v2714, %v2704
        %v3445 = vpack.c.b16 %v2715, %v2705
        %v3446 = vpack.c.b16 %v2716, %v2706
        %v3447 = vpack.c.b16 %v2717, %v2707
        %v3448 = vpack.c.b16 %v2718, %v2708
        %v3449 = vpack.c.b16 %v2729, %v2719
        %v3450 = vpack.c.b16 %v2730, %v2720
        %v3451 = vpack.c.b16 %v2731, %v2721
        %v3452 = vpack.c.b16 %v2732, %v2722
        %v3453 = vpack.c.b16 %v2733, %v2723
        %v3454 = vpack.c.b16 %v2734, %v2724
        %v3455 = vpack.c.b16 %v2735, %v2725
        %v3456 = vpack.c.b16 %v2736, %v2726
        %v3457 = vpack.c.b16 %v2737, %v2727
        %v3458 = vpack.c.b16 %v2738, %v2728
        %v3459 = vpack.c.b16 %v2749, %v2739
        %v3460 = vpack.c.b16 %v2750, %v2740
        %v3461 = vpack.c.b16 %v2751, %v2741
        %v3462 = vpack.c.b16 %v2752, %v2742
        %v3463 = vpack.c.b16 %v2753, %v2743
        %v3464 = vpack.c.b16 %v2754, %v2744
        %v3465 = vpack.c.b16 %v2755, %v2745
        %v3466 = vpack.c.b16 %v2756, %v2746
        %v3467 = vpack.c.b16 %v2757, %v2747
        %v3468 = vpack.c.b16 %v2758, %v2748
        %v3469 = vpack.c.b16 %v2769, %v2759
        %v3470 = vpack.c.b16 %v2770, %v2760
        %v3471 = vpack.c.b16 %v2771, %v2761
        %v3472 = vpack.c.b16 %v2772, %v2762
        %v3473 = vpack.c.b16 %v2773, %v2763
        %v3474 = vpack.c.b16 %v2774, %v2764
        %v3475 = vpack.c.b16 %v2775, %v2765
        %v3476 = vpack.c.b16 %v2776, %v2766
        %v3477 = vpack.c.b16 %v2777, %v2767
        %v3478 = vpack.c.b16 %v2778, %v2768
        %v3479 = vpack.c.b16 %v2789, %v2779
        %v3480 = vpack.c.b16 %v2790, %v2780
        %v3481 = vpack.c.b16 %v2791, %v2781
        %v3482 = vpack.c.b16 %v2792, %v2782
        %v3483 = vpack.c.b16 %v2793, %v2783
        %v3484 = vpack.c.b16 %v2794, %v2784
        %v3485 = vpack.c.b16 %v2795, %v2785
        %v3486 = vpack.c.b16 %v2796, %v2786
        %v3487 = vpack.c.b16 %v2797, %v2787
        %v3488 = vpack.c.b16 %v2798, %v2788
        %v3489 = vpack.c.b16 %v2809, %v2799
        %v3490 = vpack.c.b16 %v2810, %v2800
        %v3491 = vpack.c.b16 %v2811, %v2801
        %v3492 = vpack.c.b16 %v2812, %v2802
        %v3493 = vpack.c.b16 %v2813, %v2803
        %v3494 = vpack.c.b16 %v2814, %v2804
        %v3495 = vpack.c.b16 %v2815, %v2805
        %v3496 = vpack.c.b16 %v2816, %v2806
        %v3497 = vpack.c.b16 %v2817, %v2807
        %v3498 = vpack.c.b16 %v2818, %v2808
        %v3499 = vpack.c.b16 %v2829, %v2819
        %v3500 = vpack.c.b16 %v2830, %v2820
        %v3501 = vpack.c.b16 %v2831, %v2821
        %v3502 = vpack.c.b16 %v2832, %v2822
        %v3503 = vpack.c.b16 %v2833, %v2823
        %v3504 = vpack.c.b16 %v2834, %v2824
        %v3505 = vpack.c.b16 %v2835, %v2825
        %v3506 = vpack.c.b16 %v2836, %v2826
        %v3507 = vpack.c.b16 %v2837, %v2827
        %v3508 = vpack.c.b16 %v2838, %v2828
        %v3509 = vpack.c.b16 %v2849, %v2839
        %v3510 = vpack.c.b16 %v2850, %v2840
        %v3511 = vpack.c.b16 %v2851, %v2841
        %v3512 = vpack.c.b16 %v2852, %v2842
        %v3513 = vpack.c.b16 %v2853, %v2843
        %v3514 = vpack.c.b16 %v2854, %v2844
        %v3515 = vpack.c.b16 %v2855, %v2845
        %v3516 = vpack.c.b16 %v2856, %v2846
        %v3517 = vpack.c.b16 %v2857, %v2847
        %v3518 = vpack.c.b16 %v2858, %v2848
        %v3519 = vpack.c.b16 %v2869, %v2859
        %v3520 = vpack.c.b16 %v2870, %v2860
        %v3521 = vpack.c.b16 %v2871, %v2861
        %v3522 = vpack.c.b16 %v2872, %v2862
        %v3523 = vpack.c.b16 %v2873, %v2863
        %v3524 = vpack.c.b16 %v2874, %v2864
        %v3525 = vpack.c.b16 %v2875, %v2865
        %v3526 = vpack.c.b16 %v2876, %v2866
        %v3527 = vpack.c.b16 %v2877, %v2867
        %v3528 = vpack.c.b16 %v2878, %v2868
        %v3529 = vpack.c.b16 %v2889, %v2879
        %v3530 = vpack.c.b16 %v2890, %v2880
        %v3531 = vpack.c.b16 %v2891, %v2881
        %v3532 = vpack.c.b16 %v2892, %v2882
        %v3533 = vpack.c.b16 %v2893, %v2883
        %v3534 = vpack.c.b16 %v2894, %v2884
        %v3535 = vpack.c.b16 %v2895, %v2885
        %v3536 = vpack.c.b16 %v2896, %v2886
        %v3537 = vpack.c.b16 %v2897, %v2887
        %v3538 = vpack.c.b16 %v2898, %v2888
        %4179 = vmatpush.bf16.msra.mxu0 %v2969
        %4180 = vmatpush.bf16.msra.mxu0 %v2959
        %4181 = vmatpush.bf16.msra.mxu0 %v2949
        %4182 = vmatpush.bf16.msra.mxu0 %v2939
        %4183 = vmatpush.bf16.msra.mxu0 %v2929
        %4184 = vmatpush.bf16.msra.mxu0 %v2919
        %4185 = vmatpush.bf16.msra.mxu0 %v2909
        %4186 = vmatpush.bf16.msra.mxu0 %v2899
        %4187 = vmatmul.bf16.gmra.mxu0 %v947
        %v4188 = vpop.f32.mrf.mxu0
        %v4189 = vadd.f32 0.0, %v4188
        %v4190 = vpop.f32.mrf.mxu0
        %v4191 = vadd.f32 0.0, %v4190
        %4192 = vmatmul.bf16.gmra.mxu0 %v955
        %v4193 = vpop.f32.mrf.mxu0
        %v4194 = vadd.f32 0.0, %v4193
        %v4195 = vpop.f32.mrf.mxu0
        %v4196 = vadd.f32 0.0, %v4195
        %4197 = vdwg.mxu0
        %4198 = vmatpush.bf16.msra.mxu0 %v3049
        %4199 = vmatpush.bf16.msra.mxu0 %v3039
        %4200 = vmatpush.bf16.msra.mxu0 %v3029
        %4201 = vmatpush.bf16.msra.mxu0 %v3019
        %4202 = vmatpush.bf16.msra.mxu0 %v3009
        %4203 = vmatpush.bf16.msra.mxu0 %v2999
        %4204 = vmatpush.bf16.msra.mxu0 %v2989
        %4205 = vmatpush.bf16.msra.mxu0 %v2979
        %4206 = vmatmul.bf16.gmra.mxu0 %v948
        %v4207 = vpop.f32.mrf.mxu0
        %v4208 = vadd.f32 %v4189, %v4207
        %v4209 = vpop.f32.mrf.mxu0
        %v4210 = vadd.f32 %v4191, %v4209
        %4211 = vmatmul.bf16.gmra.mxu0 %v956
        %v4212 = vpop.f32.mrf.mxu0
        %v4213 = vadd.f32 %v4194, %v4212
        %v4214 = vpop.f32.mrf.mxu0
        %v4215 = vadd.f32 %v4196, %v4214
        %4216 = vdwg.mxu0
        %4217 = vmatpush.bf16.msra.mxu0 %v3129
        %4218 = vmatpush.bf16.msra.mxu0 %v3119
        %4219 = vmatpush.bf16.msra.mxu0 %v3109
        %4220 = vmatpush.bf16.msra.mxu0 %v3099
        %4221 = vmatpush.bf16.msra.mxu0 %v3089
        %4222 = vmatpush.bf16.msra.mxu0 %v3079
        %4223 = vmatpush.bf16.msra.mxu0 %v3069
        %4224 = vmatpush.bf16.msra.mxu0 %v3059
        %4225 = vmatmul.bf16.gmra.mxu0 %v949
        %v4226 = vpop.f32.mrf.mxu0
        %v4227 = vadd.f32 %v4208, %v4226
        %v4228 = vpop.f32.mrf.mxu0
        %v4229 = vadd.f32 %v4210, %v4228
        %4230 = vmatmul.bf16.gmra.mxu0 %v957
        %v4231 = vpop.f32.mrf.mxu0
        %v4232 = vadd.f32 %v4213, %v4231
        %v4233 = vpop.f32.mrf.mxu0
        %v4234 = vadd.f32 %v4215, %v4233
        %4235 = vdwg.mxu0
        %4236 = vmatpush.bf16.msra.mxu0 %v3209
        %4237 = vmatpush.bf16.msra.mxu0 %v3199
        %4238 = vmatpush.bf16.msra.mxu0 %v3189
        %4239 = vmatpush.bf16.msra.mxu0 %v3179
        %4240 = vmatpush.bf16.msra.mxu0 %v3169
        %4241 = vmatpush.bf16.msra.mxu0 %v3159
        %4242 = vmatpush.bf16.msra.mxu0 %v3149
        %4243 = vmatpush.bf16.msra.mxu0 %v3139
        %4244 = vmatmul.bf16.gmra.mxu0 %v950
        %v4245 = vpop.f32.mrf.mxu0
        %v4246 = vadd.f32 %v4227, %v4245
        %v4247 = vpop.f32.mrf.mxu0
        %v4248 = vadd.f32 %v4229, %v4247
        %4249 = vmatmul.bf16.gmra.mxu0 %v958
        %v4250 = vpop.f32.mrf.mxu0
        %v4251 = vadd.f32 %v4232, %v4250
        %v4252 = vpop.f32.mrf.mxu0
        %v4253 = vadd.f32 %v4234, %v4252
        %4254 = vdwg.mxu0
        %4255 = vmatpush.bf16.msra.mxu0 %v3289
        %4256 = vmatpush.bf16.msra.mxu0 %v3279
        %4257 = vmatpush.bf16.msra.mxu0 %v3269
        %4258 = vmatpush.bf16.msra.mxu0 %v3259
        %4259 = vmatpush.bf16.msra.mxu0 %v3249
        %4260 = vmatpush.bf16.msra.mxu0 %v3239
        %4261 = vmatpush.bf16.msra.mxu0 %v3229
        %4262 = vmatpush.bf16.msra.mxu0 %v3219
        %4263 = vmatmul.bf16.gmra.mxu0 %v951
        %v4264 = vpop.f32.mrf.mxu0
        %v4265 = vadd.f32 %v4246, %v4264
        %v4266 = vpop.f32.mrf.mxu0
        %v4267 = vadd.f32 %v4248, %v4266
        %4268 = vmatmul.bf16.gmra.mxu0 %v959
        %v4269 = vpop.f32.mrf.mxu0
        %v4270 = vadd.f32 %v4251, %v4269
        %v4271 = vpop.f32.mrf.mxu0
        %v4272 = vadd.f32 %v4253, %v4271
        %4273 = vdwg.mxu0
        %4274 = vmatpush.bf16.msra.mxu0 %v3369
        %4275 = vmatpush.bf16.msra.mxu0 %v3359
        %4276 = vmatpush.bf16.msra.mxu0 %v3349
        %4277 = vmatpush.bf16.msra.mxu0 %v3339
        %4278 = vmatpush.bf16.msra.mxu0 %v3329
        %4279 = vmatpush.bf16.msra.mxu0 %v3319
        %4280 = vmatpush.bf16.msra.mxu0 %v3309
        %4281 = vmatpush.bf16.msra.mxu0 %v3299
        %4282 = vmatmul.bf16.gmra.mxu0 %v952
        %v4283 = vpop.f32.mrf.mxu0
        %v4284 = vadd.f32 %v4265, %v4283
        %v4285 = vpop.f32.mrf.mxu0
        %v4286 = vadd.f32 %v4267, %v4285
        %4287 = vmatmul.bf16.gmra.mxu0 %v960
        %v4288 = vpop.f32.mrf.mxu0
        %v4289 = vadd.f32 %v4270, %v4288
        %v4290 = vpop.f32.mrf.mxu0
        %v4291 = vadd.f32 %v4272, %v4290
        %4292 = vdwg.mxu0
        %4293 = vmatpush.bf16.msra.mxu0 %v3449
        %4294 = vmatpush.bf16.msra.mxu0 %v3439
        %4295 = vmatpush.bf16.msra.mxu0 %v3429
        %4296 = vmatpush.bf16.msra.mxu0 %v3419
        %4297 = vmatpush.bf16.msra.mxu0 %v3409
        %4298 = vmatpush.bf16.msra.mxu0 %v3399
        %4299 = vmatpush.bf16.msra.mxu0 %v3389
        %4300 = vmatpush.bf16.msra.mxu0 %v3379
        %4301 = vmatmul.bf16.gmra.mxu0 %v953
        %v4302 = vpop.f32.mrf.mxu0
        %v4303 = vadd.f32 %v4284, %v4302
        %v4304 = vpop.f32.mrf.mxu0
        %v4305 = vadd.f32 %v4286, %v4304
        %4306 = vmatmul.bf16.gmra.mxu0 %v961
        %v4307 = vpop.f32.mrf.mxu0
        %v4308 = vadd.f32 %v4289, %v4307
        %v4309 = vpop.f32.mrf.mxu0
        %v4310 = vadd.f32 %v4291, %v4309
        %4311 = vdwg.mxu0
        %4312 = vmatpush.bf16.msra.mxu0 %v3529
        %4313 = vmatpush.bf16.msra.mxu0 %v3519
        %4314 = vmatpush.bf16.msra.mxu0 %v3509
        %4315 = vmatpush.bf16.msra.mxu0 %v3499
        %4316 = vmatpush.bf16.msra.mxu0 %v3489
        %4317 = vmatpush.bf16.msra.mxu0 %v3479
        %4318 = vmatpush.bf16.msra.mxu0 %v3469
        %4319 = vmatpush.bf16.msra.mxu0 %v3459
        %4320 = vmatmul.bf16.gmra.mxu0 %v954
        %v4321 = vpop.f32.mrf.mxu0
        %v4322 = vadd.f32 %v4303, %v4321
        %v4323 = vpop.f32.mrf.mxu0
        %v4324 = vadd.f32 %v4305, %v4323
        %4325 = vmatmul.bf16.gmra.mxu0 %v962
        %v4326 = vpop.f32.mrf.mxu0
        %v4327 = vadd.f32 %v4308, %v4326
        %v4328 = vpop.f32.mrf.mxu0
        %v4329 = vadd.f32 %v4310, %v4328
        %4330 = vdwg.mxu0
        %4331 = vmatpush.bf16.msra.mxu0 %v2970
        %4332 = vmatpush.bf16.msra.mxu0 %v2960
        %4333 = vmatpush.bf16.msra.mxu0 %v2950
        %4334 = vmatpush.bf16.msra.mxu0 %v2940
        %4335 = vmatpush.bf16.msra.mxu0 %v2930
        %4336 = vmatpush.bf16.msra.mxu0 %v2920
        %4337 = vmatpush.bf16.msra.mxu0 %v2910
        %4338 = vmatpush.bf16.msra.mxu0 %v2900
        %4339 = vmatmul.bf16.gmra.mxu0 %v947
        %v4340 = vpop.f32.mrf.mxu0
        %v4341 = vadd.f32 0.0, %v4340
        %v4342 = vpop.f32.mrf.mxu0
        %v4343 = vadd.f32 0.0, %v4342
        %4344 = vmatmul.bf16.gmra.mxu0 %v955
        %v4345 = vpop.f32.mrf.mxu0
        %v4346 = vadd.f32 0.0, %v4345
        %v4347 = vpop.f32.mrf.mxu0
        %v4348 = vadd.f32 0.0, %v4347
        %4349 = vdwg.mxu0
        %4350 = vmatpush.bf16.msra.mxu0 %v3050
        %4351 = vmatpush.bf16.msra.mxu0 %v3040
        %4352 = vmatpush.bf16.msra.mxu0 %v3030
        %4353 = vmatpush.bf16.msra.mxu0 %v3020
        %4354 = vmatpush.bf16.msra.mxu0 %v3010
        %4355 = vmatpush.bf16.msra.mxu0 %v3000
        %4356 = vmatpush.bf16.msra.mxu0 %v2990
        %4357 = vmatpush.bf16.msra.mxu0 %v2980
        %4358 = vmatmul.bf16.gmra.mxu0 %v948
        %v4359 = vpop.f32.mrf.mxu0
        %v4360 = vadd.f32 %v4341, %v4359
        %v4361 = vpop.f32.mrf.mxu0
        %v4362 = vadd.f32 %v4343, %v4361
        %4363 = vmatmul.bf16.gmra.mxu0 %v956
        %v4364 = vpop.f32.mrf.mxu0
        %v4365 = vadd.f32 %v4346, %v4364
        %v4366 = vpop.f32.mrf.mxu0
        %v4367 = vadd.f32 %v4348, %v4366
        %4368 = vdwg.mxu0
        %4369 = vmatpush.bf16.msra.mxu0 %v3130
        %4370 = vmatpush.bf16.msra.mxu0 %v3120
        %4371 = vmatpush.bf16.msra.mxu0 %v3110
        %4372 = vmatpush.bf16.msra.mxu0 %v3100
        %4373 = vmatpush.bf16.msra.mxu0 %v3090
        %4374 = vmatpush.bf16.msra.mxu0 %v3080
        %4375 = vmatpush.bf16.msra.mxu0 %v3070
        %4376 = vmatpush.bf16.msra.mxu0 %v3060
        %4377 = vmatmul.bf16.gmra.mxu0 %v949
        %v4378 = vpop.f32.mrf.mxu0
        %v4379 = vadd.f32 %v4360, %v4378
        %v4380 = vpop.f32.mrf.mxu0
        %v4381 = vadd.f32 %v4362, %v4380
        %4382 = vmatmul.bf16.gmra.mxu0 %v957
        %v4383 = vpop.f32.mrf.mxu0
        %v4384 = vadd.f32 %v4365, %v4383
        %v4385 = vpop.f32.mrf.mxu0
        %v4386 = vadd.f32 %v4367, %v4385
        %4387 = vdwg.mxu0
        %4388 = vmatpush.bf16.msra.mxu0 %v3210
        %4389 = vmatpush.bf16.msra.mxu0 %v3200
        %4390 = vmatpush.bf16.msra.mxu0 %v3190
        %4391 = vmatpush.bf16.msra.mxu0 %v3180
        %4392 = vmatpush.bf16.msra.mxu0 %v3170
        %4393 = vmatpush.bf16.msra.mxu0 %v3160
        %4394 = vmatpush.bf16.msra.mxu0 %v3150
        %4395 = vmatpush.bf16.msra.mxu0 %v3140
        %4396 = vmatmul.bf16.gmra.mxu0 %v950
        %v4397 = vpop.f32.mrf.mxu0
        %v4398 = vadd.f32 %v4379, %v4397
        %v4399 = vpop.f32.mrf.mxu0
        %v4400 = vadd.f32 %v4381, %v4399
        %4401 = vmatmul.bf16.gmra.mxu0 %v958
        %v4402 = vpop.f32.mrf.mxu0
        %v4403 = vadd.f32 %v4384, %v4402
        %v4404 = vpop.f32.mrf.mxu0
        %v4405 = vadd.f32 %v4386, %v4404
        %4406 = vdwg.mxu0
        %4407 = vmatpush.bf16.msra.mxu0 %v3290
        %4408 = vmatpush.bf16.msra.mxu0 %v3280
        %4409 = vmatpush.bf16.msra.mxu0 %v3270
        %4410 = vmatpush.bf16.msra.mxu0 %v3260
        %4411 = vmatpush.bf16.msra.mxu0 %v3250
        %4412 = vmatpush.bf16.msra.mxu0 %v3240
        %4413 = vmatpush.bf16.msra.mxu0 %v3230
        %4414 = vmatpush.bf16.msra.mxu0 %v3220
        %4415 = vmatmul.bf16.gmra.mxu0 %v951
        %v4416 = vpop.f32.mrf.mxu0
        %v4417 = vadd.f32 %v4398, %v4416
        %v4418 = vpop.f32.mrf.mxu0
        %v4419 = vadd.f32 %v4400, %v4418
        %4420 = vmatmul.bf16.gmra.mxu0 %v959
        %v4421 = vpop.f32.mrf.mxu0
        %v4422 = vadd.f32 %v4403, %v4421
        %v4423 = vpop.f32.mrf.mxu0
        %v4424 = vadd.f32 %v4405, %v4423
        %4425 = vdwg.mxu0
        %4426 = vmatpush.bf16.msra.mxu0 %v3370
        %4427 = vmatpush.bf16.msra.mxu0 %v3360
        %4428 = vmatpush.bf16.msra.mxu0 %v3350
        %4429 = vmatpush.bf16.msra.mxu0 %v3340
        %4430 = vmatpush.bf16.msra.mxu0 %v3330
        %4431 = vmatpush.bf16.msra.mxu0 %v3320
        %4432 = vmatpush.bf16.msra.mxu0 %v3310
        %4433 = vmatpush.bf16.msra.mxu0 %v3300
        %4434 = vmatmul.bf16.gmra.mxu0 %v952
        %v4435 = vpop.f32.mrf.mxu0
        %v4436 = vadd.f32 %v4417, %v4435
        %v4437 = vpop.f32.mrf.mxu0
        %v4438 = vadd.f32 %v4419, %v4437
        %4439 = vmatmul.bf16.gmra.mxu0 %v960
        %v4440 = vpop.f32.mrf.mxu0
        %v4441 = vadd.f32 %v4422, %v4440
        %v4442 = vpop.f32.mrf.mxu0
        %v4443 = vadd.f32 %v4424, %v4442
        %4444 = vdwg.mxu0
        %4445 = vmatpush.bf16.msra.mxu0 %v3450
        %4446 = vmatpush.bf16.msra.mxu0 %v3440
        %4447 = vmatpush.bf16.msra.mxu0 %v3430
        %4448 = vmatpush.bf16.msra.mxu0 %v3420
        %4449 = vmatpush.bf16.msra.mxu0 %v3410
        %4450 = vmatpush.bf16.msra.mxu0 %v3400
        %4451 = vmatpush.bf16.msra.mxu0 %v3390
        %4452 = vmatpush.bf16.msra.mxu0 %v3380
        %4453 = vmatmul.bf16.gmra.mxu0 %v953
        %v4454 = vpop.f32.mrf.mxu0
        %v4455 = vadd.f32 %v4436, %v4454
        %v4456 = vpop.f32.mrf.mxu0
        %v4457 = vadd.f32 %v4438, %v4456
        %4458 = vmatmul.bf16.gmra.mxu0 %v961
        %v4459 = vpop.f32.mrf.mxu0
        %v4460 = vadd.f32 %v4441, %v4459
        %v4461 = vpop.f32.mrf.mxu0
        %v4462 = vadd.f32 %v4443, %v4461
        %4463 = vdwg.mxu0
        %4464 = vmatpush.bf16.msra.mxu0 %v3530
        %4465 = vmatpush.bf16.msra.mxu0 %v3520
        %4466 = vmatpush.bf16.msra.mxu0 %v3510
        %4467 = vmatpush.bf16.msra.mxu0 %v3500
        %4468 = vmatpush.bf16.msra.mxu0 %v3490
        %4469 = vmatpush.bf16.msra.mxu0 %v3480
        %4470 = vmatpush.bf16.msra.mxu0 %v3470
        %4471 = vmatpush.bf16.msra.mxu0 %v3460
        %4472 = vmatmul.bf16.gmra.mxu0 %v954
        %v4473 = vpop.f32.mrf.mxu0
        %v4474 = vadd.f32 %v4455, %v4473
        %v4475 = vpop.f32.mrf.mxu0
        %v4476 = vadd.f32 %v4457, %v4475
        %4477 = vmatmul.bf16.gmra.mxu0 %v962
        %v4478 = vpop.f32.mrf.mxu0
        %v4479 = vadd.f32 %v4460, %v4478
        %v4480 = vpop.f32.mrf.mxu0
        %v4481 = vadd.f32 %v4462, %v4480
        %4482 = vdwg.mxu0
        %4483 = vmatpush.bf16.msra.mxu0 %v2971
        %4484 = vmatpush.bf16.msra.mxu0 %v2961
        %4485 = vmatpush.bf16.msra.mxu0 %v2951
        %4486 = vmatpush.bf16.msra.mxu0 %v2941
        %4487 = vmatpush.bf16.msra.mxu0 %v2931
        %4488 = vmatpush.bf16.msra.mxu0 %v2921
        %4489 = vmatpush.bf16.msra.mxu0 %v2911
        %4490 = vmatpush.bf16.msra.mxu0 %v2901
        %4491 = vmatmul.bf16.gmra.mxu0 %v947
        %v4492 = vpop.f32.mrf.mxu0
        %v4493 = vadd.f32 0.0, %v4492
        %v4494 = vpop.f32.mrf.mxu0
        %v4495 = vadd.f32 0.0, %v4494
        %4496 = vmatmul.bf16.gmra.mxu0 %v955
        %v4497 = vpop.f32.mrf.mxu0
        %v4498 = vadd.f32 0.0, %v4497
        %v4499 = vpop.f32.mrf.mxu0
        %v4500 = vadd.f32 0.0, %v4499
        %4501 = vdwg.mxu0
        %4502 = vmatpush.bf16.msra.mxu0 %v3051
        %4503 = vmatpush.bf16.msra.mxu0 %v3041
        %4504 = vmatpush.bf16.msra.mxu0 %v3031
        %4505 = vmatpush.bf16.msra.mxu0 %v3021
        %4506 = vmatpush.bf16.msra.mxu0 %v3011
        %4507 = vmatpush.bf16.msra.mxu0 %v3001
        %4508 = vmatpush.bf16.msra.mxu0 %v2991
        %4509 = vmatpush.bf16.msra.mxu0 %v2981
        %4510 = vmatmul.bf16.gmra.mxu0 %v948
        %v4511 = vpop.f32.mrf.mxu0
        %v4512 = vadd.f32 %v4493, %v4511
        %v4513 = vpop.f32.mrf.mxu0
        %v4514 = vadd.f32 %v4495, %v4513
        %4515 = vmatmul.bf16.gmra.mxu0 %v956
        %v4516 = vpop.f32.mrf.mxu0
        %v4517 = vadd.f32 %v4498, %v4516
        %v4518 = vpop.f32.mrf.mxu0
        %v4519 = vadd.f32 %v4500, %v4518
        %4520 = vdwg.mxu0
        %4521 = vmatpush.bf16.msra.mxu0 %v3131
        %4522 = vmatpush.bf16.msra.mxu0 %v3121
        %4523 = vmatpush.bf16.msra.mxu0 %v3111
        %4524 = vmatpush.bf16.msra.mxu0 %v3101
        %4525 = vmatpush.bf16.msra.mxu0 %v3091
        %4526 = vmatpush.bf16.msra.mxu0 %v3081
        %4527 = vmatpush.bf16.msra.mxu0 %v3071
        %4528 = vmatpush.bf16.msra.mxu0 %v3061
        %4529 = vmatmul.bf16.gmra.mxu0 %v949
        %v4530 = vpop.f32.mrf.mxu0
        %v4531 = vadd.f32 %v4512, %v4530
        %v4532 = vpop.f32.mrf.mxu0
        %v4533 = vadd.f32 %v4514, %v4532
        %4534 = vmatmul.bf16.gmra.mxu0 %v957
        %v4535 = vpop.f32.mrf.mxu0
        %v4536 = vadd.f32 %v4517, %v4535
        %v4537 = vpop.f32.mrf.mxu0
        %v4538 = vadd.f32 %v4519, %v4537
        %4539 = vdwg.mxu0
        %4540 = vmatpush.bf16.msra.mxu0 %v3211
        %4541 = vmatpush.bf16.msra.mxu0 %v3201
        %4542 = vmatpush.bf16.msra.mxu0 %v3191
        %4543 = vmatpush.bf16.msra.mxu0 %v3181
        %4544 = vmatpush.bf16.msra.mxu0 %v3171
        %4545 = vmatpush.bf16.msra.mxu0 %v3161
        %4546 = vmatpush.bf16.msra.mxu0 %v3151
        %4547 = vmatpush.bf16.msra.mxu0 %v3141
        %4548 = vmatmul.bf16.gmra.mxu0 %v950
        %v4549 = vpop.f32.mrf.mxu0
        %v4550 = vadd.f32 %v4531, %v4549
        %v4551 = vpop.f32.mrf.mxu0
        %v4552 = vadd.f32 %v4533, %v4551
        %4553 = vmatmul.bf16.gmra.mxu0 %v958
        %v4554 = vpop.f32.mrf.mxu0
        %v4555 = vadd.f32 %v4536, %v4554
        %v4556 = vpop.f32.mrf.mxu0
        %v4557 = vadd.f32 %v4538, %v4556
        %4558 = vdwg.mxu0
        %4559 = vmatpush.bf16.msra.mxu0 %v3291
        %4560 = vmatpush.bf16.msra.mxu0 %v3281
        %4561 = vmatpush.bf16.msra.mxu0 %v3271
        %4562 = vmatpush.bf16.msra.mxu0 %v3261
        %4563 = vmatpush.bf16.msra.mxu0 %v3251
        %4564 = vmatpush.bf16.msra.mxu0 %v3241
        %4565 = vmatpush.bf16.msra.mxu0 %v3231
        %4566 = vmatpush.bf16.msra.mxu0 %v3221
        %4567 = vmatmul.bf16.gmra.mxu0 %v951
        %v4568 = vpop.f32.mrf.mxu0
        %v4569 = vadd.f32 %v4550, %v4568
        %v4570 = vpop.f32.mrf.mxu0
        %v4571 = vadd.f32 %v4552, %v4570
        %4572 = vmatmul.bf16.gmra.mxu0 %v959
        %v4573 = vpop.f32.mrf.mxu0
        %v4574 = vadd.f32 %v4555, %v4573
        %v4575 = vpop.f32.mrf.mxu0
        %v4576 = vadd.f32 %v4557, %v4575
        %4577 = vdwg.mxu0
        %4578 = vmatpush.bf16.msra.mxu0 %v3371
        %4579 = vmatpush.bf16.msra.mxu0 %v3361
        %4580 = vmatpush.bf16.msra.mxu0 %v3351
        %4581 = vmatpush.bf16.msra.mxu0 %v3341
        %4582 = vmatpush.bf16.msra.mxu0 %v3331
        %4583 = vmatpush.bf16.msra.mxu0 %v3321
        %4584 = vmatpush.bf16.msra.mxu0 %v3311
        %4585 = vmatpush.bf16.msra.mxu0 %v3301
        %4586 = vmatmul.bf16.gmra.mxu0 %v952
        %v4587 = vpop.f32.mrf.mxu0
        %v4588 = vadd.f32 %v4569, %v4587
        %v4589 = vpop.f32.mrf.mxu0
        %v4590 = vadd.f32 %v4571, %v4589
        %4591 = vmatmul.bf16.gmra.mxu0 %v960
        %v4592 = vpop.f32.mrf.mxu0
        %v4593 = vadd.f32 %v4574, %v4592
        %v4594 = vpop.f32.mrf.mxu0
        %v4595 = vadd.f32 %v4576, %v4594
        %4596 = vdwg.mxu0
        %4597 = vmatpush.bf16.msra.mxu0 %v3451
        %4598 = vmatpush.bf16.msra.mxu0 %v3441
        %4599 = vmatpush.bf16.msra.mxu0 %v3431
        %4600 = vmatpush.bf16.msra.mxu0 %v3421
        %4601 = vmatpush.bf16.msra.mxu0 %v3411
        %4602 = vmatpush.bf16.msra.mxu0 %v3401
        %4603 = vmatpush.bf16.msra.mxu0 %v3391
        %4604 = vmatpush.bf16.msra.mxu0 %v3381
        %4605 = vmatmul.bf16.gmra.mxu0 %v953
        %v4606 = vpop.f32.mrf.mxu0
        %v4607 = vadd.f32 %v4588, %v4606
        %v4608 = vpop.f32.mrf.mxu0
        %v4609 = vadd.f32 %v4590, %v4608
        %4610 = vmatmul.bf16.gmra.mxu0 %v961
        %v4611 = vpop.f32.mrf.mxu0
        %v4612 = vadd.f32 %v4593, %v4611
        %v4613 = vpop.f32.mrf.mxu0
        %v4614 = vadd.f32 %v4595, %v4613
        %4615 = vdwg.mxu0
        %4616 = vmatpush.bf16.msra.mxu0 %v3531
        %4617 = vmatpush.bf16.msra.mxu0 %v3521
        %4618 = vmatpush.bf16.msra.mxu0 %v3511
        %4619 = vmatpush.bf16.msra.mxu0 %v3501
        %4620 = vmatpush.bf16.msra.mxu0 %v3491
        %4621 = vmatpush.bf16.msra.mxu0 %v3481
        %4622 = vmatpush.bf16.msra.mxu0 %v3471
        %4623 = vmatpush.bf16.msra.mxu0 %v3461
        %4624 = vmatmul.bf16.gmra.mxu0 %v954
        %v4625 = vpop.f32.mrf.mxu0
        %v4626 = vadd.f32 %v4607, %v4625
        %v4627 = vpop.f32.mrf.mxu0
        %v4628 = vadd.f32 %v4609, %v4627
        %4629 = vmatmul.bf16.gmra.mxu0 %v962
        %v4630 = vpop.f32.mrf.mxu0
        %v4631 = vadd.f32 %v4612, %v4630
        %v4632 = vpop.f32.mrf.mxu0
        %v4633 = vadd.f32 %v4614, %v4632
        %4634 = vdwg.mxu0
        %4635 = vmatpush.bf16.msra.mxu0 %v2972
        %4636 = vmatpush.bf16.msra.mxu0 %v2962
        %4637 = vmatpush.bf16.msra.mxu0 %v2952
        %4638 = vmatpush.bf16.msra.mxu0 %v2942
        %4639 = vmatpush.bf16.msra.mxu0 %v2932
        %4640 = vmatpush.bf16.msra.mxu0 %v2922
        %4641 = vmatpush.bf16.msra.mxu0 %v2912
        %4642 = vmatpush.bf16.msra.mxu0 %v2902
        %4643 = vmatmul.bf16.gmra.mxu0 %v947
        %v4644 = vpop.f32.mrf.mxu0
        %v4645 = vadd.f32 0.0, %v4644
        %v4646 = vpop.f32.mrf.mxu0
        %v4647 = vadd.f32 0.0, %v4646
        %4648 = vmatmul.bf16.gmra.mxu0 %v955
        %v4649 = vpop.f32.mrf.mxu0
        %v4650 = vadd.f32 0.0, %v4649
        %v4651 = vpop.f32.mrf.mxu0
        %v4652 = vadd.f32 0.0, %v4651
        %4653 = vdwg.mxu0
        %4654 = vmatpush.bf16.msra.mxu0 %v3052
        %4655 = vmatpush.bf16.msra.mxu0 %v3042
        %4656 = vmatpush.bf16.msra.mxu0 %v3032
        %4657 = vmatpush.bf16.msra.mxu0 %v3022
        %4658 = vmatpush.bf16.msra.mxu0 %v3012
        %4659 = vmatpush.bf16.msra.mxu0 %v3002
        %4660 = vmatpush.bf16.msra.mxu0 %v2992
        %4661 = vmatpush.bf16.msra.mxu0 %v2982
        %4662 = vmatmul.bf16.gmra.mxu0 %v948
        %v4663 = vpop.f32.mrf.mxu0
        %v4664 = vadd.f32 %v4645, %v4663
        %v4665 = vpop.f32.mrf.mxu0
        %v4666 = vadd.f32 %v4647, %v4665
        %4667 = vmatmul.bf16.gmra.mxu0 %v956
        %v4668 = vpop.f32.mrf.mxu0
        %v4669 = vadd.f32 %v4650, %v4668
        %v4670 = vpop.f32.mrf.mxu0
        %v4671 = vadd.f32 %v4652, %v4670
        %4672 = vdwg.mxu0
        %4673 = vmatpush.bf16.msra.mxu0 %v3132
        %4674 = vmatpush.bf16.msra.mxu0 %v3122
        %4675 = vmatpush.bf16.msra.mxu0 %v3112
        %4676 = vmatpush.bf16.msra.mxu0 %v3102
        %4677 = vmatpush.bf16.msra.mxu0 %v3092
        %4678 = vmatpush.bf16.msra.mxu0 %v3082
        %4679 = vmatpush.bf16.msra.mxu0 %v3072
        %4680 = vmatpush.bf16.msra.mxu0 %v3062
        %4681 = vmatmul.bf16.gmra.mxu0 %v949
        %v4682 = vpop.f32.mrf.mxu0
        %v4683 = vadd.f32 %v4664, %v4682
        %v4684 = vpop.f32.mrf.mxu0
        %v4685 = vadd.f32 %v4666, %v4684
        %4686 = vmatmul.bf16.gmra.mxu0 %v957
        %v4687 = vpop.f32.mrf.mxu0
        %v4688 = vadd.f32 %v4669, %v4687
        %v4689 = vpop.f32.mrf.mxu0
        %v4690 = vadd.f32 %v4671, %v4689
        %4691 = vdwg.mxu0
        %4692 = vmatpush.bf16.msra.mxu0 %v3212
        %4693 = vmatpush.bf16.msra.mxu0 %v3202
        %4694 = vmatpush.bf16.msra.mxu0 %v3192
        %4695 = vmatpush.bf16.msra.mxu0 %v3182
        %4696 = vmatpush.bf16.msra.mxu0 %v3172
        %4697 = vmatpush.bf16.msra.mxu0 %v3162
        %4698 = vmatpush.bf16.msra.mxu0 %v3152
        %4699 = vmatpush.bf16.msra.mxu0 %v3142
        %4700 = vmatmul.bf16.gmra.mxu0 %v950
        %v4701 = vpop.f32.mrf.mxu0
        %v4702 = vadd.f32 %v4683, %v4701
        %v4703 = vpop.f32.mrf.mxu0
        %v4704 = vadd.f32 %v4685, %v4703
        %4705 = vmatmul.bf16.gmra.mxu0 %v958
        %v4706 = vpop.f32.mrf.mxu0
        %v4707 = vadd.f32 %v4688, %v4706
        %v4708 = vpop.f32.mrf.mxu0
        %v4709 = vadd.f32 %v4690, %v4708
        %4710 = vdwg.mxu0
        %4711 = vmatpush.bf16.msra.mxu0 %v3292
        %4712 = vmatpush.bf16.msra.mxu0 %v3282
        %4713 = vmatpush.bf16.msra.mxu0 %v3272
        %4714 = vmatpush.bf16.msra.mxu0 %v3262
        %4715 = vmatpush.bf16.msra.mxu0 %v3252
        %4716 = vmatpush.bf16.msra.mxu0 %v3242
        %4717 = vmatpush.bf16.msra.mxu0 %v3232
        %4718 = vmatpush.bf16.msra.mxu0 %v3222
        %4719 = vmatmul.bf16.gmra.mxu0 %v951
        %v4720 = vpop.f32.mrf.mxu0
        %v4721 = vadd.f32 %v4702, %v4720
        %v4722 = vpop.f32.mrf.mxu0
        %v4723 = vadd.f32 %v4704, %v4722
        %4724 = vmatmul.bf16.gmra.mxu0 %v959
        %v4725 = vpop.f32.mrf.mxu0
        %v4726 = vadd.f32 %v4707, %v4725
        %v4727 = vpop.f32.mrf.mxu0
        %v4728 = vadd.f32 %v4709, %v4727
        %4729 = vdwg.mxu0
        %4730 = vmatpush.bf16.msra.mxu0 %v3372
        %4731 = vmatpush.bf16.msra.mxu0 %v3362
        %4732 = vmatpush.bf16.msra.mxu0 %v3352
        %4733 = vmatpush.bf16.msra.mxu0 %v3342
        %4734 = vmatpush.bf16.msra.mxu0 %v3332
        %4735 = vmatpush.bf16.msra.mxu0 %v3322
        %4736 = vmatpush.bf16.msra.mxu0 %v3312
        %4737 = vmatpush.bf16.msra.mxu0 %v3302
        %4738 = vmatmul.bf16.gmra.mxu0 %v952
        %v4739 = vpop.f32.mrf.mxu0
        %v4740 = vadd.f32 %v4721, %v4739
        %v4741 = vpop.f32.mrf.mxu0
        %v4742 = vadd.f32 %v4723, %v4741
        %4743 = vmatmul.bf16.gmra.mxu0 %v960
        %v4744 = vpop.f32.mrf.mxu0
        %v4745 = vadd.f32 %v4726, %v4744
        %v4746 = vpop.f32.mrf.mxu0
        %v4747 = vadd.f32 %v4728, %v4746
        %4748 = vdwg.mxu0
        %4749 = vmatpush.bf16.msra.mxu0 %v3452
        %4750 = vmatpush.bf16.msra.mxu0 %v3442
        %4751 = vmatpush.bf16.msra.mxu0 %v3432
        %4752 = vmatpush.bf16.msra.mxu0 %v3422
        %4753 = vmatpush.bf16.msra.mxu0 %v3412
        %4754 = vmatpush.bf16.msra.mxu0 %v3402
        %4755 = vmatpush.bf16.msra.mxu0 %v3392
        %4756 = vmatpush.bf16.msra.mxu0 %v3382
        %4757 = vmatmul.bf16.gmra.mxu0 %v953
        %v4758 = vpop.f32.mrf.mxu0
        %v4759 = vadd.f32 %v4740, %v4758
        %v4760 = vpop.f32.mrf.mxu0
        %v4761 = vadd.f32 %v4742, %v4760
        %4762 = vmatmul.bf16.gmra.mxu0 %v961
        %v4763 = vpop.f32.mrf.mxu0
        %v4764 = vadd.f32 %v4745, %v4763
        %v4765 = vpop.f32.mrf.mxu0
        %v4766 = vadd.f32 %v4747, %v4765
        %4767 = vdwg.mxu0
        %4768 = vmatpush.bf16.msra.mxu0 %v3532
        %4769 = vmatpush.bf16.msra.mxu0 %v3522
        %4770 = vmatpush.bf16.msra.mxu0 %v3512
        %4771 = vmatpush.bf16.msra.mxu0 %v3502
        %4772 = vmatpush.bf16.msra.mxu0 %v3492
        %4773 = vmatpush.bf16.msra.mxu0 %v3482
        %4774 = vmatpush.bf16.msra.mxu0 %v3472
        %4775 = vmatpush.bf16.msra.mxu0 %v3462
        %4776 = vmatmul.bf16.gmra.mxu0 %v954
        %v4777 = vpop.f32.mrf.mxu0
        %v4778 = vadd.f32 %v4759, %v4777
        %v4779 = vpop.f32.mrf.mxu0
        %v4780 = vadd.f32 %v4761, %v4779
        %4781 = vmatmul.bf16.gmra.mxu0 %v962
        %v4782 = vpop.f32.mrf.mxu0
        %v4783 = vadd.f32 %v4764, %v4782
        %v4784 = vpop.f32.mrf.mxu0
        %v4785 = vadd.f32 %v4766, %v4784
        %4786 = vdwg.mxu0
        %4787 = vmatpush.bf16.msra.mxu0 %v2973
        %4788 = vmatpush.bf16.msra.mxu0 %v2963
        %4789 = vmatpush.bf16.msra.mxu0 %v2953
        %4790 = vmatpush.bf16.msra.mxu0 %v2943
        %4791 = vmatpush.bf16.msra.mxu0 %v2933
        %4792 = vmatpush.bf16.msra.mxu0 %v2923
        %4793 = vmatpush.bf16.msra.mxu0 %v2913
        %4794 = vmatpush.bf16.msra.mxu0 %v2903
        %4795 = vmatmul.bf16.gmra.mxu0 %v947
        %v4796 = vpop.f32.mrf.mxu0
        %v4797 = vadd.f32 0.0, %v4796
        %v4798 = vpop.f32.mrf.mxu0
        %v4799 = vadd.f32 0.0, %v4798
        %4800 = vmatmul.bf16.gmra.mxu0 %v955
        %v4801 = vpop.f32.mrf.mxu0
        %v4802 = vadd.f32 0.0, %v4801
        %v4803 = vpop.f32.mrf.mxu0
        %v4804 = vadd.f32 0.0, %v4803
        %4805 = vdwg.mxu0
        %4806 = vmatpush.bf16.msra.mxu0 %v3053
        %4807 = vmatpush.bf16.msra.mxu0 %v3043
        %4808 = vmatpush.bf16.msra.mxu0 %v3033
        %4809 = vmatpush.bf16.msra.mxu0 %v3023
        %4810 = vmatpush.bf16.msra.mxu0 %v3013
        %4811 = vmatpush.bf16.msra.mxu0 %v3003
        %4812 = vmatpush.bf16.msra.mxu0 %v2993
        %4813 = vmatpush.bf16.msra.mxu0 %v2983
        %4814 = vmatmul.bf16.gmra.mxu0 %v948
        %v4815 = vpop.f32.mrf.mxu0
        %v4816 = vadd.f32 %v4797, %v4815
        %v4817 = vpop.f32.mrf.mxu0
        %v4818 = vadd.f32 %v4799, %v4817
        %4819 = vmatmul.bf16.gmra.mxu0 %v956
        %v4820 = vpop.f32.mrf.mxu0
        %v4821 = vadd.f32 %v4802, %v4820
        %v4822 = vpop.f32.mrf.mxu0
        %v4823 = vadd.f32 %v4804, %v4822
        %4824 = vdwg.mxu0
        %4825 = vmatpush.bf16.msra.mxu0 %v3133
        %4826 = vmatpush.bf16.msra.mxu0 %v3123
        %4827 = vmatpush.bf16.msra.mxu0 %v3113
        %4828 = vmatpush.bf16.msra.mxu0 %v3103
        %4829 = vmatpush.bf16.msra.mxu0 %v3093
        %4830 = vmatpush.bf16.msra.mxu0 %v3083
        %4831 = vmatpush.bf16.msra.mxu0 %v3073
        %4832 = vmatpush.bf16.msra.mxu0 %v3063
        %4833 = vmatmul.bf16.gmra.mxu0 %v949
        %v4834 = vpop.f32.mrf.mxu0
        %v4835 = vadd.f32 %v4816, %v4834
        %v4836 = vpop.f32.mrf.mxu0
        %v4837 = vadd.f32 %v4818, %v4836
        %4838 = vmatmul.bf16.gmra.mxu0 %v957
        %v4839 = vpop.f32.mrf.mxu0
        %v4840 = vadd.f32 %v4821, %v4839
        %v4841 = vpop.f32.mrf.mxu0
        %v4842 = vadd.f32 %v4823, %v4841
        %4843 = vdwg.mxu0
        %4844 = vmatpush.bf16.msra.mxu0 %v3213
        %4845 = vmatpush.bf16.msra.mxu0 %v3203
        %4846 = vmatpush.bf16.msra.mxu0 %v3193
        %4847 = vmatpush.bf16.msra.mxu0 %v3183
        %4848 = vmatpush.bf16.msra.mxu0 %v3173
        %4849 = vmatpush.bf16.msra.mxu0 %v3163
        %4850 = vmatpush.bf16.msra.mxu0 %v3153
        %4851 = vmatpush.bf16.msra.mxu0 %v3143
        %4852 = vmatmul.bf16.gmra.mxu0 %v950
        %v4853 = vpop.f32.mrf.mxu0
        %v4854 = vadd.f32 %v4835, %v4853
        %v4855 = vpop.f32.mrf.mxu0
        %v4856 = vadd.f32 %v4837, %v4855
        %4857 = vmatmul.bf16.gmra.mxu0 %v958
        %v4858 = vpop.f32.mrf.mxu0
        %v4859 = vadd.f32 %v4840, %v4858
        %v4860 = vpop.f32.mrf.mxu0
        %v4861 = vadd.f32 %v4842, %v4860
        %4862 = vdwg.mxu0
        %4863 = vmatpush.bf16.msra.mxu0 %v3293
        %4864 = vmatpush.bf16.msra.mxu0 %v3283
        %4865 = vmatpush.bf16.msra.mxu0 %v3273
        %4866 = vmatpush.bf16.msra.mxu0 %v3263
        %4867 = vmatpush.bf16.msra.mxu0 %v3253
        %4868 = vmatpush.bf16.msra.mxu0 %v3243
        %4869 = vmatpush.bf16.msra.mxu0 %v3233
        %4870 = vmatpush.bf16.msra.mxu0 %v3223
        %4871 = vmatmul.bf16.gmra.mxu0 %v951
        %v4872 = vpop.f32.mrf.mxu0
        %v4873 = vadd.f32 %v4854, %v4872
        %v4874 = vpop.f32.mrf.mxu0
        %v4875 = vadd.f32 %v4856, %v4874
        %4876 = vmatmul.bf16.gmra.mxu0 %v959
        %v4877 = vpop.f32.mrf.mxu0
        %v4878 = vadd.f32 %v4859, %v4877
        %v4879 = vpop.f32.mrf.mxu0
        %v4880 = vadd.f32 %v4861, %v4879
        %4881 = vdwg.mxu0
        %4882 = vmatpush.bf16.msra.mxu0 %v3373
        %4883 = vmatpush.bf16.msra.mxu0 %v3363
        %4884 = vmatpush.bf16.msra.mxu0 %v3353
        %4885 = vmatpush.bf16.msra.mxu0 %v3343
        %4886 = vmatpush.bf16.msra.mxu0 %v3333
        %4887 = vmatpush.bf16.msra.mxu0 %v3323
        %4888 = vmatpush.bf16.msra.mxu0 %v3313
        %4889 = vmatpush.bf16.msra.mxu0 %v3303
        %4890 = vmatmul.bf16.gmra.mxu0 %v952
        %v4891 = vpop.f32.mrf.mxu0
        %v4892 = vadd.f32 %v4873, %v4891
        %v4893 = vpop.f32.mrf.mxu0
        %v4894 = vadd.f32 %v4875, %v4893
        %4895 = vmatmul.bf16.gmra.mxu0 %v960
        %v4896 = vpop.f32.mrf.mxu0
        %v4897 = vadd.f32 %v4878, %v4896
        %v4898 = vpop.f32.mrf.mxu0
        %v4899 = vadd.f32 %v4880, %v4898
        %4900 = vdwg.mxu0
        %4901 = vmatpush.bf16.msra.mxu0 %v3453
        %4902 = vmatpush.bf16.msra.mxu0 %v3443
        %4903 = vmatpush.bf16.msra.mxu0 %v3433
        %4904 = vmatpush.bf16.msra.mxu0 %v3423
        %4905 = vmatpush.bf16.msra.mxu0 %v3413
        %4906 = vmatpush.bf16.msra.mxu0 %v3403
        %4907 = vmatpush.bf16.msra.mxu0 %v3393
        %4908 = vmatpush.bf16.msra.mxu0 %v3383
        %4909 = vmatmul.bf16.gmra.mxu0 %v953
        %v4910 = vpop.f32.mrf.mxu0
        %v4911 = vadd.f32 %v4892, %v4910
        %v4912 = vpop.f32.mrf.mxu0
        %v4913 = vadd.f32 %v4894, %v4912
        %4914 = vmatmul.bf16.gmra.mxu0 %v961
        %v4915 = vpop.f32.mrf.mxu0
        %v4916 = vadd.f32 %v4897, %v4915
        %v4917 = vpop.f32.mrf.mxu0
        %v4918 = vadd.f32 %v4899, %v4917
        %4919 = vdwg.mxu0
        %4920 = vmatpush.bf16.msra.mxu0 %v3533
        %4921 = vmatpush.bf16.msra.mxu0 %v3523
        %4922 = vmatpush.bf16.msra.mxu0 %v3513
        %4923 = vmatpush.bf16.msra.mxu0 %v3503
        %4924 = vmatpush.bf16.msra.mxu0 %v3493
        %4925 = vmatpush.bf16.msra.mxu0 %v3483
        %4926 = vmatpush.bf16.msra.mxu0 %v3473
        %4927 = vmatpush.bf16.msra.mxu0 %v3463
        %4928 = vmatmul.bf16.gmra.mxu0 %v954
        %v4929 = vpop.f32.mrf.mxu0
        %v4930 = vadd.f32 %v4911, %v4929
        %v4931 = vpop.f32.mrf.mxu0
        %v4932 = vadd.f32 %v4913, %v4931
        %4933 = vmatmul.bf16.gmra.mxu0 %v962
        %v4934 = vpop.f32.mrf.mxu0
        %v4935 = vadd.f32 %v4916, %v4934
        %v4936 = vpop.f32.mrf.mxu0
        %v4937 = vadd.f32 %v4918, %v4936
        %4938 = vdwg.mxu0
        %4939 = vmatpush.bf16.msra.mxu0 %v2974
        %4940 = vmatpush.bf16.msra.mxu0 %v2964
        %4941 = vmatpush.bf16.msra.mxu0 %v2954
        %4942 = vmatpush.bf16.msra.mxu0 %v2944
        %4943 = vmatpush.bf16.msra.mxu0 %v2934
        %4944 = vmatpush.bf16.msra.mxu0 %v2924
        %4945 = vmatpush.bf16.msra.mxu0 %v2914
        %4946 = vmatpush.bf16.msra.mxu0 %v2904
        %4947 = vmatmul.bf16.gmra.mxu0 %v947
        %v4948 = vpop.f32.mrf.mxu0
        %v4949 = vadd.f32 0.0, %v4948
        %v4950 = vpop.f32.mrf.mxu0
        %v4951 = vadd.f32 0.0, %v4950
        %4952 = vmatmul.bf16.gmra.mxu0 %v955
        %v4953 = vpop.f32.mrf.mxu0
        %v4954 = vadd.f32 0.0, %v4953
        %v4955 = vpop.f32.mrf.mxu0
        %v4956 = vadd.f32 0.0, %v4955
        %4957 = vdwg.mxu0
        %4958 = vmatpush.bf16.msra.mxu0 %v3054
        %4959 = vmatpush.bf16.msra.mxu0 %v3044
        %4960 = vmatpush.bf16.msra.mxu0 %v3034
        %4961 = vmatpush.bf16.msra.mxu0 %v3024
        %4962 = vmatpush.bf16.msra.mxu0 %v3014
        %4963 = vmatpush.bf16.msra.mxu0 %v3004
        %4964 = vmatpush.bf16.msra.mxu0 %v2994
        %4965 = vmatpush.bf16.msra.mxu0 %v2984
        %4966 = vmatmul.bf16.gmra.mxu0 %v948
        %v4967 = vpop.f32.mrf.mxu0
        %v4968 = vadd.f32 %v4949, %v4967
        %v4969 = vpop.f32.mrf.mxu0
        %v4970 = vadd.f32 %v4951, %v4969
        %4971 = vmatmul.bf16.gmra.mxu0 %v956
        %v4972 = vpop.f32.mrf.mxu0
        %v4973 = vadd.f32 %v4954, %v4972
        %v4974 = vpop.f32.mrf.mxu0
        %v4975 = vadd.f32 %v4956, %v4974
        %4976 = vdwg.mxu0
        %4977 = vmatpush.bf16.msra.mxu0 %v3134
        %4978 = vmatpush.bf16.msra.mxu0 %v3124
        %4979 = vmatpush.bf16.msra.mxu0 %v3114
        %4980 = vmatpush.bf16.msra.mxu0 %v3104
        %4981 = vmatpush.bf16.msra.mxu0 %v3094
        %4982 = vmatpush.bf16.msra.mxu0 %v3084
        %4983 = vmatpush.bf16.msra.mxu0 %v3074
        %4984 = vmatpush.bf16.msra.mxu0 %v3064
        %4985 = vmatmul.bf16.gmra.mxu0 %v949
        %v4986 = vpop.f32.mrf.mxu0
        %v4987 = vadd.f32 %v4968, %v4986
        %v4988 = vpop.f32.mrf.mxu0
        %v4989 = vadd.f32 %v4970, %v4988
        %4990 = vmatmul.bf16.gmra.mxu0 %v957
        %v4991 = vpop.f32.mrf.mxu0
        %v4992 = vadd.f32 %v4973, %v4991
        %v4993 = vpop.f32.mrf.mxu0
        %v4994 = vadd.f32 %v4975, %v4993
        %4995 = vdwg.mxu0
        %4996 = vmatpush.bf16.msra.mxu0 %v3214
        %4997 = vmatpush.bf16.msra.mxu0 %v3204
        %4998 = vmatpush.bf16.msra.mxu0 %v3194
        %4999 = vmatpush.bf16.msra.mxu0 %v3184
        %5000 = vmatpush.bf16.msra.mxu0 %v3174
        %5001 = vmatpush.bf16.msra.mxu0 %v3164
        %5002 = vmatpush.bf16.msra.mxu0 %v3154
        %5003 = vmatpush.bf16.msra.mxu0 %v3144
        %5004 = vmatmul.bf16.gmra.mxu0 %v950
        %v5005 = vpop.f32.mrf.mxu0
        %v5006 = vadd.f32 %v4987, %v5005
        %v5007 = vpop.f32.mrf.mxu0
        %v5008 = vadd.f32 %v4989, %v5007
        %5009 = vmatmul.bf16.gmra.mxu0 %v958
        %v5010 = vpop.f32.mrf.mxu0
        %v5011 = vadd.f32 %v4992, %v5010
        %v5012 = vpop.f32.mrf.mxu0
        %v5013 = vadd.f32 %v4994, %v5012
        %5014 = vdwg.mxu0
        %5015 = vmatpush.bf16.msra.mxu0 %v3294
        %5016 = vmatpush.bf16.msra.mxu0 %v3284
        %5017 = vmatpush.bf16.msra.mxu0 %v3274
        %5018 = vmatpush.bf16.msra.mxu0 %v3264
        %5019 = vmatpush.bf16.msra.mxu0 %v3254
        %5020 = vmatpush.bf16.msra.mxu0 %v3244
        %5021 = vmatpush.bf16.msra.mxu0 %v3234
        %5022 = vmatpush.bf16.msra.mxu0 %v3224
        %5023 = vmatmul.bf16.gmra.mxu0 %v951
        %v5024 = vpop.f32.mrf.mxu0
        %v5025 = vadd.f32 %v5006, %v5024
        %v5026 = vpop.f32.mrf.mxu0
        %v5027 = vadd.f32 %v5008, %v5026
        %5028 = vmatmul.bf16.gmra.mxu0 %v959
        %v5029 = vpop.f32.mrf.mxu0
        %v5030 = vadd.f32 %v5011, %v5029
        %v5031 = vpop.f32.mrf.mxu0
        %v5032 = vadd.f32 %v5013, %v5031
        %5033 = vdwg.mxu0
        %5034 = vmatpush.bf16.msra.mxu0 %v3374
        %5035 = vmatpush.bf16.msra.mxu0 %v3364
        %5036 = vmatpush.bf16.msra.mxu0 %v3354
        %5037 = vmatpush.bf16.msra.mxu0 %v3344
        %5038 = vmatpush.bf16.msra.mxu0 %v3334
        %5039 = vmatpush.bf16.msra.mxu0 %v3324
        %5040 = vmatpush.bf16.msra.mxu0 %v3314
        %5041 = vmatpush.bf16.msra.mxu0 %v3304
        %5042 = vmatmul.bf16.gmra.mxu0 %v952
        %v5043 = vpop.f32.mrf.mxu0
        %v5044 = vadd.f32 %v5025, %v5043
        %v5045 = vpop.f32.mrf.mxu0
        %v5046 = vadd.f32 %v5027, %v5045
        %5047 = vmatmul.bf16.gmra.mxu0 %v960
        %v5048 = vpop.f32.mrf.mxu0
        %v5049 = vadd.f32 %v5030, %v5048
        %v5050 = vpop.f32.mrf.mxu0
        %v5051 = vadd.f32 %v5032, %v5050
        %5052 = vdwg.mxu0
        %5053 = vmatpush.bf16.msra.mxu0 %v3454
        %5054 = vmatpush.bf16.msra.mxu0 %v3444
        %5055 = vmatpush.bf16.msra.mxu0 %v3434
        %5056 = vmatpush.bf16.msra.mxu0 %v3424
        %5057 = vmatpush.bf16.msra.mxu0 %v3414
        %5058 = vmatpush.bf16.msra.mxu0 %v3404
        %5059 = vmatpush.bf16.msra.mxu0 %v3394
        %5060 = vmatpush.bf16.msra.mxu0 %v3384
        %5061 = vmatmul.bf16.gmra.mxu0 %v953
        %v5062 = vpop.f32.mrf.mxu0
        %v5063 = vadd.f32 %v5044, %v5062
        %v5064 = vpop.f32.mrf.mxu0
        %v5065 = vadd.f32 %v5046, %v5064
        %5066 = vmatmul.bf16.gmra.mxu0 %v961
        %v5067 = vpop.f32.mrf.mxu0
        %v5068 = vadd.f32 %v5049, %v5067
        %v5069 = vpop.f32.mrf.mxu0
        %v5070 = vadd.f32 %v5051, %v5069
        %5071 = vdwg.mxu0
        %5072 = vmatpush.bf16.msra.mxu0 %v3534
        %5073 = vmatpush.bf16.msra.mxu0 %v3524
        %5074 = vmatpush.bf16.msra.mxu0 %v3514
        %5075 = vmatpush.bf16.msra.mxu0 %v3504
        %5076 = vmatpush.bf16.msra.mxu0 %v3494
        %5077 = vmatpush.bf16.msra.mxu0 %v3484
        %5078 = vmatpush.bf16.msra.mxu0 %v3474
        %5079 = vmatpush.bf16.msra.mxu0 %v3464
        %5080 = vmatmul.bf16.gmra.mxu0 %v954
        %v5081 = vpop.f32.mrf.mxu0
        %v5082 = vadd.f32 %v5063, %v5081
        %v5083 = vpop.f32.mrf.mxu0
        %v5084 = vadd.f32 %v5065, %v5083
        %5085 = vmatmul.bf16.gmra.mxu0 %v962
        %v5086 = vpop.f32.mrf.mxu0
        %v5087 = vadd.f32 %v5068, %v5086
        %v5088 = vpop.f32.mrf.mxu0
        %v5089 = vadd.f32 %v5070, %v5088
        %5090 = vdwg.mxu0
        %5091 = vmatpush.bf16.msra.mxu0 %v2975
        %5092 = vmatpush.bf16.msra.mxu0 %v2965
        %5093 = vmatpush.bf16.msra.mxu0 %v2955
        %5094 = vmatpush.bf16.msra.mxu0 %v2945
        %5095 = vmatpush.bf16.msra.mxu0 %v2935
        %5096 = vmatpush.bf16.msra.mxu0 %v2925
        %5097 = vmatpush.bf16.msra.mxu0 %v2915
        %5098 = vmatpush.bf16.msra.mxu0 %v2905
        %5099 = vmatmul.bf16.gmra.mxu0 %v947
        %v5100 = vpop.f32.mrf.mxu0
        %v5101 = vadd.f32 0.0, %v5100
        %v5102 = vpop.f32.mrf.mxu0
        %v5103 = vadd.f32 0.0, %v5102
        %5104 = vmatmul.bf16.gmra.mxu0 %v955
        %v5105 = vpop.f32.mrf.mxu0
        %v5106 = vadd.f32 0.0, %v5105
        %v5107 = vpop.f32.mrf.mxu0
        %v5108 = vadd.f32 0.0, %v5107
        %5109 = vdwg.mxu0
        %5110 = vmatpush.bf16.msra.mxu0 %v3055
        %5111 = vmatpush.bf16.msra.mxu0 %v3045
        %5112 = vmatpush.bf16.msra.mxu0 %v3035
        %5113 = vmatpush.bf16.msra.mxu0 %v3025
        %5114 = vmatpush.bf16.msra.mxu0 %v3015
        %5115 = vmatpush.bf16.msra.mxu0 %v3005
        %5116 = vmatpush.bf16.msra.mxu0 %v2995
        %5117 = vmatpush.bf16.msra.mxu0 %v2985
        %5118 = vmatmul.bf16.gmra.mxu0 %v948
        %v5119 = vpop.f32.mrf.mxu0
        %v5120 = vadd.f32 %v5101, %v5119
        %v5121 = vpop.f32.mrf.mxu0
        %v5122 = vadd.f32 %v5103, %v5121
        %5123 = vmatmul.bf16.gmra.mxu0 %v956
        %v5124 = vpop.f32.mrf.mxu0
        %v5125 = vadd.f32 %v5106, %v5124
        %v5126 = vpop.f32.mrf.mxu0
        %v5127 = vadd.f32 %v5108, %v5126
        %5128 = vdwg.mxu0
        %5129 = vmatpush.bf16.msra.mxu0 %v3135
        %5130 = vmatpush.bf16.msra.mxu0 %v3125
        %5131 = vmatpush.bf16.msra.mxu0 %v3115
        %5132 = vmatpush.bf16.msra.mxu0 %v3105
        %5133 = vmatpush.bf16.msra.mxu0 %v3095
        %5134 = vmatpush.bf16.msra.mxu0 %v3085
        %5135 = vmatpush.bf16.msra.mxu0 %v3075
        %5136 = vmatpush.bf16.msra.mxu0 %v3065
        %5137 = vmatmul.bf16.gmra.mxu0 %v949
        %v5138 = vpop.f32.mrf.mxu0
        %v5139 = vadd.f32 %v5120, %v5138
        %v5140 = vpop.f32.mrf.mxu0
        %v5141 = vadd.f32 %v5122, %v5140
        %5142 = vmatmul.bf16.gmra.mxu0 %v957
        %v5143 = vpop.f32.mrf.mxu0
        %v5144 = vadd.f32 %v5125, %v5143
        %v5145 = vpop.f32.mrf.mxu0
        %v5146 = vadd.f32 %v5127, %v5145
        %5147 = vdwg.mxu0
        %5148 = vmatpush.bf16.msra.mxu0 %v3215
        %5149 = vmatpush.bf16.msra.mxu0 %v3205
        %5150 = vmatpush.bf16.msra.mxu0 %v3195
        %5151 = vmatpush.bf16.msra.mxu0 %v3185
        %5152 = vmatpush.bf16.msra.mxu0 %v3175
        %5153 = vmatpush.bf16.msra.mxu0 %v3165
        %5154 = vmatpush.bf16.msra.mxu0 %v3155
        %5155 = vmatpush.bf16.msra.mxu0 %v3145
        %5156 = vmatmul.bf16.gmra.mxu0 %v950
        %v5157 = vpop.f32.mrf.mxu0
        %v5158 = vadd.f32 %v5139, %v5157
        %v5159 = vpop.f32.mrf.mxu0
        %v5160 = vadd.f32 %v5141, %v5159
        %5161 = vmatmul.bf16.gmra.mxu0 %v958
        %v5162 = vpop.f32.mrf.mxu0
        %v5163 = vadd.f32 %v5144, %v5162
        %v5164 = vpop.f32.mrf.mxu0
        %v5165 = vadd.f32 %v5146, %v5164
        %5166 = vdwg.mxu0
        %5167 = vmatpush.bf16.msra.mxu0 %v3295
        %5168 = vmatpush.bf16.msra.mxu0 %v3285
        %5169 = vmatpush.bf16.msra.mxu0 %v3275
        %5170 = vmatpush.bf16.msra.mxu0 %v3265
        %5171 = vmatpush.bf16.msra.mxu0 %v3255
        %5172 = vmatpush.bf16.msra.mxu0 %v3245
        %5173 = vmatpush.bf16.msra.mxu0 %v3235
        %5174 = vmatpush.bf16.msra.mxu0 %v3225
        %5175 = vmatmul.bf16.gmra.mxu0 %v951
        %v5176 = vpop.f32.mrf.mxu0
        %v5177 = vadd.f32 %v5158, %v5176
        %v5178 = vpop.f32.mrf.mxu0
        %v5179 = vadd.f32 %v5160, %v5178
        %5180 = vmatmul.bf16.gmra.mxu0 %v959
        %v5181 = vpop.f32.mrf.mxu0
        %v5182 = vadd.f32 %v5163, %v5181
        %v5183 = vpop.f32.mrf.mxu0
        %v5184 = vadd.f32 %v5165, %v5183
        %5185 = vdwg.mxu0
        %5186 = vmatpush.bf16.msra.mxu0 %v3375
        %5187 = vmatpush.bf16.msra.mxu0 %v3365
        %5188 = vmatpush.bf16.msra.mxu0 %v3355
        %5189 = vmatpush.bf16.msra.mxu0 %v3345
        %5190 = vmatpush.bf16.msra.mxu0 %v3335
        %5191 = vmatpush.bf16.msra.mxu0 %v3325
        %5192 = vmatpush.bf16.msra.mxu0 %v3315
        %5193 = vmatpush.bf16.msra.mxu0 %v3305
        %5194 = vmatmul.bf16.gmra.mxu0 %v952
        %v5195 = vpop.f32.mrf.mxu0
        %v5196 = vadd.f32 %v5177, %v5195
        %v5197 = vpop.f32.mrf.mxu0
        %v5198 = vadd.f32 %v5179, %v5197
        %5199 = vmatmul.bf16.gmra.mxu0 %v960
        %v5200 = vpop.f32.mrf.mxu0
        %v5201 = vadd.f32 %v5182, %v5200
        %v5202 = vpop.f32.mrf.mxu0
        %v5203 = vadd.f32 %v5184, %v5202
        %5204 = vdwg.mxu0
        %5205 = vmatpush.bf16.msra.mxu0 %v3455
        %5206 = vmatpush.bf16.msra.mxu0 %v3445
        %5207 = vmatpush.bf16.msra.mxu0 %v3435
        %5208 = vmatpush.bf16.msra.mxu0 %v3425
        %5209 = vmatpush.bf16.msra.mxu0 %v3415
        %5210 = vmatpush.bf16.msra.mxu0 %v3405
        %5211 = vmatpush.bf16.msra.mxu0 %v3395
        %5212 = vmatpush.bf16.msra.mxu0 %v3385
        %5213 = vmatmul.bf16.gmra.mxu0 %v953
        %v5214 = vpop.f32.mrf.mxu0
        %v5215 = vadd.f32 %v5196, %v5214
        %v5216 = vpop.f32.mrf.mxu0
        %v5217 = vadd.f32 %v5198, %v5216
        %5218 = vmatmul.bf16.gmra.mxu0 %v961
        %v5219 = vpop.f32.mrf.mxu0
        %v5220 = vadd.f32 %v5201, %v5219
        %v5221 = vpop.f32.mrf.mxu0
        %v5222 = vadd.f32 %v5203, %v5221
        %5223 = vdwg.mxu0
        %5224 = vmatpush.bf16.msra.mxu0 %v3535
        %5225 = vmatpush.bf16.msra.mxu0 %v3525
        %5226 = vmatpush.bf16.msra.mxu0 %v3515
        %5227 = vmatpush.bf16.msra.mxu0 %v3505
        %5228 = vmatpush.bf16.msra.mxu0 %v3495
        %5229 = vmatpush.bf16.msra.mxu0 %v3485
        %5230 = vmatpush.bf16.msra.mxu0 %v3475
        %5231 = vmatpush.bf16.msra.mxu0 %v3465
        %5232 = vmatmul.bf16.gmra.mxu0 %v954
        %v5233 = vpop.f32.mrf.mxu0
        %v5234 = vadd.f32 %v5215, %v5233
        %v5235 = vpop.f32.mrf.mxu0
        %v5236 = vadd.f32 %v5217, %v5235
        %5237 = vmatmul.bf16.gmra.mxu0 %v962
        %v5238 = vpop.f32.mrf.mxu0
        %v5239 = vadd.f32 %v5220, %v5238
        %v5240 = vpop.f32.mrf.mxu0
        %v5241 = vadd.f32 %v5222, %v5240
        %5242 = vdwg.mxu0
        %5243 = vmatpush.bf16.msra.mxu0 %v2976
        %5244 = vmatpush.bf16.msra.mxu0 %v2966
        %5245 = vmatpush.bf16.msra.mxu0 %v2956
        %5246 = vmatpush.bf16.msra.mxu0 %v2946
        %5247 = vmatpush.bf16.msra.mxu0 %v2936
        %5248 = vmatpush.bf16.msra.mxu0 %v2926
        %5249 = vmatpush.bf16.msra.mxu0 %v2916
        %5250 = vmatpush.bf16.msra.mxu0 %v2906
        %5251 = vmatmul.bf16.gmra.mxu0 %v947
        %v5252 = vpop.f32.mrf.mxu0
        %v5253 = vadd.f32 0.0, %v5252
        %v5254 = vpop.f32.mrf.mxu0
        %v5255 = vadd.f32 0.0, %v5254
        %5256 = vmatmul.bf16.gmra.mxu0 %v955
        %v5257 = vpop.f32.mrf.mxu0
        %v5258 = vadd.f32 0.0, %v5257
        %v5259 = vpop.f32.mrf.mxu0
        %v5260 = vadd.f32 0.0, %v5259
        %5261 = vdwg.mxu0
        %5262 = vmatpush.bf16.msra.mxu0 %v3056
        %5263 = vmatpush.bf16.msra.mxu0 %v3046
        %5264 = vmatpush.bf16.msra.mxu0 %v3036
        %5265 = vmatpush.bf16.msra.mxu0 %v3026
        %5266 = vmatpush.bf16.msra.mxu0 %v3016
        %5267 = vmatpush.bf16.msra.mxu0 %v3006
        %5268 = vmatpush.bf16.msra.mxu0 %v2996
        %5269 = vmatpush.bf16.msra.mxu0 %v2986
        %5270 = vmatmul.bf16.gmra.mxu0 %v948
        %v5271 = vpop.f32.mrf.mxu0
        %v5272 = vadd.f32 %v5253, %v5271
        %v5273 = vpop.f32.mrf.mxu0
        %v5274 = vadd.f32 %v5255, %v5273
        %5275 = vmatmul.bf16.gmra.mxu0 %v956
        %v5276 = vpop.f32.mrf.mxu0
        %v5277 = vadd.f32 %v5258, %v5276
        %v5278 = vpop.f32.mrf.mxu0
        %v5279 = vadd.f32 %v5260, %v5278
        %5280 = vdwg.mxu0
        %5281 = vmatpush.bf16.msra.mxu0 %v3136
        %5282 = vmatpush.bf16.msra.mxu0 %v3126
        %5283 = vmatpush.bf16.msra.mxu0 %v3116
        %5284 = vmatpush.bf16.msra.mxu0 %v3106
        %5285 = vmatpush.bf16.msra.mxu0 %v3096
        %5286 = vmatpush.bf16.msra.mxu0 %v3086
        %5287 = vmatpush.bf16.msra.mxu0 %v3076
        %5288 = vmatpush.bf16.msra.mxu0 %v3066
        %5289 = vmatmul.bf16.gmra.mxu0 %v949
        %v5290 = vpop.f32.mrf.mxu0
        %v5291 = vadd.f32 %v5272, %v5290
        %v5292 = vpop.f32.mrf.mxu0
        %v5293 = vadd.f32 %v5274, %v5292
        %5294 = vmatmul.bf16.gmra.mxu0 %v957
        %v5295 = vpop.f32.mrf.mxu0
        %v5296 = vadd.f32 %v5277, %v5295
        %v5297 = vpop.f32.mrf.mxu0
        %v5298 = vadd.f32 %v5279, %v5297
        %5299 = vdwg.mxu0
        %5300 = vmatpush.bf16.msra.mxu0 %v3216
        %5301 = vmatpush.bf16.msra.mxu0 %v3206
        %5302 = vmatpush.bf16.msra.mxu0 %v3196
        %5303 = vmatpush.bf16.msra.mxu0 %v3186
        %5304 = vmatpush.bf16.msra.mxu0 %v3176
        %5305 = vmatpush.bf16.msra.mxu0 %v3166
        %5306 = vmatpush.bf16.msra.mxu0 %v3156
        %5307 = vmatpush.bf16.msra.mxu0 %v3146
        %5308 = vmatmul.bf16.gmra.mxu0 %v950
        %v5309 = vpop.f32.mrf.mxu0
        %v5310 = vadd.f32 %v5291, %v5309
        %v5311 = vpop.f32.mrf.mxu0
        %v5312 = vadd.f32 %v5293, %v5311
        %5313 = vmatmul.bf16.gmra.mxu0 %v958
        %v5314 = vpop.f32.mrf.mxu0
        %v5315 = vadd.f32 %v5296, %v5314
        %v5316 = vpop.f32.mrf.mxu0
        %v5317 = vadd.f32 %v5298, %v5316
        %5318 = vdwg.mxu0
        %5319 = vmatpush.bf16.msra.mxu0 %v3296
        %5320 = vmatpush.bf16.msra.mxu0 %v3286
        %5321 = vmatpush.bf16.msra.mxu0 %v3276
        %5322 = vmatpush.bf16.msra.mxu0 %v3266
        %5323 = vmatpush.bf16.msra.mxu0 %v3256
        %5324 = vmatpush.bf16.msra.mxu0 %v3246
        %5325 = vmatpush.bf16.msra.mxu0 %v3236
        %5326 = vmatpush.bf16.msra.mxu0 %v3226
        %5327 = vmatmul.bf16.gmra.mxu0 %v951
        %v5328 = vpop.f32.mrf.mxu0
        %v5329 = vadd.f32 %v5310, %v5328
        %v5330 = vpop.f32.mrf.mxu0
        %v5331 = vadd.f32 %v5312, %v5330
        %5332 = vmatmul.bf16.gmra.mxu0 %v959
        %v5333 = vpop.f32.mrf.mxu0
        %v5334 = vadd.f32 %v5315, %v5333
        %v5335 = vpop.f32.mrf.mxu0
        %v5336 = vadd.f32 %v5317, %v5335
        %5337 = vdwg.mxu0
        %5338 = vmatpush.bf16.msra.mxu0 %v3376
        %5339 = vmatpush.bf16.msra.mxu0 %v3366
        %5340 = vmatpush.bf16.msra.mxu0 %v3356
        %5341 = vmatpush.bf16.msra.mxu0 %v3346
        %5342 = vmatpush.bf16.msra.mxu0 %v3336
        %5343 = vmatpush.bf16.msra.mxu0 %v3326
        %5344 = vmatpush.bf16.msra.mxu0 %v3316
        %5345 = vmatpush.bf16.msra.mxu0 %v3306
        %5346 = vmatmul.bf16.gmra.mxu0 %v952
        %v5347 = vpop.f32.mrf.mxu0
        %v5348 = vadd.f32 %v5329, %v5347
        %v5349 = vpop.f32.mrf.mxu0
        %v5350 = vadd.f32 %v5331, %v5349
        %5351 = vmatmul.bf16.gmra.mxu0 %v960
        %v5352 = vpop.f32.mrf.mxu0
        %v5353 = vadd.f32 %v5334, %v5352
        %v5354 = vpop.f32.mrf.mxu0
        %v5355 = vadd.f32 %v5336, %v5354
        %5356 = vdwg.mxu0
        %5357 = vmatpush.bf16.msra.mxu0 %v3456
        %5358 = vmatpush.bf16.msra.mxu0 %v3446
        %5359 = vmatpush.bf16.msra.mxu0 %v3436
        %5360 = vmatpush.bf16.msra.mxu0 %v3426
        %5361 = vmatpush.bf16.msra.mxu0 %v3416
        %5362 = vmatpush.bf16.msra.mxu0 %v3406
        %5363 = vmatpush.bf16.msra.mxu0 %v3396
        %5364 = vmatpush.bf16.msra.mxu0 %v3386
        %5365 = vmatmul.bf16.gmra.mxu0 %v953
        %v5366 = vpop.f32.mrf.mxu0
        %v5367 = vadd.f32 %v5348, %v5366
        %v5368 = vpop.f32.mrf.mxu0
        %v5369 = vadd.f32 %v5350, %v5368
        %5370 = vmatmul.bf16.gmra.mxu0 %v961
        %v5371 = vpop.f32.mrf.mxu0
        %v5372 = vadd.f32 %v5353, %v5371
        %v5373 = vpop.f32.mrf.mxu0
        %v5374 = vadd.f32 %v5355, %v5373
        %5375 = vdwg.mxu0
        %5376 = vmatpush.bf16.msra.mxu0 %v3536
        %5377 = vmatpush.bf16.msra.mxu0 %v3526
        %5378 = vmatpush.bf16.msra.mxu0 %v3516
        %5379 = vmatpush.bf16.msra.mxu0 %v3506
        %5380 = vmatpush.bf16.msra.mxu0 %v3496
        %5381 = vmatpush.bf16.msra.mxu0 %v3486
        %5382 = vmatpush.bf16.msra.mxu0 %v3476
        %5383 = vmatpush.bf16.msra.mxu0 %v3466
        %5384 = vmatmul.bf16.gmra.mxu0 %v954
        %v5385 = vpop.f32.mrf.mxu0
        %v5386 = vadd.f32 %v5367, %v5385
        %v5387 = vpop.f32.mrf.mxu0
        %v5388 = vadd.f32 %v5369, %v5387
        %5389 = vmatmul.bf16.gmra.mxu0 %v962
        %v5390 = vpop.f32.mrf.mxu0
        %v5391 = vadd.f32 %v5372, %v5390
        %v5392 = vpop.f32.mrf.mxu0
        %v5393 = vadd.f32 %v5374, %v5392
        %5394 = vdwg.mxu0
        %5395 = vmatpush.bf16.msra.mxu0 %v2977
        %5396 = vmatpush.bf16.msra.mxu0 %v2967
        %5397 = vmatpush.bf16.msra.mxu0 %v2957
        %5398 = vmatpush.bf16.msra.mxu0 %v2947
        %5399 = vmatpush.bf16.msra.mxu0 %v2937
        %5400 = vmatpush.bf16.msra.mxu0 %v2927
        %5401 = vmatpush.bf16.msra.mxu0 %v2917
        %5402 = vmatpush.bf16.msra.mxu0 %v2907
        %5403 = vmatmul.bf16.gmra.mxu0 %v947
        %v5404 = vpop.f32.mrf.mxu0
        %v5405 = vadd.f32 0.0, %v5404
        %v5406 = vpop.f32.mrf.mxu0
        %v5407 = vadd.f32 0.0, %v5406
        %5408 = vmatmul.bf16.gmra.mxu0 %v955
        %v5409 = vpop.f32.mrf.mxu0
        %v5410 = vadd.f32 0.0, %v5409
        %v5411 = vpop.f32.mrf.mxu0
        %v5412 = vadd.f32 0.0, %v5411
        %5413 = vdwg.mxu0
        %5414 = vmatpush.bf16.msra.mxu0 %v3057
        %5415 = vmatpush.bf16.msra.mxu0 %v3047
        %5416 = vmatpush.bf16.msra.mxu0 %v3037
        %5417 = vmatpush.bf16.msra.mxu0 %v3027
        %5418 = vmatpush.bf16.msra.mxu0 %v3017
        %5419 = vmatpush.bf16.msra.mxu0 %v3007
        %5420 = vmatpush.bf16.msra.mxu0 %v2997
        %5421 = vmatpush.bf16.msra.mxu0 %v2987
        %5422 = vmatmul.bf16.gmra.mxu0 %v948
        %v5423 = vpop.f32.mrf.mxu0
        %v5424 = vadd.f32 %v5405, %v5423
        %v5425 = vpop.f32.mrf.mxu0
        %v5426 = vadd.f32 %v5407, %v5425
        %5427 = vmatmul.bf16.gmra.mxu0 %v956
        %v5428 = vpop.f32.mrf.mxu0
        %v5429 = vadd.f32 %v5410, %v5428
        %v5430 = vpop.f32.mrf.mxu0
        %v5431 = vadd.f32 %v5412, %v5430
        %5432 = vdwg.mxu0
        %5433 = vmatpush.bf16.msra.mxu0 %v3137
        %5434 = vmatpush.bf16.msra.mxu0 %v3127
        %5435 = vmatpush.bf16.msra.mxu0 %v3117
        %5436 = vmatpush.bf16.msra.mxu0 %v3107
        %5437 = vmatpush.bf16.msra.mxu0 %v3097
        %5438 = vmatpush.bf16.msra.mxu0 %v3087
        %5439 = vmatpush.bf16.msra.mxu0 %v3077
        %5440 = vmatpush.bf16.msra.mxu0 %v3067
        %5441 = vmatmul.bf16.gmra.mxu0 %v949
        %v5442 = vpop.f32.mrf.mxu0
        %v5443 = vadd.f32 %v5424, %v5442
        %v5444 = vpop.f32.mrf.mxu0
        %v5445 = vadd.f32 %v5426, %v5444
        %5446 = vmatmul.bf16.gmra.mxu0 %v957
        %v5447 = vpop.f32.mrf.mxu0
        %v5448 = vadd.f32 %v5429, %v5447
        %v5449 = vpop.f32.mrf.mxu0
        %v5450 = vadd.f32 %v5431, %v5449
        %5451 = vdwg.mxu0
        %5452 = vmatpush.bf16.msra.mxu0 %v3217
        %5453 = vmatpush.bf16.msra.mxu0 %v3207
        %5454 = vmatpush.bf16.msra.mxu0 %v3197
        %5455 = vmatpush.bf16.msra.mxu0 %v3187
        %5456 = vmatpush.bf16.msra.mxu0 %v3177
        %5457 = vmatpush.bf16.msra.mxu0 %v3167
        %5458 = vmatpush.bf16.msra.mxu0 %v3157
        %5459 = vmatpush.bf16.msra.mxu0 %v3147
        %5460 = vmatmul.bf16.gmra.mxu0 %v950
        %v5461 = vpop.f32.mrf.mxu0
        %v5462 = vadd.f32 %v5443, %v5461
        %v5463 = vpop.f32.mrf.mxu0
        %v5464 = vadd.f32 %v5445, %v5463
        %5465 = vmatmul.bf16.gmra.mxu0 %v958
        %v5466 = vpop.f32.mrf.mxu0
        %v5467 = vadd.f32 %v5448, %v5466
        %v5468 = vpop.f32.mrf.mxu0
        %v5469 = vadd.f32 %v5450, %v5468
        %5470 = vdwg.mxu0
        %5471 = vmatpush.bf16.msra.mxu0 %v3297
        %5472 = vmatpush.bf16.msra.mxu0 %v3287
        %5473 = vmatpush.bf16.msra.mxu0 %v3277
        %5474 = vmatpush.bf16.msra.mxu0 %v3267
        %5475 = vmatpush.bf16.msra.mxu0 %v3257
        %5476 = vmatpush.bf16.msra.mxu0 %v3247
        %5477 = vmatpush.bf16.msra.mxu0 %v3237
        %5478 = vmatpush.bf16.msra.mxu0 %v3227
        %5479 = vmatmul.bf16.gmra.mxu0 %v951
        %v5480 = vpop.f32.mrf.mxu0
        %v5481 = vadd.f32 %v5462, %v5480
        %v5482 = vpop.f32.mrf.mxu0
        %v5483 = vadd.f32 %v5464, %v5482
        %5484 = vmatmul.bf16.gmra.mxu0 %v959
        %v5485 = vpop.f32.mrf.mxu0
        %v5486 = vadd.f32 %v5467, %v5485
        %v5487 = vpop.f32.mrf.mxu0
        %v5488 = vadd.f32 %v5469, %v5487
        %5489 = vdwg.mxu0
        %5490 = vmatpush.bf16.msra.mxu0 %v3377
        %5491 = vmatpush.bf16.msra.mxu0 %v3367
        %5492 = vmatpush.bf16.msra.mxu0 %v3357
        %5493 = vmatpush.bf16.msra.mxu0 %v3347
        %5494 = vmatpush.bf16.msra.mxu0 %v3337
        %5495 = vmatpush.bf16.msra.mxu0 %v3327
        %5496 = vmatpush.bf16.msra.mxu0 %v3317
        %5497 = vmatpush.bf16.msra.mxu0 %v3307
        %5498 = vmatmul.bf16.gmra.mxu0 %v952
        %v5499 = vpop.f32.mrf.mxu0
        %v5500 = vadd.f32 %v5481, %v5499
        %v5501 = vpop.f32.mrf.mxu0
        %v5502 = vadd.f32 %v5483, %v5501
        %5503 = vmatmul.bf16.gmra.mxu0 %v960
        %v5504 = vpop.f32.mrf.mxu0
        %v5505 = vadd.f32 %v5486, %v5504
        %v5506 = vpop.f32.mrf.mxu0
        %v5507 = vadd.f32 %v5488, %v5506
        %5508 = vdwg.mxu0
        %5509 = vmatpush.bf16.msra.mxu0 %v3457
        %5510 = vmatpush.bf16.msra.mxu0 %v3447
        %5511 = vmatpush.bf16.msra.mxu0 %v3437
        %5512 = vmatpush.bf16.msra.mxu0 %v3427
        %5513 = vmatpush.bf16.msra.mxu0 %v3417
        %5514 = vmatpush.bf16.msra.mxu0 %v3407
        %5515 = vmatpush.bf16.msra.mxu0 %v3397
        %5516 = vmatpush.bf16.msra.mxu0 %v3387
        %5517 = vmatmul.bf16.gmra.mxu0 %v953
        %v5518 = vpop.f32.mrf.mxu0
        %v5519 = vadd.f32 %v5500, %v5518
        %v5520 = vpop.f32.mrf.mxu0
        %v5521 = vadd.f32 %v5502, %v5520
        %5522 = vmatmul.bf16.gmra.mxu0 %v961
        %v5523 = vpop.f32.mrf.mxu0
        %v5524 = vadd.f32 %v5505, %v5523
        %v5525 = vpop.f32.mrf.mxu0
        %v5526 = vadd.f32 %v5507, %v5525
        %5527 = vdwg.mxu0
        %5528 = vmatpush.bf16.msra.mxu0 %v3537
        %5529 = vmatpush.bf16.msra.mxu0 %v3527
        %5530 = vmatpush.bf16.msra.mxu0 %v3517
        %5531 = vmatpush.bf16.msra.mxu0 %v3507
        %5532 = vmatpush.bf16.msra.mxu0 %v3497
        %5533 = vmatpush.bf16.msra.mxu0 %v3487
        %5534 = vmatpush.bf16.msra.mxu0 %v3477
        %5535 = vmatpush.bf16.msra.mxu0 %v3467
        %5536 = vmatmul.bf16.gmra.mxu0 %v954
        %v5537 = vpop.f32.mrf.mxu0
        %v5538 = vadd.f32 %v5519, %v5537
        %v5539 = vpop.f32.mrf.mxu0
        %v5540 = vadd.f32 %v5521, %v5539
        %5541 = vmatmul.bf16.gmra.mxu0 %v962
        %v5542 = vpop.f32.mrf.mxu0
        %v5543 = vadd.f32 %v5524, %v5542
        %v5544 = vpop.f32.mrf.mxu0
        %v5545 = vadd.f32 %v5526, %v5544
        %5546 = vdwg.mxu0
        %5547 = vmatpush.bf16.msra.mxu0 %v2978
        %5548 = vmatpush.bf16.msra.mxu0 %v2968
        %5549 = vmatpush.bf16.msra.mxu0 %v2958
        %5550 = vmatpush.bf16.msra.mxu0 %v2948
        %5551 = vmatpush.bf16.msra.mxu0 %v2938
        %5552 = vmatpush.bf16.msra.mxu0 %v2928
        %5553 = vmatpush.bf16.msra.mxu0 %v2918
        %5554 = vmatpush.bf16.msra.mxu0 %v2908
        %5555 = vmatmul.bf16.gmra.mxu0 %v947
        %v5556 = vpop.f32.mrf.mxu0
        %v5557 = vadd.f32 0.0, %v5556
        %v5558 = vpop.f32.mrf.mxu0
        %v5559 = vadd.f32 0.0, %v5558
        %5560 = vmatmul.bf16.gmra.mxu0 %v955
        %v5561 = vpop.f32.mrf.mxu0
        %v5562 = vadd.f32 0.0, %v5561
        %v5563 = vpop.f32.mrf.mxu0
        %v5564 = vadd.f32 0.0, %v5563
        %5565 = vdwg.mxu0
        %5566 = vmatpush.bf16.msra.mxu0 %v3058
        %5567 = vmatpush.bf16.msra.mxu0 %v3048
        %5568 = vmatpush.bf16.msra.mxu0 %v3038
        %5569 = vmatpush.bf16.msra.mxu0 %v3028
        %5570 = vmatpush.bf16.msra.mxu0 %v3018
        %5571 = vmatpush.bf16.msra.mxu0 %v3008
        %5572 = vmatpush.bf16.msra.mxu0 %v2998
        %5573 = vmatpush.bf16.msra.mxu0 %v2988
        %5574 = vmatmul.bf16.gmra.mxu0 %v948
        %v5575 = vpop.f32.mrf.mxu0
        %v5576 = vadd.f32 %v5557, %v5575
        %v5577 = vpop.f32.mrf.mxu0
        %v5578 = vadd.f32 %v5559, %v5577
        %5579 = vmatmul.bf16.gmra.mxu0 %v956
        %v5580 = vpop.f32.mrf.mxu0
        %v5581 = vadd.f32 %v5562, %v5580
        %v5582 = vpop.f32.mrf.mxu0
        %v5583 = vadd.f32 %v5564, %v5582
        %5584 = vdwg.mxu0
        %5585 = vmatpush.bf16.msra.mxu0 %v3138
        %5586 = vmatpush.bf16.msra.mxu0 %v3128
        %5587 = vmatpush.bf16.msra.mxu0 %v3118
        %5588 = vmatpush.bf16.msra.mxu0 %v3108
        %5589 = vmatpush.bf16.msra.mxu0 %v3098
        %5590 = vmatpush.bf16.msra.mxu0 %v3088
        %5591 = vmatpush.bf16.msra.mxu0 %v3078
        %5592 = vmatpush.bf16.msra.mxu0 %v3068
        %5593 = vmatmul.bf16.gmra.mxu0 %v949
        %v5594 = vpop.f32.mrf.mxu0
        %v5595 = vadd.f32 %v5576, %v5594
        %v5596 = vpop.f32.mrf.mxu0
        %v5597 = vadd.f32 %v5578, %v5596
        %5598 = vmatmul.bf16.gmra.mxu0 %v957
        %v5599 = vpop.f32.mrf.mxu0
        %v5600 = vadd.f32 %v5581, %v5599
        %v5601 = vpop.f32.mrf.mxu0
        %v5602 = vadd.f32 %v5583, %v5601
        %5603 = vdwg.mxu0
        %5604 = vmatpush.bf16.msra.mxu0 %v3218
        %5605 = vmatpush.bf16.msra.mxu0 %v3208
        %5606 = vmatpush.bf16.msra.mxu0 %v3198
        %5607 = vmatpush.bf16.msra.mxu0 %v3188
        %5608 = vmatpush.bf16.msra.mxu0 %v3178
        %5609 = vmatpush.bf16.msra.mxu0 %v3168
        %5610 = vmatpush.bf16.msra.mxu0 %v3158
        %5611 = vmatpush.bf16.msra.mxu0 %v3148
        %5612 = vmatmul.bf16.gmra.mxu0 %v950
        %v5613 = vpop.f32.mrf.mxu0
        %v5614 = vadd.f32 %v5595, %v5613
        %v5615 = vpop.f32.mrf.mxu0
        %v5616 = vadd.f32 %v5597, %v5615
        %5617 = vmatmul.bf16.gmra.mxu0 %v958
        %v5618 = vpop.f32.mrf.mxu0
        %v5619 = vadd.f32 %v5600, %v5618
        %v5620 = vpop.f32.mrf.mxu0
        %v5621 = vadd.f32 %v5602, %v5620
        %5622 = vdwg.mxu0
        %5623 = vmatpush.bf16.msra.mxu0 %v3298
        %5624 = vmatpush.bf16.msra.mxu0 %v3288
        %5625 = vmatpush.bf16.msra.mxu0 %v3278
        %5626 = vmatpush.bf16.msra.mxu0 %v3268
        %5627 = vmatpush.bf16.msra.mxu0 %v3258
        %5628 = vmatpush.bf16.msra.mxu0 %v3248
        %5629 = vmatpush.bf16.msra.mxu0 %v3238
        %5630 = vmatpush.bf16.msra.mxu0 %v3228
        %5631 = vmatmul.bf16.gmra.mxu0 %v951
        %v5632 = vpop.f32.mrf.mxu0
        %v5633 = vadd.f32 %v5614, %v5632
        %v5634 = vpop.f32.mrf.mxu0
        %v5635 = vadd.f32 %v5616, %v5634
        %5636 = vmatmul.bf16.gmra.mxu0 %v959
        %v5637 = vpop.f32.mrf.mxu0
        %v5638 = vadd.f32 %v5619, %v5637
        %v5639 = vpop.f32.mrf.mxu0
        %v5640 = vadd.f32 %v5621, %v5639
        %5641 = vdwg.mxu0
        %5642 = vmatpush.bf16.msra.mxu0 %v3378
        %5643 = vmatpush.bf16.msra.mxu0 %v3368
        %5644 = vmatpush.bf16.msra.mxu0 %v3358
        %5645 = vmatpush.bf16.msra.mxu0 %v3348
        %5646 = vmatpush.bf16.msra.mxu0 %v3338
        %5647 = vmatpush.bf16.msra.mxu0 %v3328
        %5648 = vmatpush.bf16.msra.mxu0 %v3318
        %5649 = vmatpush.bf16.msra.mxu0 %v3308
        %5650 = vmatmul.bf16.gmra.mxu0 %v952
        %v5651 = vpop.f32.mrf.mxu0
        %v5652 = vadd.f32 %v5633, %v5651
        %v5653 = vpop.f32.mrf.mxu0
        %v5654 = vadd.f32 %v5635, %v5653
        %5655 = vmatmul.bf16.gmra.mxu0 %v960
        %v5656 = vpop.f32.mrf.mxu0
        %v5657 = vadd.f32 %v5638, %v5656
        %v5658 = vpop.f32.mrf.mxu0
        %v5659 = vadd.f32 %v5640, %v5658
        %5660 = vdwg.mxu0
        %5661 = vmatpush.bf16.msra.mxu0 %v3458
        %5662 = vmatpush.bf16.msra.mxu0 %v3448
        %5663 = vmatpush.bf16.msra.mxu0 %v3438
        %5664 = vmatpush.bf16.msra.mxu0 %v3428
        %5665 = vmatpush.bf16.msra.mxu0 %v3418
        %5666 = vmatpush.bf16.msra.mxu0 %v3408
        %5667 = vmatpush.bf16.msra.mxu0 %v3398
        %5668 = vmatpush.bf16.msra.mxu0 %v3388
        %5669 = vmatmul.bf16.gmra.mxu0 %v953
        %v5670 = vpop.f32.mrf.mxu0
        %v5671 = vadd.f32 %v5652, %v5670
        %v5672 = vpop.f32.mrf.mxu0
        %v5673 = vadd.f32 %v5654, %v5672
        %5674 = vmatmul.bf16.gmra.mxu0 %v961
        %v5675 = vpop.f32.mrf.mxu0
        %v5676 = vadd.f32 %v5657, %v5675
        %v5677 = vpop.f32.mrf.mxu0
        %v5678 = vadd.f32 %v5659, %v5677
        %5679 = vdwg.mxu0
        %5680 = vmatpush.bf16.msra.mxu0 %v3538
        %5681 = vmatpush.bf16.msra.mxu0 %v3528
        %5682 = vmatpush.bf16.msra.mxu0 %v3518
        %5683 = vmatpush.bf16.msra.mxu0 %v3508
        %5684 = vmatpush.bf16.msra.mxu0 %v3498
        %5685 = vmatpush.bf16.msra.mxu0 %v3488
        %5686 = vmatpush.bf16.msra.mxu0 %v3478
        %5687 = vmatpush.bf16.msra.mxu0 %v3468
        %5688 = vmatmul.bf16.gmra.mxu0 %v954
        %v5689 = vpop.f32.mrf.mxu0
        %v5690 = vadd.f32 %v5671, %v5689
        %v5691 = vpop.f32.mrf.mxu0
        %v5692 = vadd.f32 %v5673, %v5691
        %5693 = vmatmul.bf16.gmra.mxu0 %v962
        %v5694 = vpop.f32.mrf.mxu0
        %v5695 = vadd.f32 %v5676, %v5694
        %v5696 = vpop.f32.mrf.mxu0
        %v5697 = vadd.f32 %v5678, %v5696
        %5698 = vdwg.mxu0
        %v5699 = vmul.f32 %v4322, %v4322
        %v5700 = vmul.f32 %v4474, %v4474
        %v5701 = vmul.f32 %v4626, %v4626
        %v5702 = vmul.f32 %v4778, %v4778
        %v5703 = vmul.f32 %v4930, %v4930
        %v5704 = vmul.f32 %v5082, %v5082
        %v5705 = vmul.f32 %v5234, %v5234
        %v5706 = vmul.f32 %v5386, %v5386
        %v5707 = vmul.f32 %v5538, %v5538
        %v5708 = vmul.f32 %v5690, %v5690
        %v5709 = vmul.f32 %v4324, %v4324
        %v5710 = vmul.f32 %v4476, %v4476
        %v5711 = vmul.f32 %v4628, %v4628
        %v5712 = vmul.f32 %v4780, %v4780
        %v5713 = vmul.f32 %v4932, %v4932
        %v5714 = vmul.f32 %v5084, %v5084
        %v5715 = vmul.f32 %v5236, %v5236
        %v5716 = vmul.f32 %v5388, %v5388
        %v5717 = vmul.f32 %v5540, %v5540
        %v5718 = vmul.f32 %v5692, %v5692
        %v5719 = vmul.f32 %v4327, %v4327
        %v5720 = vmul.f32 %v4479, %v4479
        %v5721 = vmul.f32 %v4631, %v4631
        %v5722 = vmul.f32 %v4783, %v4783
        %v5723 = vmul.f32 %v4935, %v4935
        %v5724 = vmul.f32 %v5087, %v5087
        %v5725 = vmul.f32 %v5239, %v5239
        %v5726 = vmul.f32 %v5391, %v5391
        %v5727 = vmul.f32 %v5543, %v5543
        %v5728 = vmul.f32 %v5695, %v5695
        %v5729 = vmul.f32 %v4329, %v4329
        %v5730 = vmul.f32 %v4481, %v4481
        %v5731 = vmul.f32 %v4633, %v4633
        %v5732 = vmul.f32 %v4785, %v4785
        %v5733 = vmul.f32 %v4937, %v4937
        %v5734 = vmul.f32 %v5089, %v5089
        %v5735 = vmul.f32 %v5241, %v5241
        %v5736 = vmul.f32 %v5393, %v5393
        %v5737 = vmul.f32 %v5545, %v5545
        %v5738 = vmul.f32 %v5697, %v5697
        %v5739 = vadd.f32 %v5699, %v5704
        %v5740 = vadd.f32 %v5700, %v5705
        %v5741 = vadd.f32 %v5701, %v5706
        %v5742 = vadd.f32 %v5702, %v5707
        %v5743 = vadd.f32 %v5703, %v5708
        %v5744 = vadd.f32 %v5709, %v5714
        %v5745 = vadd.f32 %v5710, %v5715
        %v5746 = vadd.f32 %v5711, %v5716
        %v5747 = vadd.f32 %v5712, %v5717
        %v5748 = vadd.f32 %v5713, %v5718
        %v5749 = vadd.f32 %v5719, %v5724
        %v5750 = vadd.f32 %v5720, %v5725
        %v5751 = vadd.f32 %v5721, %v5726
        %v5752 = vadd.f32 %v5722, %v5727
        %v5753 = vadd.f32 %v5723, %v5728
        %v5754 = vadd.f32 %v5729, %v5734
        %v5755 = vadd.f32 %v5730, %v5735
        %v5756 = vadd.f32 %v5731, %v5736
        %v5757 = vadd.f32 %v5732, %v5737
        %v5758 = vadd.f32 %v5733, %v5738
        %v5759 = vmax.f32 %v5739, 1e-10
        %v5760 = vmax.f32 %v5740, 1e-10
        %v5761 = vmax.f32 %v5741, 1e-10
        %v5762 = vmax.f32 %v5742, 1e-10
        %v5763 = vmax.f32 %v5743, 1e-10
        %v5764 = vmax.f32 %v5744, 1e-10
        %v5765 = vmax.f32 %v5745, 1e-10
        %v5766 = vmax.f32 %v5746, 1e-10
        %v5767 = vmax.f32 %v5747, 1e-10
        %v5768 = vmax.f32 %v5748, 1e-10
        %v5769 = vlog2.pop %v5759
        %v5770 = vmul.f32 %v5769, 0.6931472
        %v5771 = vlog2.pop %v5760
        %v5772 = vmul.f32 %v5771, 0.6931472
        %v5773 = vlog2.pop %v5761
        %v5774 = vmul.f32 %v5773, 0.6931472
        %v5775 = vlog2.pop %v5762
        %v5776 = vmul.f32 %v5775, 0.6931472
        %v5777 = vlog2.pop %v5763
        %v5778 = vmul.f32 %v5777, 0.6931472
        %v5779 = vlog2.pop %v5764
        %v5780 = vmul.f32 %v5779, 0.6931472
        %v5781 = vlog2.pop %v5765
        %v5782 = vmul.f32 %v5781, 0.6931472
        %v5783 = vlog2.pop %v5766
        %v5784 = vmul.f32 %v5783, 0.6931472
        %v5785 = vlog2.pop %v5767
        %v5786 = vmul.f32 %v5785, 0.6931472
        %v5787 = vlog2.pop %v5768
        %v5788 = vmul.f32 %v5787, 0.6931472
        %v5789 = vmul.f32 %v5770, 0.5
        %v5790 = vmul.f32 %v5772, 0.5
        %v5791 = vmul.f32 %v5774, 0.5
        %v5792 = vmul.f32 %v5776, 0.5
        %v5793 = vmul.f32 %v5778, 0.5
        %v5794 = vmul.f32 %v5780, 0.5
        %v5795 = vmul.f32 %v5782, 0.5
        %v5796 = vmul.f32 %v5784, 0.5
        %v5797 = vmul.f32 %v5786, 0.5
        %v5798 = vmul.f32 %v5788, 0.5
        %v5799 = vmax.f32 %v5749, 1e-10
        %v5800 = vmax.f32 %v5750, 1e-10
        %v5801 = vmax.f32 %v5751, 1e-10
        %v5802 = vmax.f32 %v5752, 1e-10
        %v5803 = vmax.f32 %v5753, 1e-10
        %v5804 = vmax.f32 %v5754, 1e-10
        %v5805 = vmax.f32 %v5755, 1e-10
        %v5806 = vmax.f32 %v5756, 1e-10
        %v5807 = vmax.f32 %v5757, 1e-10
        %v5808 = vmax.f32 %v5758, 1e-10
        %v5809 = vlog2.pop %v5799
        %v5810 = vmul.f32 %v5809, 0.6931472
        %v5811 = vlog2.pop %v5800
        %v5812 = vmul.f32 %v5811, 0.6931472
        %v5813 = vlog2.pop %v5801
        %v5814 = vmul.f32 %v5813, 0.6931472
        %v5815 = vlog2.pop %v5802
        %v5816 = vmul.f32 %v5815, 0.6931472
        %v5817 = vlog2.pop %v5803
        %v5818 = vmul.f32 %v5817, 0.6931472
        %v5819 = vlog2.pop %v5804
        %v5820 = vmul.f32 %v5819, 0.6931472
        %v5821 = vlog2.pop %v5805
        %v5822 = vmul.f32 %v5821, 0.6931472
        %v5823 = vlog2.pop %v5806
        %v5824 = vmul.f32 %v5823, 0.6931472
        %v5825 = vlog2.pop %v5807
        %v5826 = vmul.f32 %v5825, 0.6931472
        %v5827 = vlog2.pop %v5808
        %v5828 = vmul.f32 %v5827, 0.6931472
        %v5829 = vmul.f32 %v5810, 0.5
        %v5830 = vmul.f32 %v5812, 0.5
        %v5831 = vmul.f32 %v5814, 0.5
        %v5832 = vmul.f32 %v5816, 0.5
        %v5833 = vmul.f32 %v5818, 0.5
        %v5834 = vmul.f32 %v5820, 0.5
        %v5835 = vmul.f32 %v5822, 0.5
        %v5836 = vmul.f32 %v5824, 0.5
        %v5837 = vmul.f32 %v5826, 0.5
        %v5838 = vmul.f32 %v5828, 0.5
        %v5839 = vsub.f32 %v5789, %v5829
        %v5840 = vsub.f32 %v5790, %v5830
        %v5841 = vsub.f32 %v5791, %v5831
        %v5842 = vsub.f32 %v5792, %v5832
        %v5843 = vsub.f32 %v5793, %v5833
        %v5844 = vsub.f32 %v5794, %v5834
        %v5845 = vsub.f32 %v5795, %v5835
        %v5846 = vsub.f32 %v5796, %v5836
        %v5847 = vsub.f32 %v5797, %v5837
        %v5848 = vsub.f32 %v5798, %v5838
        %v5849 = vand.u32 2147483647, %v5839
        %v5850 = vand.u32 2147483647, %v5840
        %v5851 = vand.u32 2147483647, %v5841
        %v5852 = vand.u32 2147483647, %v5842
        %v5853 = vand.u32 2147483647, %v5843
        %v5854 = vand.u32 2147483647, %v5844
        %v5855 = vand.u32 2147483647, %v5845
        %v5856 = vand.u32 2147483647, %v5846
        %v5857 = vand.u32 2147483647, %v5847
        %v5858 = vand.u32 2147483647, %v5848
        %v5859 = vrsqrt.pop %v5749
        %v5860 = vmul.f32 %v5859, %v5749
        %v5861 = vmul.f32 %v5860, %v5859
        %v5862 = vmul.f32 0.5, %v5861
        %v5863 = vsub.f32 1.5, %v5862
        %v5864 = vmul.f32 %v5859, %v5863
        %v5865 = vmul.f32 %v5749, %v5864
        %vm5866 = vcmp.eq.f32.partialorder %v5749, inf
        %v5867 = vsel %vm5866, %v5749, %v5865
        %vm5868 = vcmp.eq.f32.partialorder %v5749, 0.0
        %v5869 = vand.u32 %v5749, 2147483648
        %v5870 = vsel %vm5868, %v5869, %v5867
        %v5871 = vrsqrt.pop %v5750
        %v5872 = vmul.f32 %v5871, %v5750
        %v5873 = vmul.f32 %v5872, %v5871
        %v5874 = vmul.f32 0.5, %v5873
        %v5875 = vsub.f32 1.5, %v5874
        %v5876 = vmul.f32 %v5871, %v5875
        %v5877 = vmul.f32 %v5750, %v5876
        %vm5878 = vcmp.eq.f32.partialorder %v5750, inf
        %v5879 = vsel %vm5878, %v5750, %v5877
        %vm5880 = vcmp.eq.f32.partialorder %v5750, 0.0
        %v5881 = vand.u32 %v5750, 2147483648
        %v5882 = vsel %vm5880, %v5881, %v5879
        %v5883 = vrsqrt.pop %v5751
        %v5884 = vmul.f32 %v5883, %v5751
        %v5885 = vmul.f32 %v5884, %v5883
        %v5886 = vmul.f32 0.5, %v5885
        %v5887 = vsub.f32 1.5, %v5886
        %v5888 = vmul.f32 %v5883, %v5887
        %v5889 = vmul.f32 %v5751, %v5888
        %vm5890 = vcmp.eq.f32.partialorder %v5751, inf
        %v5891 = vsel %vm5890, %v5751, %v5889
        %vm5892 = vcmp.eq.f32.partialorder %v5751, 0.0
        %v5893 = vand.u32 %v5751, 2147483648
        %v5894 = vsel %vm5892, %v5893, %v5891
        %v5895 = vrsqrt.pop %v5752
        %v5896 = vmul.f32 %v5895, %v5752
        %v5897 = vmul.f32 %v5896, %v5895
        %v5898 = vmul.f32 0.5, %v5897
        %v5899 = vsub.f32 1.5, %v5898
        %v5900 = vmul.f32 %v5895, %v5899
        %v5901 = vmul.f32 %v5752, %v5900
        %vm5902 = vcmp.eq.f32.partialorder %v5752, inf
        %v5903 = vsel %vm5902, %v5752, %v5901
        %vm5904 = vcmp.eq.f32.partialorder %v5752, 0.0
        %v5905 = vand.u32 %v5752, 2147483648
        %v5906 = vsel %vm5904, %v5905, %v5903
        %v5907 = vrsqrt.pop %v5753
        %v5908 = vmul.f32 %v5907, %v5753
        %v5909 = vmul.f32 %v5908, %v5907
        %v5910 = vmul.f32 0.5, %v5909
        %v5911 = vsub.f32 1.5, %v5910
        %v5912 = vmul.f32 %v5907, %v5911
        %v5913 = vmul.f32 %v5753, %v5912
        %vm5914 = vcmp.eq.f32.partialorder %v5753, inf
        %v5915 = vsel %vm5914, %v5753, %v5913
        %vm5916 = vcmp.eq.f32.partialorder %v5753, 0.0
        %v5917 = vand.u32 %v5753, 2147483648
        %v5918 = vsel %vm5916, %v5917, %v5915
        %v5919 = vrsqrt.pop %v5754
        %v5920 = vmul.f32 %v5919, %v5754
        %v5921 = vmul.f32 %v5920, %v5919
        %v5922 = vmul.f32 0.5, %v5921
        %v5923 = vsub.f32 1.5, %v5922
        %v5924 = vmul.f32 %v5919, %v5923
        %v5925 = vmul.f32 %v5754, %v5924
        %vm5926 = vcmp.eq.f32.partialorder %v5754, inf
        %v5927 = vsel %vm5926, %v5754, %v5925
        %vm5928 = vcmp.eq.f32.partialorder %v5754, 0.0
        %v5929 = vand.u32 %v5754, 2147483648
        %v5930 = vsel %vm5928, %v5929, %v5927
        %v5931 = vrsqrt.pop %v5755
        %v5932 = vmul.f32 %v5931, %v5755
        %v5933 = vmul.f32 %v5932, %v5931
        %v5934 = vmul.f32 0.5, %v5933
        %v5935 = vsub.f32 1.5, %v5934
        %v5936 = vmul.f32 %v5931, %v5935
        %v5937 = vmul.f32 %v5755, %v5936
        %vm5938 = vcmp.eq.f32.partialorder %v5755, inf
        %v5939 = vsel %vm5938, %v5755, %v5937
        %vm5940 = vcmp.eq.f32.partialorder %v5755, 0.0
        %v5941 = vand.u32 %v5755, 2147483648
        %v5942 = vsel %vm5940, %v5941, %v5939
        %v5943 = vrsqrt.pop %v5756
        %v5944 = vmul.f32 %v5943, %v5756
        %v5945 = vmul.f32 %v5944, %v5943
        %v5946 = vmul.f32 0.5, %v5945
        %v5947 = vsub.f32 1.5, %v5946
        %v5948 = vmul.f32 %v5943, %v5947
        %v5949 = vmul.f32 %v5756, %v5948
        %vm5950 = vcmp.eq.f32.partialorder %v5756, inf
        %v5951 = vsel %vm5950, %v5756, %v5949
        %vm5952 = vcmp.eq.f32.partialorder %v5756, 0.0
        %v5953 = vand.u32 %v5756, 2147483648
        %v5954 = vsel %vm5952, %v5953, %v5951
        %v5955 = vrsqrt.pop %v5757
        %v5956 = vmul.f32 %v5955, %v5757
        %v5957 = vmul.f32 %v5956, %v5955
        %v5958 = vmul.f32 0.5, %v5957
        %v5959 = vsub.f32 1.5, %v5958
        %v5960 = vmul.f32 %v5955, %v5959
        %v5961 = vmul.f32 %v5757, %v5960
        %vm5962 = vcmp.eq.f32.partialorder %v5757, inf
        %v5963 = vsel %vm5962, %v5757, %v5961
        %vm5964 = vcmp.eq.f32.partialorder %v5757, 0.0
        %v5965 = vand.u32 %v5757, 2147483648
        %v5966 = vsel %vm5964, %v5965, %v5963
        %v5967 = vrsqrt.pop %v5758
        %v5968 = vmul.f32 %v5967, %v5758
        %v5969 = vmul.f32 %v5968, %v5967
        %v5970 = vmul.f32 0.5, %v5969
        %v5971 = vsub.f32 1.5, %v5970
        %v5972 = vmul.f32 %v5967, %v5971
        %v5973 = vmul.f32 %v5758, %v5972
        %vm5974 = vcmp.eq.f32.partialorder %v5758, inf
        %v5975 = vsel %vm5974, %v5758, %v5973
        %vm5976 = vcmp.eq.f32.partialorder %v5758, 0.0
        %v5977 = vand.u32 %v5758, 2147483648
        %v5978 = vsel %vm5976, %v5977, %v5975
        %v5979 = vrsqrt.pop %v5739
        %v5980 = vmul.f32 %v5979, %v5739
        %v5981 = vmul.f32 %v5980, %v5979
        %v5982 = vmul.f32 0.5, %v5981
        %v5983 = vsub.f32 1.5, %v5982
        %v5984 = vmul.f32 %v5979, %v5983
        %v5985 = vmul.f32 %v5739, %v5984
        %vm5986 = vcmp.eq.f32.partialorder %v5739, inf
        %v5987 = vsel %vm5986, %v5739, %v5985
        %vm5988 = vcmp.eq.f32.partialorder %v5739, 0.0
        %v5989 = vand.u32 %v5739, 2147483648
        %v5990 = vsel %vm5988, %v5989, %v5987
        %v5991 = vrsqrt.pop %v5740
        %v5992 = vmul.f32 %v5991, %v5740
        %v5993 = vmul.f32 %v5992, %v5991
        %v5994 = vmul.f32 0.5, %v5993
        %v5995 = vsub.f32 1.5, %v5994
        %v5996 = vmul.f32 %v5991, %v5995
        %v5997 = vmul.f32 %v5740, %v5996
        %vm5998 = vcmp.eq.f32.partialorder %v5740, inf
        %v5999 = vsel %vm5998, %v5740, %v5997
        %vm6000 = vcmp.eq.f32.partialorder %v5740, 0.0
        %v6001 = vand.u32 %v5740, 2147483648
        %v6002 = vsel %vm6000, %v6001, %v5999
        %v6003 = vrsqrt.pop %v5741
        %v6004 = vmul.f32 %v6003, %v5741
        %v6005 = vmul.f32 %v6004, %v6003
        %v6006 = vmul.f32 0.5, %v6005
        %v6007 = vsub.f32 1.5, %v6006
        %v6008 = vmul.f32 %v6003, %v6007
        %v6009 = vmul.f32 %v5741, %v6008
        %vm6010 = vcmp.eq.f32.partialorder %v5741, inf
        %v6011 = vsel %vm6010, %v5741, %v6009
        %vm6012 = vcmp.eq.f32.partialorder %v5741, 0.0
        %v6013 = vand.u32 %v5741, 2147483648
        %v6014 = vsel %vm6012, %v6013, %v6011
        %v6015 = vrsqrt.pop %v5742
        %v6016 = vmul.f32 %v6015, %v5742
        %v6017 = vmul.f32 %v6016, %v6015
        %v6018 = vmul.f32 0.5, %v6017
        %v6019 = vsub.f32 1.5, %v6018
        %v6020 = vmul.f32 %v6015, %v6019
        %v6021 = vmul.f32 %v5742, %v6020
        %vm6022 = vcmp.eq.f32.partialorder %v5742, inf
        %v6023 = vsel %vm6022, %v5742, %v6021
        %vm6024 = vcmp.eq.f32.partialorder %v5742, 0.0
        %v6025 = vand.u32 %v5742, 2147483648
        %v6026 = vsel %vm6024, %v6025, %v6023
        %v6027 = vrsqrt.pop %v5743
        %v6028 = vmul.f32 %v6027, %v5743
        %v6029 = vmul.f32 %v6028, %v6027
        %v6030 = vmul.f32 0.5, %v6029
        %v6031 = vsub.f32 1.5, %v6030
        %v6032 = vmul.f32 %v6027, %v6031
        %v6033 = vmul.f32 %v5743, %v6032
        %vm6034 = vcmp.eq.f32.partialorder %v5743, inf
        %v6035 = vsel %vm6034, %v5743, %v6033
        %vm6036 = vcmp.eq.f32.partialorder %v5743, 0.0
        %v6037 = vand.u32 %v5743, 2147483648
        %v6038 = vsel %vm6036, %v6037, %v6035
        %v6039 = vrsqrt.pop %v5744
        %v6040 = vmul.f32 %v6039, %v5744
        %v6041 = vmul.f32 %v6040, %v6039
        %v6042 = vmul.f32 0.5, %v6041
        %v6043 = vsub.f32 1.5, %v6042
        %v6044 = vmul.f32 %v6039, %v6043
        %v6045 = vmul.f32 %v5744, %v6044
        %vm6046 = vcmp.eq.f32.partialorder %v5744, inf
        %v6047 = vsel %vm6046, %v5744, %v6045
        %vm6048 = vcmp.eq.f32.partialorder %v5744, 0.0
        %v6049 = vand.u32 %v5744, 2147483648
        %v6050 = vsel %vm6048, %v6049, %v6047
        %v6051 = vrsqrt.pop %v5745
        %v6052 = vmul.f32 %v6051, %v5745
        %v6053 = vmul.f32 %v6052, %v6051
        %v6054 = vmul.f32 0.5, %v6053
        %v6055 = vsub.f32 1.5, %v6054
        %v6056 = vmul.f32 %v6051, %v6055
        %v6057 = vmul.f32 %v5745, %v6056
        %vm6058 = vcmp.eq.f32.partialorder %v5745, inf
        %v6059 = vsel %vm6058, %v5745, %v6057
        %vm6060 = vcmp.eq.f32.partialorder %v5745, 0.0
        %v6061 = vand.u32 %v5745, 2147483648
        %v6062 = vsel %vm6060, %v6061, %v6059
        %v6063 = vrsqrt.pop %v5746
        %v6064 = vmul.f32 %v6063, %v5746
        %v6065 = vmul.f32 %v6064, %v6063
        %v6066 = vmul.f32 0.5, %v6065
        %v6067 = vsub.f32 1.5, %v6066
        %v6068 = vmul.f32 %v6063, %v6067
        %v6069 = vmul.f32 %v5746, %v6068
        %vm6070 = vcmp.eq.f32.partialorder %v5746, inf
        %v6071 = vsel %vm6070, %v5746, %v6069
        %vm6072 = vcmp.eq.f32.partialorder %v5746, 0.0
        %v6073 = vand.u32 %v5746, 2147483648
        %v6074 = vsel %vm6072, %v6073, %v6071
        %v6075 = vrsqrt.pop %v5747
        %v6076 = vmul.f32 %v6075, %v5747
        %v6077 = vmul.f32 %v6076, %v6075
        %v6078 = vmul.f32 0.5, %v6077
        %v6079 = vsub.f32 1.5, %v6078
        %v6080 = vmul.f32 %v6075, %v6079
        %v6081 = vmul.f32 %v5747, %v6080
        %vm6082 = vcmp.eq.f32.partialorder %v5747, inf
        %v6083 = vsel %vm6082, %v5747, %v6081
        %vm6084 = vcmp.eq.f32.partialorder %v5747, 0.0
        %v6085 = vand.u32 %v5747, 2147483648
        %v6086 = vsel %vm6084, %v6085, %v6083
        %v6087 = vrsqrt.pop %v5748
        %v6088 = vmul.f32 %v6087, %v5748
        %v6089 = vmul.f32 %v6088, %v6087
        %v6090 = vmul.f32 0.5, %v6089
        %v6091 = vsub.f32 1.5, %v6090
        %v6092 = vmul.f32 %v6087, %v6091
        %v6093 = vmul.f32 %v5748, %v6092
        %vm6094 = vcmp.eq.f32.partialorder %v5748, inf
        %v6095 = vsel %vm6094, %v5748, %v6093
        %vm6096 = vcmp.eq.f32.partialorder %v5748, 0.0
        %v6097 = vand.u32 %v5748, 2147483648
        %v6098 = vsel %vm6096, %v6097, %v6095
        %v6099 = vsub.f32 %v5870, %v5990
        %v6100 = vsub.f32 %v5882, %v6002
        %v6101 = vsub.f32 %v5894, %v6014
        %v6102 = vsub.f32 %v5906, %v6026
        %v6103 = vsub.f32 %v5918, %v6038
        %v6104 = vsub.f32 %v5930, %v6050
        %v6105 = vsub.f32 %v5942, %v6062
        %v6106 = vsub.f32 %v5954, %v6074
        %v6107 = vsub.f32 %v5966, %v6086
        %v6108 = vsub.f32 %v5978, %v6098
        %v6109 = vmul.f32 %v6099, %v6099
        %v6110 = vmul.f32 %v6100, %v6100
        %v6111 = vmul.f32 %v6101, %v6101
        %v6112 = vmul.f32 %v6102, %v6102
        %v6113 = vmul.f32 %v6103, %v6103
        %v6114 = vmul.f32 %v6104, %v6104
        %v6115 = vmul.f32 %v6105, %v6105
        %v6116 = vmul.f32 %v6106, %v6106
        %v6117 = vmul.f32 %v6107, %v6107
        %v6118 = vmul.f32 %v6108, %v6108
        %v6119 = vld [vmem:[%s221] sm:$0xff]
        %v6120 = vld [vmem:[%s221 + $0x8] sm:$0xff]
        %v6121 = vld [vmem:[%s221 + $0x10] sm:$0xff]
        %v6122 = vld [vmem:[%s221 + $0x18] sm:$0xff]
        %v6123 = vld [vmem:[%s221 + $0x20] sm:$0xff]
        %v6124 = vadd.f32 %v5849, %v5854
        %v6125 = vadd.f32 %v5850, %v5855
        %v6126 = vadd.f32 %v5851, %v5856
        %v6127 = vadd.f32 %v5852, %v5857
        %v6128 = vadd.f32 %v5853, %v5858
        %v6129 = vadd.f32 %v6119, %v6124
        %v6130 = vadd.f32 %v6120, %v6125
        %v6131 = vadd.f32 %v6121, %v6126
        %v6132 = vadd.f32 %v6122, %v6127
        %v6133 = vadd.f32 %v6123, %v6128
        %6134 = vst [vmem:[%s221] sm:$0xff] %v6129
        %6135 = vst [vmem:[%s221 + $0x8] sm:$0xff] %v6130
        %6136 = vst [vmem:[%s221 + $0x10] sm:$0xff] %v6131
        %6137 = vst [vmem:[%s221 + $0x18] sm:$0xff] %v6132
        %6138 = vst [vmem:[%s221 + $0x20] sm:$0xff] %v6133
        %s6139 = scalar_lea.vmem %s221, 40 [#allocation7]
        %v6140 = vld [vmem:[%s6139] sm:$0xff]
        %v6141 = vld [vmem:[%s6139 + $0x8] sm:$0xff]
        %v6142 = vld [vmem:[%s6139 + $0x10] sm:$0xff]
        %v6143 = vld [vmem:[%s6139 + $0x18] sm:$0xff]
        %v6144 = vld [vmem:[%s6139 + $0x20] sm:$0xff]
        %v6145 = vadd.f32 %v6109, %v6114
        %v6146 = vadd.f32 %v6110, %v6115
        %v6147 = vadd.f32 %v6111, %v6116
        %v6148 = vadd.f32 %v6112, %v6117
        %v6149 = vadd.f32 %v6113, %v6118
        %v6150 = vadd.f32 %v6140, %v6145
        %v6151 = vadd.f32 %v6141, %v6146
        %v6152 = vadd.f32 %v6142, %v6147
        %v6153 = vadd.f32 %v6143, %v6148
        %v6154 = vadd.f32 %v6144, %v6149
        %6155 = vst [vmem:[%s6139] sm:$0xff] %v6150
        %6156 = vst [vmem:[%s6139 + $0x8] sm:$0xff] %v6151
        %6157 = vst [vmem:[%s6139 + $0x10] sm:$0xff] %v6152
        %6158 = vst [vmem:[%s6139 + $0x18] sm:$0xff] %v6153
        %6159 = vst [vmem:[%s6139 + $0x20] sm:$0xff] %v6154
        %s6160 = scalar_lea.vmem %s221, 80 [#allocation7]
        %v6161 = vld [vmem:[%s6160] sm:$0xff]
        %v6162 = vld [vmem:[%s6160 + $0x8] sm:$0xff]
        %v6163 = vld [vmem:[%s6160 + $0x10] sm:$0xff]
        %v6164 = vld [vmem:[%s6160 + $0x18] sm:$0xff]
        %v6165 = vld [vmem:[%s6160 + $0x20] sm:$0xff]
        %v6166 = vadd.f32 %v5749, %v5754
        %v6167 = vadd.f32 %v5750, %v5755
        %v6168 = vadd.f32 %v5751, %v5756
        %v6169 = vadd.f32 %v5752, %v5757
        %v6170 = vadd.f32 %v5753, %v5758
        %v6171 = vadd.f32 %v6161, %v6166
        %v6172 = vadd.f32 %v6162, %v6167
        %v6173 = vadd.f32 %v6163, %v6168
        %v6174 = vadd.f32 %v6164, %v6169
        %v6175 = vadd.f32 %v6165, %v6170
        %6176 = vst [vmem:[%s6160] sm:$0xff] %v6171
        %6177 = vst [vmem:[%s6160 + $0x8] sm:$0xff] %v6172
        %6178 = vst [vmem:[%s6160 + $0x10] sm:$0xff] %v6173
        %6179 = vst [vmem:[%s6160 + $0x18] sm:$0xff] %v6174
        %6180 = vst [vmem:[%s6160 + $0x20] sm:$0xff] %v6175
        %s6181 = sand.u32 %s89, 1
        %s6182 = scalar_lea.sflag [#allocation4], %s6181
        %s6183 = sand.u32 %s89, 1
        %s6184 = smul.addr %s6183, 120
        %s6185 = scalar_lea.vmem [#allocation7], %s6184
        // Predicated region
        $region41: #{tpu_custom_call.1} parent=27 // pred_check
          %p6186 = pneg %p99
        $region42: #{tpu_custom_call.1} parent=27 // pred_check_branch
          %6188 = sbr.rel (%p6186) target = $region44
        $region43: #{tpu_custom_call.1} parent=27 // pred_region
          %6190 = vsyncadd %s6182, 0
          %s6191 = smul.addr %s24, 15
          %s6192 = smul.addr %s6191, 8
          %s6193 = scalar_lea.hbm %s2, %s6192
          %s6194 = sshll.u32 %s6185, 4
          %s6195 = int_to_ptr.vmem [resolvable:$true] %s6194
          %s6196 = sshll.u32 %s6193, 4
          %s6197 = int_to_ptr.hbm [resolvable:$true] %s6196
          %6202 = dma.vmem_to_hbm [thread:$0]  %s6195, 1920, %s6197, %s6182, 640, 640, 40
        $region44: #{tpu_custom_call.1} parent=27 // pred_fallthru
          _
      $region28: #{tpu_custom_call.1} parent=5 // pred_fallthru
        _
      %p6203 = scmp.le.s32.totalorder 2, %s15
      // Predicated region
      $region45: #{tpu_custom_call.1} parent=5 // pred_check
        %p6204 = pneg %p6203
      $region46: #{tpu_custom_call.1} parent=5 // pred_check_branch
        %6206 = sbr.rel (%p6204) target = $region48
      $region47: #{tpu_custom_call.1} parent=5 // pred_region
        %s6207 = ssub.s32 %s15, 2
        // Predicated region
        $region49: #{tpu_custom_call.1} parent=47 // pred_check
          %p6208 = pneg %p105
        $region50: #{tpu_custom_call.1} parent=47 // pred_check_branch
          %6210 = sbr.rel (%p6208) target = $region52
        $region51: #{tpu_custom_call.1} parent=47 // pred_region
          %s6211 = sand.u32 %s90, 1
          %s6212 = scalar_lea.sflag [#allocation4], %s6211
          %s6213 = sand.u32 %s90, 1
          %s6214 = smul.addr %s6213, 120
          %s6215 = scalar_lea.vmem [#allocation7], %s6214
          %6217 = dma.done %s6212, 1920
        $region52: #{tpu_custom_call.1} parent=47 // pred_fallthru
          _
      $region48: #{tpu_custom_call.1} parent=5 // pred_fallthru
        _
    $region6: #{tpu_custom_call.1} parent=1 // loop_footer
      %s19 = sadd.s32 1, %s15
    $region7: #{tpu_custom_call.1} parent=1 // loop_footer_branch
      %14 = sbr.rel target = $region3
    $region8: #{tpu_custom_call.1} parent=1 // loop_exit
      _
    %6218 = vsyncpa [#allocation3], 1
    %s6219 = scalar_lea.sflag [#allocation3], 1
    %6220 = vsyncpa %s6219, 1
    %6221 = vsyncpa [#allocation6], 1
    %6222 = vsyncpa [#allocation4], 1
    %s6223 = scalar_lea.sflag [#allocation4], 1
    %6224 = vsyncpa %s6223, 1

</llo_original>
